<compile_context>
chip_gen: v7x
topology: tpu7x:2x2x1
jax: 0.10.0
libtpu: 0.0.40
codegen_flags: <defaults>
</compile_context>

<pallas_src>
import functools
import math

import jax
import jax.numpy as jnp
from jax.experimental import pallas as pl
from jax.experimental.pallas import tpu as pltpu


# ----------------------------------------------------------------------------
# Pallas kernels
# ----------------------------------------------------------------------------
def encoder_layer_kernel(
    x_ref, bias_ref,
    wqkv_ref, bqkv_ref, wo_ref, bo_ref,
    ln1w_ref, ln1b_ref,
    w1_ref, b1_ref, w2_ref, b2_ref,
    ln2w_ref, ln2b_ref,
    out_ref,
    *, num_heads: int,
):
    # one grid step == BT batch elements
    BT, S, H = x_ref.shape
    dh = H // num_heads
    scale = 1.0 / math.sqrt(dh)

    x = x_ref[...]                                   # (BT, S, H) f32
    bias = bias_ref[...]                             # (BT, 1, S) f32 additive
    x2d = x.reshape(BT * S, H)
    xb = x2d.astype(jnp.bfloat16)

    # ---- QKV projection: one big (BT*S, H) x (H, 3H) bf16 matmul ------------
    qkv = jnp.dot(xb, wqkv_ref[...],
                  preferred_element_type=jnp.float32) + bqkv_ref[...]  # f32

    # ---- multi-head attention, batched over the BT sequences ----------------
    head_outs = []
    for h in range(num_heads):
        q_lo = h * dh
        k_lo = H + h * dh
        v_lo = 2 * H + h * dh
        # fold 1/sqrt(dh) into Q (dh columns) instead of the (S,S) score matrix
        qh = (qkv[:, q_lo:q_lo + dh] * scale).reshape(BT, S, dh).astype(jnp.bfloat16)
        kh = qkv[:, k_lo:k_lo + dh].reshape(BT, S, dh).astype(jnp.bfloat16)
        vh = qkv[:, v_lo:v_lo + dh].reshape(BT, S, dh).astype(jnp.bfloat16)

        s = jnp.einsum('bqd,bkd->bqk', qh, kh,
                       preferred_element_type=jnp.float32)               # (BT,S,S)
        s = s + bias                                                      # broadcast over queries
        s = s - s.max(axis=-1, keepdims=True)
        p = jnp.exp(s)
        p = p * pl.reciprocal(p.sum(axis=-1, keepdims=True), approx=True)
        oh = jnp.einsum('bqk,bkd->bqd', p.astype(jnp.bfloat16), vh,
                        preferred_element_type=jnp.float32)               # (BT,S,dh)
        head_outs.append(oh.reshape(BT * S, dh))
    attn = jnp.concatenate(head_outs, axis=-1)                            # (BT*S, H)
    attn_out = jnp.dot(attn.astype(jnp.bfloat16), wo_ref[...],
                       preferred_element_type=jnp.float32) + bo_ref[...]

    # ---- residual + LayerNorm 1 (post-norm, PyTorch norm_first=False) -------
    y = x2d + attn_out
    mu = y.mean(axis=-1, keepdims=True)
    var = ((y - mu) ** 2).mean(axis=-1, keepdims=True)
    y = (y - mu) * jax.lax.rsqrt(var + 1e-5) * ln1w_ref[...] + ln1b_ref[...]

    # ---- feed-forward (H -> 4H -> H, tanh-GELU rides the EUP slot) ----------
    h1 = jnp.dot(y.astype(jnp.bfloat16), w1_ref[...],
                 preferred_element_type=jnp.float32) + b1_ref[...]
    # TODO(synk): PyTorch 'gelu' is exact erf-GELU; tanh approximation used here
    # (numerically ~1e-3 close) because it lowers to the EUP for free.
    h1 = jax.nn.gelu(h1, approximate=True)
    h2 = jnp.dot(h1.astype(jnp.bfloat16), w2_ref[...],
                 preferred_element_type=jnp.float32) + b2_ref[...]

    # ---- residual + LayerNorm 2 ---------------------------------------------
    z = y + h2
    mu2 = z.mean(axis=-1, keepdims=True)
    var2 = ((z - mu2) ** 2).mean(axis=-1, keepdims=True)
    z = (z - mu2) * jax.lax.rsqrt(var2 + 1e-5) * ln2w_ref[...] + ln2b_ref[...]

    out_ref[...] = z.reshape(BT, S, H).astype(out_ref.dtype)


def output_proj_kernel(x_ref, w_ref, b_ref, out_ref):
    xb = x_ref[...].astype(jnp.bfloat16)
    out_ref[...] = (
        jnp.dot(xb, w_ref[...], preferred_element_type=jnp.float32) + b_ref[...]
    ).astype(out_ref.dtype)


# ----------------------------------------------------------------------------
# Wrappers
# ----------------------------------------------------------------------------
_VMEM_LIMIT = 32 * 1024 * 1024  # explicit budget; safe for v5e/v6e and v7x (64 MiB)


def _full_spec(arr):
    # full-array block, constant index map (single-axis grid)
    return pl.BlockSpec(arr.shape, lambda b: (0,) * arr.ndim)


def run_encoder_layer(x, key_bias, lp, num_heads, bt):
    B, S, H = x.shape
    assert B % bt == 0
    kernel = functools.partial(encoder_layer_kernel, num_heads=num_heads)
    weight_keys = ["wqkv", "bqkv", "wo", "bo", "ln1w", "ln1b",
                   "w1", "b1", "w2", "b2", "ln2w", "ln2b"]
    weights = [lp[k] for k in weight_keys]
    return pl.pallas_call(
        kernel,
        out_shape=jax.ShapeDtypeStruct((B, S, H), jnp.float32),
        grid=(B // bt,),
        in_specs=[
            pl.BlockSpec((bt, S, H), lambda b: (b, 0, 0)),
            pl.BlockSpec((bt, 1, S), lambda b: (b, 0, 0)),
        ] + [_full_spec(w) for w in weights],
        out_specs=pl.BlockSpec((bt, S, H), lambda b: (b, 0, 0)),
        compiler_params=pltpu.CompilerParams(
            dimension_semantics=("parallel",),
            vmem_limit_bytes=_VMEM_LIMIT),
    )(x, key_bias, *weights)


def run_output_proj(last_h, w_out, b_out, *, tb=8, tn=256):
    B, H = last_h.shape
    N = w_out.shape[1]
    tb = min(tb, B)
    tn = min(tn, N)
    pad_b = (-B) % tb
    pad_n = (-N) % tn
    if pad_b:
        last_h = jnp.pad(last_h, ((0, pad_b), (0, 0)))
    if pad_n:
        w_out = jnp.pad(w_out, ((0, 0), (0, pad_n)))
        b_out = jnp.pad(b_out, ((0, 0), (0, pad_n)))
    Bp, Np = B + pad_b, N + pad_n

    out = pl.pallas_call(
        output_proj_kernel,
        out_shape=jax.ShapeDtypeStruct((Bp, Np), jnp.float32),
        grid=(Bp // tb, Np // tn),
        in_specs=[
            pl.BlockSpec((tb, H), lambda i, j: (i, 0)),
            pl.BlockSpec((H, tn), lambda i, j: (0, j)),
            pl.BlockSpec((1, tn), lambda i, j: (0, j)),
        ],
        out_specs=pl.BlockSpec((tb, tn), lambda i, j: (i, j)),
        compiler_params=pltpu.CompilerParams(
            dimension_semantics=("parallel", "parallel"),
            vmem_limit_bytes=_VMEM_LIMIT),
    )(last_h, w_out, b_out)
    return out[:B, :N]


def sasrec_forward(params, input_ids, attention_mask, *, num_heads, bt=8):
    B, S = input_ids.shape
    # --- embeddings (gather = glue, stays in plain JAX) ----------------------
    item_emb = params["item_emb"][input_ids]                      # (B, S, H)
    pos_emb = params["pos_emb"][jnp.arange(S)][None, :, :]        # (1, S, H); assumes S <= 50
    x = (item_emb + pos_emb).astype(jnp.float32)
    # dropout is identity at inference time

    # additive key-padding bias, precomputed once (0 = attend, -1e9 = pad)
    key_bias = ((1.0 - attention_mask.astype(jnp.float32)) * (-1e9)).reshape(B, 1, S)

    bt = min(bt, B)
    pad_b = (-B) % bt
    if pad_b:
        x = jnp.pad(x, ((0, pad_b), (0, 0), (0, 0)))
        key_bias = jnp.pad(key_bias, ((0, pad_b), (0, 0), (0, 0)))

    # --- transformer encoder stack (Pallas) ----------------------------------
    for lp in params["layers"]:
        x = run_encoder_layer(x, key_bias, lp, num_heads, bt)

    # --- last position + tiled output projection (Pallas) --------------------
    last_h = x[:B, -1, :]                                         # (B, H)
    logits = run_output_proj(last_h, params["w_out"], params["b_out"])
    return logits


# ----------------------------------------------------------------------------
# Deterministic parameter init (mirrors module __init__ shapes)
# ----------------------------------------------------------------------------
def init_params(key, num_items, hidden, num_layers, num_heads):
    ff = 4 * hidden
    keys = iter(jax.random.split(key, 4 + 4 * num_layers))

    def normal(k, shape, dtype=jnp.float32):
        return (0.02 * jax.random.normal(k, shape)).astype(dtype)

    item_emb = normal(next(keys), (num_items, hidden))
    item_emb = item_emb.at[0].set(0.0)                  # padding_idx=0
    pos_emb = normal(next(keys), (50, hidden))

    layers = []
    for _ in range(num_layers):
        lp = {
            # matmul weights stored pre-transposed (activations @ W) in bf16
            "wqkv": normal(next(keys), (hidden, 3 * hidden), jnp.bfloat16),
            "bqkv": jnp.zeros((1, 3 * hidden), jnp.float32),
            "wo":   normal(next(keys), (hidden, hidden), jnp.bfloat16),
            "bo":   jnp.zeros((1, hidden), jnp.float32),
            "ln1w": jnp.ones((1, hidden), jnp.float32),
            "ln1b": jnp.zeros((1, hidden), jnp.float32),
            "w1":   normal(next(keys), (hidden, ff), jnp.bfloat16),
            "b1":   jnp.zeros((1, ff), jnp.float32),
            "w2":   normal(next(keys), (ff, hidden), jnp.bfloat16),
            "b2":   jnp.zeros((1, hidden), jnp.float32),
            "ln2w": jnp.ones((1, hidden), jnp.float32),
            "ln2b": jnp.zeros((1, hidden), jnp.float32),
        }
        layers.append(lp)

    w_out = normal(next(keys), (hidden, num_items), jnp.bfloat16)
    b_out = jnp.zeros((1, num_items), jnp.float32)

    return {
        "item_emb": item_emb,
        "pos_emb": pos_emb,
        "layers": layers,
        "w_out": w_out,
        "b_out": b_out,
    }


# ----------------------------------------------------------------------------
if __name__ == "__main__":
    NUM_ITEMS = 512
    HIDDEN = 32
    NUM_LAYERS = 2
    NUM_HEADS = 2
    B, S = 16, 8     # 2 batch tiles of 8 -> both v7x TensorCores busy

    root = jax.random.PRNGKey(0)
    k_params, k_ids = jax.random.split(root)

    params = init_params(k_params, NUM_ITEMS, HIDDEN, NUM_LAYERS, NUM_HEADS)

    input_ids = jax.random.randint(k_ids, (B, S), 1, NUM_ITEMS, dtype=jnp.int32)
    # simple left padding for a couple of sequences (last position stays valid)
    input_ids = input_ids.at[1, :3].set(0)
    input_ids = input_ids.at[5, :5].set(0)
    attention_mask = (input_ids != 0).astype(jnp.int32)

    fwd = jax.jit(functools.partial(sasrec_forward, num_heads=NUM_HEADS))
    logits = fwd(params, input_ids, attention_mask)
    logits = jax.block_until_ready(logits)

    assert logits.shape == (B, NUM_ITEMS)
    assert bool(jnp.all(jnp.isfinite(logits)))
    print("KERNEL_OK")
</pallas_src>

<mosaic_0001>
module attributes {stable_mosaic.version = 11 : i64} {
  func.func @encoder_layer_kernel(%arg0: i32, %arg1: memref<8x8x32xf32, #tpu.memory_space<vmem>>, %arg2: memref<8x1x8xf32, #tpu.memory_space<vmem>>, %arg3: memref<32x96xbf16, #tpu.memory_space<vmem>>, %arg4: memref<1x96xf32, #tpu.memory_space<vmem>>, %arg5: memref<32x32xbf16, #tpu.memory_space<vmem>>, %arg6: memref<1x32xf32, #tpu.memory_space<vmem>>, %arg7: memref<1x32xf32, #tpu.memory_space<vmem>>, %arg8: memref<1x32xf32, #tpu.memory_space<vmem>>, %arg9: memref<32x128xbf16, #tpu.memory_space<vmem>>, %arg10: memref<1x128xf32, #tpu.memory_space<vmem>>, %arg11: memref<128x32xbf16, #tpu.memory_space<vmem>>, %arg12: memref<1x32xf32, #tpu.memory_space<vmem>>, %arg13: memref<1x32xf32, #tpu.memory_space<vmem>>, %arg14: memref<1x32xf32, #tpu.memory_space<vmem>>, %arg15: memref<8x8x32xf32, #tpu.memory_space<vmem>>) attributes {dimension_semantics = [#tpu.dimension_semantics<parallel>], iteration_bounds = array<i64: 2>, scalar_prefetch = 0 : i64, scratch_operands = 0 : i64, tpu.core_type = #tpu.core_type<tc>, window_params = [{transform_indices = @transform_0, window_bounds = array<i64: 8, 8, 32>}, {transform_indices = @transform_1, window_bounds = array<i64: 8, 1, 8>}, {pipeline_mode = #tpu.pipeline_mode<synchronous>, transform_indices = @transform_2, window_bounds = array<i64: 32, 96>}, {pipeline_mode = #tpu.pipeline_mode<synchronous>, transform_indices = @transform_3, window_bounds = array<i64: 1, 96>}, {pipeline_mode = #tpu.pipeline_mode<synchronous>, transform_indices = @transform_4, window_bounds = array<i64: 32, 32>}, {pipeline_mode = #tpu.pipeline_mode<synchronous>, transform_indices = @transform_5, window_bounds = array<i64: 1, 32>}, {pipeline_mode = #tpu.pipeline_mode<synchronous>, transform_indices = @transform_6, window_bounds = array<i64: 1, 32>}, {pipeline_mode = #tpu.pipeline_mode<synchronous>, transform_indices = @transform_7, window_bounds = array<i64: 1, 32>}, {pipeline_mode = #tpu.pipeline_mode<synchronous>, transform_indices = @transform_8, window_bounds = array<i64: 32, 128>}, {pipeline_mode = #tpu.pipeline_mode<synchronous>, transform_indices = @transform_9, window_bounds = array<i64: 1, 128>}, {pipeline_mode = #tpu.pipeline_mode<synchronous>, transform_indices = @transform_10, window_bounds = array<i64: 128, 32>}, {pipeline_mode = #tpu.pipeline_mode<synchronous>, transform_indices = @transform_11, window_bounds = array<i64: 1, 32>}, {pipeline_mode = #tpu.pipeline_mode<synchronous>, transform_indices = @transform_12, window_bounds = array<i64: 1, 32>}, {pipeline_mode = #tpu.pipeline_mode<synchronous>, transform_indices = @transform_13, window_bounds = array<i64: 1, 32>}, {transform_indices = @transform_14, window_bounds = array<i64: 8, 8, 32>}]} {
    %c0 = arith.constant 0 : index
    %c0_0 = arith.constant 0 : index
    %c0_1 = arith.constant 0 : index
    %0 = vector.load %arg1[%c0, %c0_0, %c0_1] : memref<8x8x32xf32, #tpu.memory_space<vmem>>, vector<8x8x32xf32>
    %c0_2 = arith.constant 0 : index
    %c0_3 = arith.constant 0 : index
    %c0_4 = arith.constant 0 : index
    %1 = vector.load %arg2[%c0_2, %c0_3, %c0_4] : memref<8x1x8xf32, #tpu.memory_space<vmem>>, vector<8x1x8xf32>
    %2 = vector.shape_cast %0 : vector<8x8x32xf32> to vector<64x32xf32>
    %3 = arith.truncf %2 : vector<64x32xf32> to vector<64x32xbf16>
    %c0_5 = arith.constant 0 : index
    %c0_6 = arith.constant 0 : index
    %4 = vector.load %arg3[%c0_5, %c0_6] : memref<32x96xbf16, #tpu.memory_space<vmem>>, vector<32x96xbf16>
    %cst = arith.constant dense<0.000000e+00> : vector<64x96xf32>
    %5 = tpu.matmul %3, %4, %cst {dimension_numbers = #tpu.dot_dimension_numbers<[1], [0], [0], [1], [0, 0, 1, 1], [], []>} : vector<64x32xbf16>, vector<32x96xbf16>, vector<64x96xf32> -> vector<64x96xf32>
    %c0_7 = arith.constant 0 : index
    %c0_8 = arith.constant 0 : index
    %6 = vector.load %arg4[%c0_7, %c0_8] : memref<1x96xf32, #tpu.memory_space<vmem>>, vector<1x96xf32>
    %7 = vector.broadcast %6 : vector<1x96xf32> to vector<64x96xf32>
    %8 = arith.addf %5, %7 : vector<64x96xf32>
    %9 = vector.extract_strided_slice %8 {offsets = [0, 0], sizes = [64, 16], strides = [1, 1]} : vector<64x96xf32> to vector<64x16xf32>
    %cst_9 = arith.constant 2.500000e-01 : f32
    %10 = vector.broadcast %cst_9 : f32 to vector<64x16xf32>
    %11 = arith.mulf %9, %10 : vector<64x16xf32>
    %12 = vector.shape_cast %11 : vector<64x16xf32> to vector<8x8x16xf32>
    %13 = arith.truncf %12 : vector<8x8x16xf32> to vector<8x8x16xbf16>
    %14 = vector.extract_strided_slice %8 {offsets = [0, 32], sizes = [64, 16], strides = [1, 1]} : vector<64x96xf32> to vector<64x16xf32>
    %15 = vector.shape_cast %14 : vector<64x16xf32> to vector<8x8x16xf32>
    %16 = arith.truncf %15 : vector<8x8x16xf32> to vector<8x8x16xbf16>
    %17 = vector.extract_strided_slice %8 {offsets = [0, 64], sizes = [64, 16], strides = [1, 1]} : vector<64x96xf32> to vector<64x16xf32>
    %18 = vector.shape_cast %17 : vector<64x16xf32> to vector<8x8x16xf32>
    %19 = arith.truncf %18 : vector<8x8x16xf32> to vector<8x8x16xbf16>
    "tpu.trace_start"() <{level = 10 : i32, message = "bqd,bkd->bqk"}> : () -> ()
    %cst_10 = arith.constant dense<0.000000e+00> : vector<8x8x8xf32>
    %20 = tpu.matmul %13, %16, %cst_10 {dimension_numbers = #tpu.dot_dimension_numbers<[2], [2], [1], [1], [0, 0, 0, 1, 1, 1], [0], [0]>} : vector<8x8x16xbf16>, vector<8x8x16xbf16>, vector<8x8x8xf32> -> vector<8x8x8xf32>
    "tpu.trace_stop"() : () -> ()
    %21 = vector.broadcast %1 : vector<8x1x8xf32> to vector<8x8x8xf32>
    %22 = arith.addf %20, %21 : vector<8x8x8xf32>
    %cst_11 = arith.constant dense<0xFF800000> : vector<8x8xf32>
    %23 = vector.multi_reduction <maximumf>, %22, %cst_11 [2] : vector<8x8x8xf32> to vector<8x8xf32>
    %24 = vector.shape_cast %23 : vector<8x8xf32> to vector<8x8x1xf32>
    %25 = vector.broadcast %24 : vector<8x8x1xf32> to vector<8x8x8xf32>
    %26 = arith.subf %22, %25 : vector<8x8x8xf32>
    %27 = math.exp %26 : vector<8x8x8xf32>
    %cst_12 = arith.constant dense<0.000000e+00> : vector<8x8xf32>
    %28 = vector.multi_reduction <add>, %27, %cst_12 [2] : vector<8x8x8xf32> to vector<8x8xf32>
    %29 = vector.shape_cast %28 : vector<8x8xf32> to vector<8x8x1xf32>
    %30 = tpu.reciprocal %29 {approx = true} : vector<8x8x1xf32> -> vector<8x8x1xf32>
    %31 = vector.broadcast %30 : vector<8x8x1xf32> to vector<8x8x8xf32>
    %32 = arith.mulf %27, %31 : vector<8x8x8xf32>
    %33 = arith.truncf %32 : vector<8x8x8xf32> to vector<8x8x8xbf16>
    "tpu.trace_start"() <{level = 10 : i32, message = "bqk,bkd->bqd"}> : () -> ()
    %cst_13 = arith.constant dense<0.000000e+00> : vector<8x8x16xf32>
    %34 = tpu.matmul %33, %19, %cst_13 {dimension_numbers = #tpu.dot_dimension_numbers<[2], [1], [1], [2], [0, 0, 0, 1, 1, 2], [0], [0]>} : vector<8x8x8xbf16>, vector<8x8x16xbf16>, vector<8x8x16xf32> -> vector<8x8x16xf32>
    "tpu.trace_stop"() : () -> ()
    %35 = vector.shape_cast %34 : vector<8x8x16xf32> to vector<64x16xf32>
    %36 = vector.extract_strided_slice %8 {offsets = [0, 16], sizes = [64, 16], strides = [1, 1]} : vector<64x96xf32> to vector<64x16xf32>
    %cst_14 = arith.constant 2.500000e-01 : f32
    %37 = vector.broadcast %cst_14 : f32 to vector<64x16xf32>
    %38 = arith.mulf %36, %37 : vector<64x16xf32>
    %39 = vector.shape_cast %38 : vector<64x16xf32> to vector<8x8x16xf32>
    %40 = arith.truncf %39 : vector<8x8x16xf32> to vector<8x8x16xbf16>
    %41 = vector.extract_strided_slice %8 {offsets = [0, 48], sizes = [64, 16], strides = [1, 1]} : vector<64x96xf32> to vector<64x16xf32>
    %42 = vector.shape_cast %41 : vector<64x16xf32> to vector<8x8x16xf32>
    %43 = arith.truncf %42 : vector<8x8x16xf32> to vector<8x8x16xbf16>
    %44 = vector.extract_strided_slice %8 {offsets = [0, 80], sizes = [64, 16], strides = [1, 1]} : vector<64x96xf32> to vector<64x16xf32>
    %45 = vector.shape_cast %44 : vector<64x16xf32> to vector<8x8x16xf32>
    %46 = arith.truncf %45 : vector<8x8x16xf32> to vector<8x8x16xbf16>
    "tpu.trace_start"() <{level = 10 : i32, message = "bqd,bkd->bqk"}> : () -> ()
    %cst_15 = arith.constant dense<0.000000e+00> : vector<8x8x8xf32>
    %47 = tpu.matmul %40, %43, %cst_15 {dimension_numbers = #tpu.dot_dimension_numbers<[2], [2], [1], [1], [0, 0, 0, 1, 1, 1], [0], [0]>} : vector<8x8x16xbf16>, vector<8x8x16xbf16>, vector<8x8x8xf32> -> vector<8x8x8xf32>
    "tpu.trace_stop"() : () -> ()
    %48 = vector.broadcast %1 : vector<8x1x8xf32> to vector<8x8x8xf32>
    %49 = arith.addf %47, %48 : vector<8x8x8xf32>
    %cst_16 = arith.constant dense<0xFF800000> : vector<8x8xf32>
    %50 = vector.multi_reduction <maximumf>, %49, %cst_16 [2] : vector<8x8x8xf32> to vector<8x8xf32>
    %51 = vector.shape_cast %50 : vector<8x8xf32> to vector<8x8x1xf32>
    %52 = vector.broadcast %51 : vector<8x8x1xf32> to vector<8x8x8xf32>
    %53 = arith.subf %49, %52 : vector<8x8x8xf32>
    %54 = math.exp %53 : vector<8x8x8xf32>
    %cst_17 = arith.constant dense<0.000000e+00> : vector<8x8xf32>
    %55 = vector.multi_reduction <add>, %54, %cst_17 [2] : vector<8x8x8xf32> to vector<8x8xf32>
    %56 = vector.shape_cast %55 : vector<8x8xf32> to vector<8x8x1xf32>
    %57 = tpu.reciprocal %56 {approx = true} : vector<8x8x1xf32> -> vector<8x8x1xf32>
    %58 = vector.broadcast %57 : vector<8x8x1xf32> to vector<8x8x8xf32>
    %59 = arith.mulf %54, %58 : vector<8x8x8xf32>
    %60 = arith.truncf %59 : vector<8x8x8xf32> to vector<8x8x8xbf16>
    "tpu.trace_start"() <{level = 10 : i32, message = "bqk,bkd->bqd"}> : () -> ()
    %cst_18 = arith.constant dense<0.000000e+00> : vector<8x8x16xf32>
    %61 = tpu.matmul %60, %46, %cst_18 {dimension_numbers = #tpu.dot_dimension_numbers<[2], [1], [1], [2], [0, 0, 0, 1, 1, 2], [0], [0]>} : vector<8x8x8xbf16>, vector<8x8x16xbf16>, vector<8x8x16xf32> -> vector<8x8x16xf32>
    "tpu.trace_stop"() : () -> ()
    %62 = vector.shape_cast %61 : vector<8x8x16xf32> to vector<64x16xf32>
    %63 = tpu.concatenate %35, %62 in 1 : vector<64x16xf32>, vector<64x16xf32> -> vector<64x32xf32>
    %64 = arith.truncf %63 : vector<64x32xf32> to vector<64x32xbf16>
    %c0_19 = arith.constant 0 : index
    %c0_20 = arith.constant 0 : index
    %65 = vector.load %arg5[%c0_19, %c0_20] : memref<32x32xbf16, #tpu.memory_space<vmem>>, vector<32x32xbf16>
    %cst_21 = arith.constant dense<0.000000e+00> : vector<64x32xf32>
    %66 = tpu.matmul %64, %65, %cst_21 {dimension_numbers = #tpu.dot_dimension_numbers<[1], [0], [0], [1], [0, 0, 1, 1], [], []>} : vector<64x32xbf16>, vector<32x32xbf16>, vector<64x32xf32> -> vector<64x32xf32>
    %c0_22 = arith.constant 0 : index
    %c0_23 = arith.constant 0 : index
    %67 = vector.load %arg6[%c0_22, %c0_23] : memref<1x32xf32, #tpu.memory_space<vmem>>, vector<1x32xf32>
    %68 = vector.broadcast %67 : vector<1x32xf32> to vector<64x32xf32>
    %69 = arith.addf %66, %68 : vector<64x32xf32>
    %70 = arith.addf %2, %69 : vector<64x32xf32>
    %cst_24 = arith.constant dense<0.000000e+00> : vector<64xf32>
    %71 = vector.multi_reduction <add>, %70, %cst_24 [1] : vector<64x32xf32> to vector<64xf32>
    %72 = vector.shape_cast %71 : vector<64xf32> to vector<64x1xf32>
    %cst_25 = arith.constant 3.200000e+01 : f32
    %73 = vector.broadcast %cst_25 : f32 to vector<64x1xf32>
    %74 = arith.divf %72, %73 : vector<64x1xf32>
    %75 = vector.broadcast %74 : vector<64x1xf32> to vector<64x32xf32>
    %76 = arith.subf %70, %75 : vector<64x32xf32>
    %77 = arith.mulf %76, %76 : vector<64x32xf32>
    %cst_26 = arith.constant dense<0.000000e+00> : vector<64xf32>
    %78 = vector.multi_reduction <add>, %77, %cst_26 [1] : vector<64x32xf32> to vector<64xf32>
    %79 = vector.shape_cast %78 : vector<64xf32> to vector<64x1xf32>
    %cst_27 = arith.constant 3.200000e+01 : f32
    %80 = vector.broadcast %cst_27 : f32 to vector<64x1xf32>
    %81 = arith.divf %79, %80 : vector<64x1xf32>
    %82 = vector.broadcast %74 : vector<64x1xf32> to vector<64x32xf32>
    %83 = arith.subf %70, %82 : vector<64x32xf32>
    %cst_28 = arith.constant 9.99999974E-6 : f32
    %84 = vector.broadcast %cst_28 : f32 to vector<64x1xf32>
    %85 = arith.addf %81, %84 : vector<64x1xf32>
    %86 = math.rsqrt %85 : vector<64x1xf32>
    %87 = vector.broadcast %86 : vector<64x1xf32> to vector<64x32xf32>
    %88 = arith.mulf %83, %87 : vector<64x32xf32>
    %c0_29 = arith.constant 0 : index
    %c0_30 = arith.constant 0 : index
    %89 = vector.load %arg7[%c0_29, %c0_30] : memref<1x32xf32, #tpu.memory_space<vmem>>, vector<1x32xf32>
    %90 = vector.broadcast %89 : vector<1x32xf32> to vector<64x32xf32>
    %91 = arith.mulf %88, %90 : vector<64x32xf32>
    %c0_31 = arith.constant 0 : index
    %c0_32 = arith.constant 0 : index
    %92 = vector.load %arg8[%c0_31, %c0_32] : memref<1x32xf32, #tpu.memory_space<vmem>>, vector<1x32xf32>
    %93 = vector.broadcast %92 : vector<1x32xf32> to vector<64x32xf32>
    %94 = arith.addf %91, %93 : vector<64x32xf32>
    %95 = arith.truncf %94 : vector<64x32xf32> to vector<64x32xbf16>
    %c0_33 = arith.constant 0 : index
    %c0_34 = arith.constant 0 : index
    %96 = vector.load %arg9[%c0_33, %c0_34] : memref<32x128xbf16, #tpu.memory_space<vmem>>, vector<32x128xbf16>
    %cst_35 = arith.constant dense<0.000000e+00> : vector<64x128xf32>
    %97 = tpu.matmul %95, %96, %cst_35 {dimension_numbers = #tpu.dot_dimension_numbers<[1], [0], [0], [1], [0, 0, 1, 1], [], []>} : vector<64x32xbf16>, vector<32x128xbf16>, vector<64x128xf32> -> vector<64x128xf32>
    %c0_36 = arith.constant 0 : index
    %c0_37 = arith.constant 0 : index
    %98 = vector.load %arg10[%c0_36, %c0_37] : memref<1x128xf32, #tpu.memory_space<vmem>>, vector<1x128xf32>
    %99 = vector.broadcast %98 : vector<1x128xf32> to vector<64x128xf32>
    %100 = arith.addf %97, %99 : vector<64x128xf32>
    %101 = arith.mulf %100, %100 : vector<64x128xf32>
    %102 = arith.mulf %100, %101 : vector<64x128xf32>
    %cst_38 = arith.constant 4.471500e-02 : f32
    %103 = vector.broadcast %cst_38 : f32 to vector<64x128xf32>
    %104 = arith.mulf %103, %102 : vector<64x128xf32>
    %105 = arith.addf %100, %104 : vector<64x128xf32>
    %cst_39 = arith.constant 0.797884583 : f32
    %106 = vector.broadcast %cst_39 : f32 to vector<64x128xf32>
    %107 = arith.mulf %106, %105 : vector<64x128xf32>
    %108 = math.tanh %107 : vector<64x128xf32>
    %cst_40 = arith.constant 1.000000e+00 : f32
    %109 = vector.broadcast %cst_40 : f32 to vector<64x128xf32>
    %110 = arith.addf %109, %108 : vector<64x128xf32>
    %cst_41 = arith.constant 5.000000e-01 : f32
    %111 = vector.broadcast %cst_41 : f32 to vector<64x128xf32>
    %112 = arith.mulf %111, %110 : vector<64x128xf32>
    %113 = arith.mulf %100, %112 : vector<64x128xf32>
    %114 = arith.truncf %113 : vector<64x128xf32> to vector<64x128xbf16>
    %c0_42 = arith.constant 0 : index
    %c0_43 = arith.constant 0 : index
    %115 = vector.load %arg11[%c0_42, %c0_43] : memref<128x32xbf16, #tpu.memory_space<vmem>>, vector<128x32xbf16>
    %cst_44 = arith.constant dense<0.000000e+00> : vector<64x32xf32>
    %116 = tpu.matmul %114, %115, %cst_44 {dimension_numbers = #tpu.dot_dimension_numbers<[1], [0], [0], [1], [0, 0, 1, 1], [], []>} : vector<64x128xbf16>, vector<128x32xbf16>, vector<64x32xf32> -> vector<64x32xf32>
    %c0_45 = arith.constant 0 : index
    %c0_46 = arith.constant 0 : index
    %117 = vector.load %arg12[%c0_45, %c0_46] : memref<1x32xf32, #tpu.memory_space<vmem>>, vector<1x32xf32>
    %118 = vector.broadcast %117 : vector<1x32xf32> to vector<64x32xf32>
    %119 = arith.addf %116, %118 : vector<64x32xf32>
    %120 = arith.addf %94, %119 : vector<64x32xf32>
    %cst_47 = arith.constant dense<0.000000e+00> : vector<64xf32>
    %121 = vector.multi_reduction <add>, %120, %cst_47 [1] : vector<64x32xf32> to vector<64xf32>
    %122 = vector.shape_cast %121 : vector<64xf32> to vector<64x1xf32>
    %cst_48 = arith.constant 3.200000e+01 : f32
    %123 = vector.broadcast %cst_48 : f32 to vector<64x1xf32>
    %124 = arith.divf %122, %123 : vector<64x1xf32>
    %125 = vector.broadcast %124 : vector<64x1xf32> to vector<64x32xf32>
    %126 = arith.subf %120, %125 : vector<64x32xf32>
    %127 = arith.mulf %126, %126 : vector<64x32xf32>
    %cst_49 = arith.constant dense<0.000000e+00> : vector<64xf32>
    %128 = vector.multi_reduction <add>, %127, %cst_49 [1] : vector<64x32xf32> to vector<64xf32>
    %129 = vector.shape_cast %128 : vector<64xf32> to vector<64x1xf32>
    %cst_50 = arith.constant 3.200000e+01 : f32
    %130 = vector.broadcast %cst_50 : f32 to vector<64x1xf32>
    %131 = arith.divf %129, %130 : vector<64x1xf32>
    %132 = vector.broadcast %124 : vector<64x1xf32> to vector<64x32xf32>
    %133 = arith.subf %120, %132 : vector<64x32xf32>
    %cst_51 = arith.constant 9.99999974E-6 : f32
    %134 = vector.broadcast %cst_51 : f32 to vector<64x1xf32>
    %135 = arith.addf %131, %134 : vector<64x1xf32>
    %136 = math.rsqrt %135 : vector<64x1xf32>
    %137 = vector.broadcast %136 : vector<64x1xf32> to vector<64x32xf32>
    %138 = arith.mulf %133, %137 : vector<64x32xf32>
    %c0_52 = arith.constant 0 : index
    %c0_53 = arith.constant 0 : index
    %139 = vector.load %arg13[%c0_52, %c0_53] : memref<1x32xf32, #tpu.memory_space<vmem>>, vector<1x32xf32>
    %140 = vector.broadcast %139 : vector<1x32xf32> to vector<64x32xf32>
    %141 = arith.mulf %138, %140 : vector<64x32xf32>
    %c0_54 = arith.constant 0 : index
    %c0_55 = arith.constant 0 : index
    %142 = vector.load %arg14[%c0_54, %c0_55] : memref<1x32xf32, #tpu.memory_space<vmem>>, vector<1x32xf32>
    %143 = vector.broadcast %142 : vector<1x32xf32> to vector<64x32xf32>
    %144 = arith.addf %141, %143 : vector<64x32xf32>
    %145 = vector.shape_cast %144 : vector<64x32xf32> to vector<8x8x32xf32>
    %c0_56 = arith.constant 0 : index
    %c0_57 = arith.constant 0 : index
    %c0_58 = arith.constant 0 : index
    %146 = vector.load %arg15[%c0_56, %c0_57, %c0_58] : memref<8x8x32xf32, #tpu.memory_space<vmem>>, vector<8x8x32xf32>
    tpu.vector_store %arg15[%c0_56, %c0_57, %c0_58], %145 {strides = array<i32>} : memref<8x8x32xf32, #tpu.memory_space<vmem>>, vector<8x8x32xf32>,
    return
  }
  func.func @transform_0(%arg0: i32) -> (i32, i32, i32) {
    %c0_i32 = arith.constant 0 : i32
    %c0_i32_0 = arith.constant 0 : i32
    %c0_i32_1 = arith.constant 0 : i32
    return %arg0, %c0_i32, %c0_i32_0 : i32, i32, i32
  }
  func.func @transform_1(%arg0: i32) -> (i32, i32, i32) {
    %c0_i32 = arith.constant 0 : i32
    %c0_i32_0 = arith.constant 0 : i32
    %c0_i32_1 = arith.constant 0 : i32
    return %arg0, %c0_i32, %c0_i32_0 : i32, i32, i32
  }
  func.func @transform_2(%arg0: i32) -> (i32, i32) {
    %c0_i32 = arith.constant 0 : i32
    %c0_i32_0 = arith.constant 0 : i32
    %c0_i32_1 = arith.constant 0 : i32
    return %c0_i32, %c0_i32_0 : i32, i32
  }
  func.func @transform_3(%arg0: i32) -> (i32, i32) {
    %c0_i32 = arith.constant 0 : i32
    %c0_i32_0 = arith.constant 0 : i32
    %c0_i32_1 = arith.constant 0 : i32
    return %c0_i32, %c0_i32_0 : i32, i32
  }
  func.func @transform_4(%arg0: i32) -> (i32, i32) {
    %c0_i32 = arith.constant 0 : i32
    %c0_i32_0 = arith.constant 0 : i32
    %c0_i32_1 = arith.constant 0 : i32
    return %c0_i32, %c0_i32_0 : i32, i32
  }
  func.func @transform_5(%arg0: i32) -> (i32, i32) {
    %c0_i32 = arith.constant 0 : i32
    %c0_i32_0 = arith.constant 0 : i32
    %c0_i32_1 = arith.constant 0 : i32
    return %c0_i32, %c0_i32_0 : i32, i32
  }
  func.func @transform_6(%arg0: i32) -> (i32, i32) {
    %c0_i32 = arith.constant 0 : i32
    %c0_i32_0 = arith.constant 0 : i32
    %c0_i32_1 = arith.constant 0 : i32
    return %c0_i32, %c0_i32_0 : i32, i32
  }
  func.func @transform_7(%arg0: i32) -> (i32, i32) {
    %c0_i32 = arith.constant 0 : i32
    %c0_i32_0 = arith.constant 0 : i32
    %c0_i32_1 = arith.constant 0 : i32
    return %c0_i32, %c0_i32_0 : i32, i32
  }
  func.func @transform_8(%arg0: i32) -> (i32, i32) {
    %c0_i32 = arith.constant 0 : i32
    %c0_i32_0 = arith.constant 0 : i32
    %c0_i32_1 = arith.constant 0 : i32
    return %c0_i32, %c0_i32_0 : i32, i32
  }
  func.func @transform_9(%arg0: i32) -> (i32, i32) {
    %c0_i32 = arith.constant 0 : i32
    %c0_i32_0 = arith.constant 0 : i32
    %c0_i32_1 = arith.constant 0 : i32
    return %c0_i32, %c0_i32_0 : i32, i32
  }
  func.func @transform_10(%arg0: i32) -> (i32, i32) {
    %c0_i32 = arith.constant 0 : i32
    %c0_i32_0 = arith.constant 0 : i32
    %c0_i32_1 = arith.constant 0 : i32
    return %c0_i32, %c0_i32_0 : i32, i32
  }
  func.func @transform_11(%arg0: i32) -> (i32, i32) {
    %c0_i32 = arith.constant 0 : i32
    %c0_i32_0 = arith.constant 0 : i32
    %c0_i32_1 = arith.constant 0 : i32
    return %c0_i32, %c0_i32_0 : i32, i32
  }
  func.func @transform_12(%arg0: i32) -> (i32, i32) {
    %c0_i32 = arith.constant 0 : i32
    %c0_i32_0 = arith.constant 0 : i32
    %c0_i32_1 = arith.constant 0 : i32
    return %c0_i32, %c0_i32_0 : i32, i32
  }
  func.func @transform_13(%arg0: i32) -> (i32, i32) {
    %c0_i32 = arith.constant 0 : i32
    %c0_i32_0 = arith.constant 0 : i32
    %c0_i32_1 = arith.constant 0 : i32
    return %c0_i32, %c0_i32_0 : i32, i32
  }
  func.func @transform_14(%arg0: i32) -> (i32, i32, i32) {
    %c0_i32 = arith.constant 0 : i32
    %c0_i32_0 = arith.constant 0 : i32
    %c0_i32_1 = arith.constant 0 : i32
    return %arg0, %c0_i32, %c0_i32_0 : i32, i32, i32
  }
}

module attributes {stable_mosaic.version = 11 : i64} {
  func.func @output_proj_kernel(%arg0: i32, %arg1: i32, %arg2: memref<8x32xf32, #tpu.memory_space<vmem>>, %arg3: memref<32x256xbf16, #tpu.memory_space<vmem>>, %arg4: memref<1x256xf32, #tpu.memory_space<vmem>>, %arg5: memref<8x256xf32, #tpu.memory_space<vmem>>) attributes {dimension_semantics = [#tpu.dimension_semantics<parallel>, #tpu.dimension_semantics<parallel>], iteration_bounds = array<i64: 2, 2>, scalar_prefetch = 0 : i64, scratch_operands = 0 : i64, tpu.core_type = #tpu.core_type<tc>, window_params = [{transform_indices = @transform_0, window_bounds = array<i64: 8, 32>}, {transform_indices = @transform_1, window_bounds = array<i64: 32, 256>}, {transform_indices = @transform_2, window_bounds = array<i64: 1, 256>}, {transform_indices = @transform_3, window_bounds = array<i64: 8, 256>}]} {
    %c0 = arith.constant 0 : index
    %c0_0 = arith.constant 0 : index
    %0 = vector.load %arg2[%c0, %c0_0] : memref<8x32xf32, #tpu.memory_space<vmem>>, vector<8x32xf32>
    %1 = arith.truncf %0 : vector<8x32xf32> to vector<8x32xbf16>
    %c0_1 = arith.constant 0 : index
    %c0_2 = arith.constant 0 : index
    %2 = vector.load %arg3[%c0_1, %c0_2] : memref<32x256xbf16, #tpu.memory_space<vmem>>, vector<32x256xbf16>
    %cst = arith.constant dense<0.000000e+00> : vector<8x256xf32>
    %3 = tpu.matmul %1, %2, %cst {dimension_numbers = #tpu.dot_dimension_numbers<[1], [0], [0], [1], [0, 0, 1, 1], [], []>} : vector<8x32xbf16>, vector<32x256xbf16>, vector<8x256xf32> -> vector<8x256xf32>
    %c0_3 = arith.constant 0 : index
    %c0_4 = arith.constant 0 : index
    %4 = vector.load %arg4[%c0_3, %c0_4] : memref<1x256xf32, #tpu.memory_space<vmem>>, vector<1x256xf32>
    %5 = vector.broadcast %4 : vector<1x256xf32> to vector<8x256xf32>
    %6 = arith.addf %3, %5 : vector<8x256xf32>
    %c0_5 = arith.constant 0 : index
    %c0_6 = arith.constant 0 : index
    %7 = vector.load %arg5[%c0_5, %c0_6] : memref<8x256xf32, #tpu.memory_space<vmem>>, vector<8x256xf32>
    tpu.vector_store %arg5[%c0_5, %c0_6], %6 {strides = array<i32>} : memref<8x256xf32, #tpu.memory_space<vmem>>, vector<8x256xf32>,
    return
  }
  func.func @transform_0(%arg0: i32, %arg1: i32) -> (i32, i32) {
    %c0_i32 = arith.constant 0 : i32
    %c0_i32_0 = arith.constant 0 : i32
    return %arg0, %c0_i32 : i32, i32
  }
  func.func @transform_1(%arg0: i32, %arg1: i32) -> (i32, i32) {
    %c0_i32 = arith.constant 0 : i32
    %c0_i32_0 = arith.constant 0 : i32
    return %c0_i32, %arg1 : i32, i32
  }
  func.func @transform_2(%arg0: i32, %arg1: i32) -> (i32, i32) {
    %c0_i32 = arith.constant 0 : i32
    %c0_i32_0 = arith.constant 0 : i32
    return %c0_i32, %arg1 : i32, i32
  }
  func.func @transform_3(%arg0: i32, %arg1: i32) -> (i32, i32) {
    %c0_i32 = arith.constant 0 : i32
    return %arg0, %arg1 : i32, i32
  }
}

</mosaic_0001>

<llo_original>
// kernel: sasrec_forward.5
$region0: #{sasrec_forward.5}
  #allocation0 [shape = 'u32[]', space=smem, size = 0x4, offset = 0x4, fixed_abs, tag = 'smem constant byte address 0x4 - core index']
  #allocation1 [shape = 'u32[144,128]{1,0:T(1,128)}', space=vmem, size = 0x12000, scoped, tag = 'internal scratch']
  %s0 = inlined_call_operand.vmem [shape: f32[16,32], index: 0, kind: input, shape index: {}]
  %s1 = inlined_call_operand.vmem [shape: bf16[32,512], index: 1, kind: input, shape index: {}]
  %s2 = inlined_call_operand.vmem [shape: f32[1,512], index: 2, kind: input, shape index: {}]
  %s3 = inlined_call_operand.hbm [shape: f32[16,512], index: 3, kind: output, shape index: {}]
  %s4 = sld [smem:[#allocation0]]
  $region83: #{sasrec_forward.5} parent=0
    _
  %s6 = ssub.s32 1, %s4
  %s7 = scalar_select 0, %s6, %s4
  $region1: #{sasrec_forward.5} parent=0
    #allocation2 [shape = 'u8[32768]{0}', space=vmem, size = 0x8000, scoped, tag = 'input window, operand 1']
    #allocation3 [shape = 'u8[16384]{0}', space=vmem, size = 0x4000, scoped, tag = 'output window, operand 0']
    #allocation4 [shape = 's32[2]{0}', space=sflag, size = 0x8, scoped, tag = 'scoped memory for sasrec_forward.5']
    %8 = vsyncpa [#allocation4], 0
    %s9 = scalar_lea.sflag [#allocation4], 1
    %10 = vsyncpa %s9, 0
    loop: start=0, step=1, limit=6
    $region2: #{sasrec_forward.5} parent=1 // loop_pre_header
      _
    $region3: #{sasrec_forward.5} parent=1 // loop_header
      %s12 = sphi 0, %s16
      %p13 = scmp.ge.s32.totalorder %s12, 6
      %s19 = sphi 0, %s31
      %s20 = sphi 0, %s27
      %s21 = sphi 0, %s19
      %s22 = sphi 0, %s20
      %s23 = sphi 0, %s21
      %s24 = sphi 0, %s22
      %s34 = sphi 0, %s36
      %s37 = sphi 0, %s34
      %s38 = sphi 0, %s37
      %s54 = sphi 0, %s38
      %s60 = sphi 0, %s62
      %s63 = sphi 0, %s60
      %s64 = sphi 0, %s63
      %s80 = sphi 0, %s64
      %s86 = sphi 0, %s88
      %s89 = sphi 0, %s86
      %s90 = sphi 0, %s89
      %s106 = sphi 0, %s90
      %s114 = sphi 0, %s116
      %s117 = sphi 0, %s114
      %s118 = sphi 0, %s117
      %s134 = sphi 0, %s118
    $region4: #{sasrec_forward.5} parent=1 // loop_header_branch
      %15 = sbr.rel (%p13) target = $region8
    $region5: #{sasrec_forward.5} parent=1 // loop_body
      %s17 = ssub.s32 %s12, 1
      %s18 = ssub.s32 %s12, 2
      %s25 = sadd.s32 1, %s20
      %p26 = scmp.ge.s32.totalorder %s25, 2
      %s27 = scalar_select %p26, 0, %s25
      %s28 = sadd.s32 1, %s19
      %s29 = scalar_select %p26, %s28, %s19
      %p30 = scmp.ge.s32.totalorder %s29, 2
      %s31 = scalar_select %p30, 0, %s29
      %s32 = ssub.s32 %s19, %s31
      %p33 = scmp.eq.s32.totalorder %s32, 0
      %s35 = sadd.s32 %s34, 1
      %s36 = scalar_select %p33, %s34, %s35
      %p39 = pneg %p33
      %p40 = scmp.eq.s32.totalorder %s12, 3
      %p41 = por %p39, %p40
      %p42 = scmp.ne.s32.totalorder %s34, %s37
      %p43 = scmp.eq.s32.totalorder %s12, 0
      %p44 = por %p42, %p43
      %p45 = scmp.ne.s32.totalorder %s34, %s37
      %p46 = scmp.eq.s32.totalorder %s17, 3
      %p47 = por %p45, %p46
      %p48 = scmp.ne.s32.totalorder %s37, %s38
      %p49 = scmp.eq.s32.totalorder %s17, 0
      %p50 = por %p48, %p49
      %p51 = scmp.ne.s32.totalorder %s37, %s38
      %p52 = scmp.eq.s32.totalorder %s18, 3
      %p53 = por %p51, %p52
      %p55 = scmp.ne.s32.totalorder %s38, %s54
      %p56 = scmp.eq.s32.totalorder %s18, 0
      %p57 = por %p55, %p56
      %s58 = ssub.s32 %s20, %s27
      %p59 = scmp.eq.s32.totalorder %s58, 0
      %s61 = sadd.s32 %s60, 1
      %s62 = scalar_select %p59, %s60, %s61
      %p65 = pneg %p59
      %p66 = scmp.eq.s32.totalorder %s12, 3
      %p67 = por %p65, %p66
      %p68 = scmp.ne.s32.totalorder %s60, %s63
      %p69 = scmp.eq.s32.totalorder %s12, 0
      %p70 = por %p68, %p69
      %p71 = scmp.ne.s32.totalorder %s60, %s63
      %p72 = scmp.eq.s32.totalorder %s17, 3
      %p73 = por %p71, %p72
      %p74 = scmp.ne.s32.totalorder %s63, %s64
      %p75 = scmp.eq.s32.totalorder %s17, 0
      %p76 = por %p74, %p75
      %p77 = scmp.ne.s32.totalorder %s63, %s64
      %p78 = scmp.eq.s32.totalorder %s18, 3
      %p79 = por %p77, %p78
      %p81 = scmp.ne.s32.totalorder %s64, %s80
      %p82 = scmp.eq.s32.totalorder %s18, 0
      %p83 = por %p81, %p82
      %s84 = ssub.s32 %s20, %s27
      %p85 = scmp.eq.s32.totalorder %s84, 0
      %s87 = sadd.s32 %s86, 1
      %s88 = scalar_select %p85, %s86, %s87
      %p91 = pneg %p85
      %p92 = scmp.eq.s32.totalorder %s12, 3
      %p93 = por %p91, %p92
      %p94 = scmp.ne.s32.totalorder %s86, %s89
      %p95 = scmp.eq.s32.totalorder %s12, 0
      %p96 = por %p94, %p95
      %p97 = scmp.ne.s32.totalorder %s86, %s89
      %p98 = scmp.eq.s32.totalorder %s17, 3
      %p99 = por %p97, %p98
      %p100 = scmp.ne.s32.totalorder %s89, %s90
      %p101 = scmp.eq.s32.totalorder %s17, 0
      %p102 = por %p100, %p101
      %p103 = scmp.ne.s32.totalorder %s89, %s90
      %p104 = scmp.eq.s32.totalorder %s18, 3
      %p105 = por %p103, %p104
      %p107 = scmp.ne.s32.totalorder %s90, %s106
      %p108 = scmp.eq.s32.totalorder %s18, 0
      %p109 = por %p107, %p108
      %s110 = ssub.s32 %s19, %s31
      %s111 = ssub.s32 %s20, %s27
      %s112 = sor.u32 %s110, %s111
      %p113 = scmp.eq.s32.totalorder %s112, 0
      %s115 = sadd.s32 %s114, 1
      %s116 = scalar_select %p113, %s114, %s115
      %p119 = pneg %p113
      %p120 = scmp.eq.s32.totalorder %s12, 3
      %p121 = por %p119, %p120
      %p122 = scmp.ne.s32.totalorder %s114, %s117
      %p123 = scmp.eq.s32.totalorder %s12, 0
      %p124 = por %p122, %p123
      %p125 = scmp.ne.s32.totalorder %s114, %s117
      %p126 = scmp.eq.s32.totalorder %s17, 3
      %p127 = por %p125, %p126
      %p128 = scmp.ne.s32.totalorder %s117, %s118
      %p129 = scmp.eq.s32.totalorder %s17, 0
      %p130 = por %p128, %p129
      %p131 = scmp.ne.s32.totalorder %s117, %s118
      %p132 = scmp.eq.s32.totalorder %s18, 3
      %p133 = por %p131, %p132
      %p135 = scmp.ne.s32.totalorder %s118, %s134
      %p136 = scmp.eq.s32.totalorder %s18, 0
      %p137 = por %p135, %p136
      %p138 = scmp.le.s32.totalorder 1, %s12
      %p139 = scmp.lt.s32.totalorder %s12, 5
      %p140 = pnand %p138, %p139
      %p141 = pneg %p140
      // Predicated region
      $region9: #{sasrec_forward.5} parent=5 // pred_check
        _
      $region10: #{sasrec_forward.5} parent=5 // pred_check_branch
        %143 = sbr.rel (%p140) target = $region12
      $region11: #{sasrec_forward.5} parent=5 // pred_region
        %s144 = ssub.s32 %s12, 1
      $region12: #{sasrec_forward.5} parent=5 // pred_fallthru
        _
      %p145 = scmp.lt.s32.totalorder %s12, 4
      // Predicated region
      $region13: #{sasrec_forward.5} parent=5 // pred_check
        %p146 = pneg %p145
      $region14: #{sasrec_forward.5} parent=5 // pred_check_branch
        %148 = sbr.rel (%p146) target = $region16
      $region15: #{sasrec_forward.5} parent=5 // pred_region
        // Predicated region
        $region17: #{sasrec_forward.5} parent=15 // pred_check
          %p149 = pneg %p44
        $region18: #{sasrec_forward.5} parent=15 // pred_check_branch
          %151 = sbr.rel (%p149) target = $region20
        $region19: #{sasrec_forward.5} parent=15 // pred_region
          %p152 = scmp.lt.s32.totalorder %s19, 1
          %s153 = scalar_select %p152, %s19, 1
          %s154 = smul.addr %s153, 8
          %s155 = scalar_lea.vmem %s0, %s154
        $region20: #{sasrec_forward.5} parent=15 // pred_fallthru
          _
        // Predicated region
        $region21: #{sasrec_forward.5} parent=15 // pred_check
          %p156 = pneg %p70
        $region22: #{sasrec_forward.5} parent=15 // pred_check_branch
          %158 = sbr.rel (%p156) target = $region24
        $region23: #{sasrec_forward.5} parent=15 // pred_region
          %s159 = sand.u32 %s60, 1
          %s160 = sand.u32 %s60, 1
          %s161 = smul.addr %s160, 32
          %s162 = scalar_lea.vmem [#allocation2], %s161
          %s163 = smul.u32 2, %s20
          %s164 = smul.addr %s163, 4
          %s165 = scalar_lea.vmem %s1, %s164
          // Predicated region
          $region25: #{sasrec_forward.5} parent=23 // pred_check
            _
          $region26: #{sasrec_forward.5} parent=23 // pred_check_branch
            %167 = sbr.rel (0) target = $region28
          $region27: #{sasrec_forward.5} parent=23 // pred_region
            // Predicated region
            $region29: #{sasrec_forward.5} parent=27 // pred_check
              _
            $region30: #{sasrec_forward.5} parent=27 // pred_check_branch
              %169 = sbr.rel (0) target = $region32
            $region31: #{sasrec_forward.5} parent=27 // pred_region
              // Predicated region
              $region44: #{sasrec_forward.5} parent=31 // pred_check
                _
              $region45: #{sasrec_forward.5} parent=31 // pred_check_branch
                %190 = sbr.rel (0) target = $region47
              $region46: #{sasrec_forward.5} parent=31 // pred_region
                loop: start=0, step=1, limit=1
                $region48: #{sasrec_forward.5} parent=46 // loop_pre_header
                  _
                $region49: #{sasrec_forward.5} parent=46 // loop_header
                  %s192 = sphi 0, %s196
                  %p193 = scmp.ge.s32.totalorder %s192, 1
                  %s197 = sphi %s165, %s165
                  %s198 = sphi %s162, %s162
                $region50: #{sasrec_forward.5} parent=46 // loop_header_branch
                  %195 = sbr.rel (%p193) target = $region54
                $region51: #{sasrec_forward.5} parent=46 // loop_body
                  %v199 = vld [vmem:[%s197] sm:$0xff]
                  %200 = vst [vmem:[%s198] sm:$0xff] %v199
                  %v201 = vld [vmem:[%s197 + $0x10] sm:$0xff]
                  %202 = vst [vmem:[%s198 + $0x8] sm:$0xff] %v201
                  %v203 = vld [vmem:[%s197 + $0x20] sm:$0xff]
                  %204 = vst [vmem:[%s198 + $0x10] sm:$0xff] %v203
                  %v205 = vld [vmem:[%s197 + $0x30] sm:$0xff]
                  %206 = vst [vmem:[%s198 + $0x18] sm:$0xff] %v205
                $region52: #{sasrec_forward.5} parent=46 // loop_footer
                  %s196 = sadd.s32 1, %s192
                $region53: #{sasrec_forward.5} parent=46 // loop_footer_branch
                  %191 = sbr.rel target = $region49
                $region54: #{sasrec_forward.5} parent=46 // loop_exit
                  _
              $region47: #{sasrec_forward.5} parent=31 // pred_fallthru
                _
              // Predicated region
              $region55: #{sasrec_forward.5} parent=31 // pred_check
                _
              $region56: #{sasrec_forward.5} parent=31 // pred_check_branch
                %208 = sbr.rel target = $region58
              $region57: #{sasrec_forward.5} parent=31 // pred_region
                _
              $region58: #{sasrec_forward.5} parent=31 // pred_fallthru
                _
            $region32: #{sasrec_forward.5} parent=27 // pred_fallthru
              _
            // Predicated region
            $region33: #{sasrec_forward.5} parent=27 // pred_check
              _
            $region34: #{sasrec_forward.5} parent=27 // pred_check_branch
              %171 = sbr.rel target = $region36
            $region35: #{sasrec_forward.5} parent=27 // pred_region
              loop: start=0, step=1, limit=1
              $region37: #{sasrec_forward.5} parent=35 // loop_pre_header
                _
              $region38: #{sasrec_forward.5} parent=35 // loop_header
                %s174 = sphi 0, %s178
                %p175 = scmp.ge.s32.totalorder %s174, 1
                %s179 = sphi %s165, %s165
                %s180 = sphi %s162, %s162
              $region39: #{sasrec_forward.5} parent=35 // loop_header_branch
                %177 = sbr.rel (%p175) target = $region43
              $region40: #{sasrec_forward.5} parent=35 // loop_body
                %v181 = vld [vmem:[%s179] sm:$0xff]
                %182 = vst [vmem:[%s180] sm:$0xff] %v181
                %v183 = vld [vmem:[%s179 + $0x10] sm:$0xff]
                %184 = vst [vmem:[%s180 + $0x8] sm:$0xff] %v183
                %v185 = vld [vmem:[%s179 + $0x20] sm:$0xff]
                %186 = vst [vmem:[%s180 + $0x10] sm:$0xff] %v185
                %v187 = vld [vmem:[%s179 + $0x30] sm:$0xff]
                %188 = vst [vmem:[%s180 + $0x18] sm:$0xff] %v187
              $region41: #{sasrec_forward.5} parent=35 // loop_footer
                %s178 = sadd.s32 1, %s174
              $region42: #{sasrec_forward.5} parent=35 // loop_footer_branch
                %173 = sbr.rel target = $region38
              $region43: #{sasrec_forward.5} parent=35 // loop_exit
                _
            $region36: #{sasrec_forward.5} parent=27 // pred_fallthru
              _
          $region28: #{sasrec_forward.5} parent=23 // pred_fallthru
            _
          %209 = vnop
        $region24: #{sasrec_forward.5} parent=15 // pred_fallthru
          _
        // Predicated region
        $region59: #{sasrec_forward.5} parent=15 // pred_check
          %p210 = pneg %p96
        $region60: #{sasrec_forward.5} parent=15 // pred_check_branch
          %212 = sbr.rel (%p210) target = $region62
        $region61: #{sasrec_forward.5} parent=15 // pred_region
          %s213 = smul.u32 2, %s20
          %p214 = scmp.lt.s32.totalorder %s213, 3
          %s215 = scalar_select %p214, %s213, 3
          %s216 = scalar_lea.vmem %s2, %s215
          %s217 = smul.u32 2, %s20
        $region62: #{sasrec_forward.5} parent=15 // pred_fallthru
          _
      $region16: #{sasrec_forward.5} parent=5 // pred_fallthru
        _
      %p218 = scmp.le.s32.totalorder 1, %s12
      %p219 = scmp.lt.s32.totalorder %s12, 5
      %p220 = pnand %p218, %p219
      %p221 = pneg %p220
      // Predicated region
      $region63: #{sasrec_forward.5} parent=5 // pred_check
        _
      $region64: #{sasrec_forward.5} parent=5 // pred_check_branch
        %223 = sbr.rel (%p220) target = $region66
      $region65: #{sasrec_forward.5} parent=5 // pred_region
        %s224 = ssub.s32 %s12, 1
        %s225 = sand.u32 %s63, 1
        %s226 = sand.u32 %s63, 1
        %s227 = smul.addr %s226, 32
        %s228 = scalar_lea.vmem [#allocation2], %s227
        // Predicated region
        $region67: #{sasrec_forward.5} parent=65 // pred_check
          %p229 = pneg %p76
        $region68: #{sasrec_forward.5} parent=65 // pred_check_branch
          %231 = sbr.rel (%p229) target = $region70
        $region69: #{sasrec_forward.5} parent=65 // pred_region
          _
        $region70: #{sasrec_forward.5} parent=65 // pred_fallthru
          _
        %p232 = scmp.lt.s32.totalorder %s21, 1
        %s233 = scalar_select %p232, %s21, 1
        %s234 = smul.addr %s233, 8
        %s235 = scalar_lea.vmem %s0, %s234
        %p236 = pneg %p50
        %p237 = pneg %p47
        %s238 = sand.u32 %s63, 1
        %s239 = sand.u32 %s63, 1
        %s240 = smul.addr %s239, 32
        %s241 = scalar_lea.vmem [#allocation2], %s240
        %p242 = pneg %p76
        %p243 = pneg %p73
        %s244 = smul.u32 2, %s22
        %p245 = scmp.lt.s32.totalorder %s244, 3
        %s246 = scalar_select %p245, %s244, 3
        %s247 = scalar_lea.vmem %s2, %s246
        %p248 = pneg %p102
        %p249 = pneg %p99
        %p250 = pneg %p130
        %p251 = pneg %p127
        %s252 = sand.u32 %s117, 1
        %s253 = scalar_lea.sflag [#allocation4], %s252
        %s254 = sand.u32 %s117, 1
        %s255 = smul.addr %s254, 16
        %s256 = scalar_lea.vmem [#allocation3], %s255
        %p257 = scmp.lt.s32.totalorder %s21, 1
        %s258 = scalar_select %p257, %s21, 1
        %s259 = smul.addr %s258, 8
        %s260 = scalar_lea.vmem %s0, %s259
        %s261 = smul.u32 2, %s22
        %s262 = smul.u32 2, %s22
        %p263 = scmp.lt.s32.totalorder %s262, 3
        %s264 = scalar_select %p263, %s262, 3
        %s265 = scalar_lea.vmem %s2, %s264
        %s266 = smul.u32 2, %s22
        %s267 = smul.u32 2, %s22
        %v269 = vld [vmem:[%s260] sm:$0xff]
        %v270 = vpack.c.bf16 %v269, %v269
        %v271 = vld [vmem:[%s228] sm:$0xff]
        %v272 = vld [vmem:[%s228 + $0x8] sm:$0xff]
        %v273 = vld [vmem:[%s228 + $0x10] sm:$0xff]
        %v274 = vld [vmem:[%s228 + $0x18] sm:$0xff]
        %v275 = vld [vmem:[%s265] sm:$0x3]
        %v277 = vlaneseq
        %v278 = vshrl.u32 %v277, 7
        %v279 = vsub.s32 0, %v278
        %v280 = vrot.slane %v275, %v279
        %v281 = vlaneseq
        %v282 = vshrl.u32 %v281, 7
        %v283 = vsub.s32 1, %v282
        %v284 = vrot.slane %v275, %v283
        %v291 = vunpack.c.l.b16 %v271
        %v292 = vunpack.c.h.b16 %v271
        %v293 = vunpack.c.l.b16 %v272
        %v294 = vunpack.c.h.b16 %v272
        %v295 = vunpack.c.l.b16 %v273
        %v296 = vunpack.c.h.b16 %v273
        %v297 = vunpack.c.l.b16 %v274
        %v298 = vunpack.c.h.b16 %v274
        %v299 = vpack.c.b16 %v293, %v291
        %v300 = vpack.c.b16 %v294, %v292
        %v301 = vpack.c.b16 %v297, %v295
        %v302 = vpack.c.b16 %v298, %v296
        %vm307 = vcmask 261120
        %v309 = vsel %vm307, %v270, 0
        %311 = vmatprep.subr.bf16.mxu0 %v300
        %312 = vmatpush1.bf16.msra.mxu0 %v299
        %313 = vmatprep.subr.bf16.mxu0 %v302
        %314 = vmatpush1.bf16.msra.mxu0 %v301
        %315 = vmatprep.subr.bf16.mxu0 0
        %316 = vmatpush1.bf16.msra.mxu0 0
        %317 = vmatprep.subr.bf16.mxu0 0
        %318 = vmatpush1.bf16.msra.mxu0 0
        %319 = vmatprep.subr.bf16.mxu0 0
        %320 = vmatpush1.bf16.msra.mxu0 0
        %321 = vmatprep.subr.bf16.mxu0 0
        %322 = vmatpush1.bf16.msra.mxu0 0
        %323 = vmatprep.subr.bf16.mxu0 0
        %324 = vmatpush1.bf16.msra.mxu0 0
        %325 = vmatprep.subr.bf16.mxu0 0
        %326 = vmatpush1.bf16.msra.mxu0 0
        %327 = vmatprep.subr.bf16.mxu0 0
        %328 = vmatpush1.bf16.msra.mxu0 0
        %329 = vmatprep.subr.bf16.mxu0 0
        %330 = vmatpush1.bf16.msra.mxu0 0
        %331 = vmatprep.subr.bf16.mxu0 0
        %332 = vmatpush1.bf16.msra.mxu0 0
        %333 = vmatprep.subr.bf16.mxu0 0
        %334 = vmatpush1.bf16.msra.mxu0 0
        %335 = vmatprep.subr.bf16.mxu0 0
        %336 = vmatpush1.bf16.msra.mxu0 0
        %337 = vmatprep.subr.bf16.mxu0 0
        %338 = vmatpush1.bf16.msra.mxu0 0
        %339 = vmatprep.subr.bf16.mxu0 0
        %340 = vmatpush1.bf16.msra.mxu0 0
        %341 = vmatprep.subr.bf16.mxu0 0
        %342 = vmatpush1.bf16.msra.mxu0 0
        %343 = vmatprep.mubr.bf16.mxu0 0
        %344 = vmatmul.mubr.bf16.gmra.mrb[0].mxu0 %v309
        %v345 = vpop.f32.mrb[0].mxu0
        %v346 = vadd.f32 %v280, %v345
        %v347 = vpop.f32.mrb[0].mxu0
        %v348 = vadd.f32 %v284, %v347
        %v349 = vpop.f32.mrb[0].mxu0
        %v350 = vpop.f32.mrb[0].mxu0
        %351 = vdwg.mxu0
        %352 = vst [vmem:[%s256] sm:$0xff] %v346
        %353 = vst [vmem:[%s256 + $0x8] sm:$0xff] %v348
        %s354 = sand.u32 %s117, 1
        %s355 = scalar_lea.sflag [#allocation4], %s354
        %s356 = sand.u32 %s117, 1
        %s357 = smul.addr %s356, 16
        %s358 = scalar_lea.vmem [#allocation3], %s357
        // Predicated region
        $region71: #{sasrec_forward.5} parent=65 // pred_check
          %p359 = pneg %p127
        $region72: #{sasrec_forward.5} parent=65 // pred_check_branch
          %361 = sbr.rel (%p359) target = $region74
        $region73: #{sasrec_forward.5} parent=65 // pred_region
          %s362 = smul.u32 2, %s22
          %s364 = ssub.s32 256, 256
          %365 = vsyncadd %s355, %s364
          %s366 = smul.addr %s21, 4
          %s367 = sadd.s32 %s362, %s366
          %s368 = smul.addr %s367, 128
          %s369 = scalar_lea.hbm %s3, %s368
          %s371 = sshll.u32 %s358, 4
          %s372 = int_to_ptr.vmem [resolvable:$true] %s371
          %374 = dma.vmem_to_hbm [thread:$0]  %s372, 256, %s369, %s355
        $region74: #{sasrec_forward.5} parent=65 // pred_fallthru
          _
      $region66: #{sasrec_forward.5} parent=5 // pred_fallthru
        _
      %p375 = scmp.le.s32.totalorder 2, %s12
      // Predicated region
      $region75: #{sasrec_forward.5} parent=5 // pred_check
        %p376 = pneg %p375
      $region76: #{sasrec_forward.5} parent=5 // pred_check_branch
        %378 = sbr.rel (%p376) target = $region78
      $region77: #{sasrec_forward.5} parent=5 // pred_region
        %s379 = ssub.s32 %s12, 2
        // Predicated region
        $region79: #{sasrec_forward.5} parent=77 // pred_check
          %p380 = pneg %p133
        $region80: #{sasrec_forward.5} parent=77 // pred_check_branch
          %382 = sbr.rel (%p380) target = $region82
        $region81: #{sasrec_forward.5} parent=77 // pred_region
          %s383 = sand.u32 %s118, 1
          %s384 = scalar_lea.sflag [#allocation4], %s383
          %s385 = sand.u32 %s118, 1
          %s386 = smul.addr %s385, 16
          %s387 = scalar_lea.vmem [#allocation3], %s386
          %388 = dma.done %s384, 256
        $region82: #{sasrec_forward.5} parent=77 // pred_fallthru
          _
      $region78: #{sasrec_forward.5} parent=5 // pred_fallthru
        _
    $region6: #{sasrec_forward.5} parent=1 // loop_footer
      %s16 = sadd.s32 1, %s12
    $region7: #{sasrec_forward.5} parent=1 // loop_footer_branch
      %11 = sbr.rel target = $region3
    $region8: #{sasrec_forward.5} parent=1 // loop_exit
      _
    %389 = vsyncpa [#allocation4], 1
    %s390 = scalar_lea.sflag [#allocation4], 1
    %391 = vsyncpa %s390, 1

// kernel: sasrec_forward.3
$region0: #{sasrec_forward.3}
  #allocation0 [shape = 'u32[]', space=smem, size = 0x4, offset = 0x4, fixed_abs, tag = 'smem constant byte address 0x4 - core index']
  #allocation1 [shape = 'u32[144,128]{1,0:T(1,128)}', space=vmem, size = 0x12000, scoped, tag = 'internal scratch']
  %s0 = inlined_call_operand.vmem [shape: f32[16,8,32], index: 0, kind: input, shape index: {}]
  %s1 = inlined_call_operand.vmem [shape: f32[16,1,8], index: 1, kind: input, shape index: {}]
  %s2 = inlined_call_operand.vmem [shape: bf16[32,96], index: 2, kind: input, shape index: {}]
  %s3 = inlined_call_operand.vmem [shape: f32[1,96], index: 3, kind: input, shape index: {}]
  %s4 = inlined_call_operand.vmem [shape: bf16[32,32], index: 4, kind: input, shape index: {}]
  %s5 = inlined_call_operand.vmem [shape: f32[1,32], index: 5, kind: input, shape index: {}]
  %s6 = inlined_call_operand.vmem [shape: f32[1,32], index: 6, kind: input, shape index: {}]
  %s7 = inlined_call_operand.vmem [shape: f32[1,32], index: 7, kind: input, shape index: {}]
  %s8 = inlined_call_operand.vmem [shape: bf16[32,128], index: 8, kind: input, shape index: {}]
  %s9 = inlined_call_operand.vmem [shape: f32[1,128], index: 9, kind: input, shape index: {}]
  %s10 = inlined_call_operand.vmem [shape: bf16[128,32], index: 10, kind: input, shape index: {}]
  %s11 = inlined_call_operand.vmem [shape: f32[1,32], index: 11, kind: input, shape index: {}]
  %s12 = inlined_call_operand.vmem [shape: f32[1,32], index: 12, kind: input, shape index: {}]
  %s13 = inlined_call_operand.vmem [shape: f32[1,32], index: 13, kind: input, shape index: {}]
  %s14 = inlined_call_operand.vmem [shape: f32[16,8,32], index: 14, kind: output, shape index: {}]
  %s15 = sld [smem:[#allocation0]]
  $region89: #{sasrec_forward.3} parent=0
    _
  %s17 = ssub.s32 1, %s15
  %s18 = scalar_select 0, %s17, %s15
  loop: start=0, step=1, limit=4
  $region2: #{sasrec_forward.3} parent=0 // loop_pre_header
    _
  $region3: #{sasrec_forward.3} parent=0 // loop_header
    %s20 = sphi 0, %s24
    %p21 = scmp.ge.s32.totalorder %s20, 4
    %s30 = sphi 0, %s32
    %s33 = sphi 0, %s30
    %s34 = sphi 0, %s33
    %s50 = sphi 0, %s34
    %s56 = sphi 0, %s58
    %s59 = sphi 0, %s56
    %s60 = sphi 0, %s59
    %s76 = sphi 0, %s60
    %s80 = sphi 0, %s80
    %s82 = sphi 0, %s80
    %s83 = sphi 0, %s82
    %s97 = sphi 0, %s83
    %s101 = sphi 0, %s101
    %s103 = sphi 0, %s101
    %s104 = sphi 0, %s103
    %s118 = sphi 0, %s104
    %s122 = sphi 0, %s122
    %s124 = sphi 0, %s122
    %s125 = sphi 0, %s124
    %s139 = sphi 0, %s125
    %s143 = sphi 0, %s143
    %s145 = sphi 0, %s143
    %s146 = sphi 0, %s145
    %s160 = sphi 0, %s146
    %s164 = sphi 0, %s164
    %s166 = sphi 0, %s164
    %s167 = sphi 0, %s166
    %s181 = sphi 0, %s167
    %s185 = sphi 0, %s185
    %s187 = sphi 0, %s185
    %s188 = sphi 0, %s187
    %s202 = sphi 0, %s188
    %s206 = sphi 0, %s206
    %s208 = sphi 0, %s206
    %s209 = sphi 0, %s208
    %s223 = sphi 0, %s209
    %s227 = sphi 0, %s227
    %s229 = sphi 0, %s227
    %s230 = sphi 0, %s229
    %s244 = sphi 0, %s230
    %s248 = sphi 0, %s248
    %s250 = sphi 0, %s248
    %s251 = sphi 0, %s250
    %s265 = sphi 0, %s251
    %s269 = sphi 0, %s269
    %s271 = sphi 0, %s269
    %s272 = sphi 0, %s271
    %s286 = sphi 0, %s272
    %s290 = sphi 0, %s290
    %s292 = sphi 0, %s290
    %s293 = sphi 0, %s292
    %s307 = sphi 0, %s293
    %s311 = sphi 0, %s311
    %s313 = sphi 0, %s311
    %s314 = sphi 0, %s313
    %s328 = sphi 0, %s314
    %s334 = sphi 0, %s336
    %s337 = sphi 0, %s334
    %s338 = sphi 0, %s337
    %s354 = sphi 0, %s338
  $region4: #{sasrec_forward.3} parent=0 // loop_header_branch
    %23 = sbr.rel (%p21) target = $region8
  $region5: #{sasrec_forward.3} parent=0 // loop_body
    %s25 = ssub.s32 %s20, 1
    %s26 = ssub.s32 %s20, 2
    %s27 = sadd.s32 %s20, 1
    %s28 = ssub.s32 %s20, %s27
    %p29 = scmp.eq.s32.totalorder %s28, 0
    %s31 = sadd.s32 %s30, 1
    %s32 = scalar_select %p29, %s30, %s31
    %p35 = pneg %p29
    %p36 = scmp.eq.s32.totalorder %s20, 1
    %p37 = por %p35, %p36
    %p38 = scmp.ne.s32.totalorder %s30, %s33
    %p39 = scmp.eq.s32.totalorder %s20, 0
    %p40 = por %p38, %p39
    %p41 = scmp.ne.s32.totalorder %s30, %s33
    %p42 = scmp.eq.s32.totalorder %s25, 1
    %p43 = por %p41, %p42
    %p44 = scmp.ne.s32.totalorder %s33, %s34
    %p45 = scmp.eq.s32.totalorder %s25, 0
    %p46 = por %p44, %p45
    %p47 = scmp.ne.s32.totalorder %s33, %s34
    %p48 = scmp.eq.s32.totalorder %s26, 1
    %p49 = por %p47, %p48
    %p51 = scmp.ne.s32.totalorder %s34, %s50
    %p52 = scmp.eq.s32.totalorder %s26, 0
    %p53 = por %p51, %p52
    %s54 = ssub.s32 %s20, %s27
    %p55 = scmp.eq.s32.totalorder %s54, 0
    %s57 = sadd.s32 %s56, 1
    %s58 = scalar_select %p55, %s56, %s57
    %p61 = pneg %p55
    %p62 = scmp.eq.s32.totalorder %s20, 1
    %p63 = por %p61, %p62
    %p64 = scmp.ne.s32.totalorder %s56, %s59
    %p65 = scmp.eq.s32.totalorder %s20, 0
    %p66 = por %p64, %p65
    %p67 = scmp.ne.s32.totalorder %s56, %s59
    %p68 = scmp.eq.s32.totalorder %s25, 1
    %p69 = por %p67, %p68
    %p70 = scmp.ne.s32.totalorder %s59, %s60
    %p71 = scmp.eq.s32.totalorder %s25, 0
    %p72 = por %p70, %p71
    %p73 = scmp.ne.s32.totalorder %s59, %s60
    %p74 = scmp.eq.s32.totalorder %s26, 1
    %p75 = por %p73, %p74
    %p77 = scmp.ne.s32.totalorder %s60, %s76
    %p78 = scmp.eq.s32.totalorder %s26, 0
    %p79 = por %p77, %p78
    %s81 = sadd.s32 %s80, 1
    %p84 = scmp.eq.s32.totalorder %s20, 1
    %p85 = scmp.ne.s32.totalorder %s80, %s82
    %p86 = scmp.eq.s32.totalorder %s20, 0
    %p87 = por %p85, %p86
    %p88 = scmp.ne.s32.totalorder %s80, %s82
    %p89 = scmp.eq.s32.totalorder %s25, 1
    %p90 = por %p88, %p89
    %p91 = scmp.ne.s32.totalorder %s82, %s83
    %p92 = scmp.eq.s32.totalorder %s25, 0
    %p93 = por %p91, %p92
    %p94 = scmp.ne.s32.totalorder %s82, %s83
    %p95 = scmp.eq.s32.totalorder %s26, 1
    %p96 = por %p94, %p95
    %p98 = scmp.ne.s32.totalorder %s83, %s97
    %p99 = scmp.eq.s32.totalorder %s26, 0
    %p100 = por %p98, %p99
    %s102 = sadd.s32 %s101, 1
    %p105 = scmp.eq.s32.totalorder %s20, 1
    %p106 = scmp.ne.s32.totalorder %s101, %s103
    %p107 = scmp.eq.s32.totalorder %s20, 0
    %p108 = por %p106, %p107
    %p109 = scmp.ne.s32.totalorder %s101, %s103
    %p110 = scmp.eq.s32.totalorder %s25, 1
    %p111 = por %p109, %p110
    %p112 = scmp.ne.s32.totalorder %s103, %s104
    %p113 = scmp.eq.s32.totalorder %s25, 0
    %p114 = por %p112, %p113
    %p115 = scmp.ne.s32.totalorder %s103, %s104
    %p116 = scmp.eq.s32.totalorder %s26, 1
    %p117 = por %p115, %p116
    %p119 = scmp.ne.s32.totalorder %s104, %s118
    %p120 = scmp.eq.s32.totalorder %s26, 0
    %p121 = por %p119, %p120
    %s123 = sadd.s32 %s122, 1
    %p126 = scmp.eq.s32.totalorder %s20, 1
    %p127 = scmp.ne.s32.totalorder %s122, %s124
    %p128 = scmp.eq.s32.totalorder %s20, 0
    %p129 = por %p127, %p128
    %p130 = scmp.ne.s32.totalorder %s122, %s124
    %p131 = scmp.eq.s32.totalorder %s25, 1
    %p132 = por %p130, %p131
    %p133 = scmp.ne.s32.totalorder %s124, %s125
    %p134 = scmp.eq.s32.totalorder %s25, 0
    %p135 = por %p133, %p134
    %p136 = scmp.ne.s32.totalorder %s124, %s125
    %p137 = scmp.eq.s32.totalorder %s26, 1
    %p138 = por %p136, %p137
    %p140 = scmp.ne.s32.totalorder %s125, %s139
    %p141 = scmp.eq.s32.totalorder %s26, 0
    %p142 = por %p140, %p141
    %s144 = sadd.s32 %s143, 1
    %p147 = scmp.eq.s32.totalorder %s20, 1
    %p148 = scmp.ne.s32.totalorder %s143, %s145
    %p149 = scmp.eq.s32.totalorder %s20, 0
    %p150 = por %p148, %p149
    %p151 = scmp.ne.s32.totalorder %s143, %s145
    %p152 = scmp.eq.s32.totalorder %s25, 1
    %p153 = por %p151, %p152
    %p154 = scmp.ne.s32.totalorder %s145, %s146
    %p155 = scmp.eq.s32.totalorder %s25, 0
    %p156 = por %p154, %p155
    %p157 = scmp.ne.s32.totalorder %s145, %s146
    %p158 = scmp.eq.s32.totalorder %s26, 1
    %p159 = por %p157, %p158
    %p161 = scmp.ne.s32.totalorder %s146, %s160
    %p162 = scmp.eq.s32.totalorder %s26, 0
    %p163 = por %p161, %p162
    %s165 = sadd.s32 %s164, 1
    %p168 = scmp.eq.s32.totalorder %s20, 1
    %p169 = scmp.ne.s32.totalorder %s164, %s166
    %p170 = scmp.eq.s32.totalorder %s20, 0
    %p171 = por %p169, %p170
    %p172 = scmp.ne.s32.totalorder %s164, %s166
    %p173 = scmp.eq.s32.totalorder %s25, 1
    %p174 = por %p172, %p173
    %p175 = scmp.ne.s32.totalorder %s166, %s167
    %p176 = scmp.eq.s32.totalorder %s25, 0
    %p177 = por %p175, %p176
    %p178 = scmp.ne.s32.totalorder %s166, %s167
    %p179 = scmp.eq.s32.totalorder %s26, 1
    %p180 = por %p178, %p179
    %p182 = scmp.ne.s32.totalorder %s167, %s181
    %p183 = scmp.eq.s32.totalorder %s26, 0
    %p184 = por %p182, %p183
    %s186 = sadd.s32 %s185, 1
    %p189 = scmp.eq.s32.totalorder %s20, 1
    %p190 = scmp.ne.s32.totalorder %s185, %s187
    %p191 = scmp.eq.s32.totalorder %s20, 0
    %p192 = por %p190, %p191
    %p193 = scmp.ne.s32.totalorder %s185, %s187
    %p194 = scmp.eq.s32.totalorder %s25, 1
    %p195 = por %p193, %p194
    %p196 = scmp.ne.s32.totalorder %s187, %s188
    %p197 = scmp.eq.s32.totalorder %s25, 0
    %p198 = por %p196, %p197
    %p199 = scmp.ne.s32.totalorder %s187, %s188
    %p200 = scmp.eq.s32.totalorder %s26, 1
    %p201 = por %p199, %p200
    %p203 = scmp.ne.s32.totalorder %s188, %s202
    %p204 = scmp.eq.s32.totalorder %s26, 0
    %p205 = por %p203, %p204
    %s207 = sadd.s32 %s206, 1
    %p210 = scmp.eq.s32.totalorder %s20, 1
    %p211 = scmp.ne.s32.totalorder %s206, %s208
    %p212 = scmp.eq.s32.totalorder %s20, 0
    %p213 = por %p211, %p212
    %p214 = scmp.ne.s32.totalorder %s206, %s208
    %p215 = scmp.eq.s32.totalorder %s25, 1
    %p216 = por %p214, %p215
    %p217 = scmp.ne.s32.totalorder %s208, %s209
    %p218 = scmp.eq.s32.totalorder %s25, 0
    %p219 = por %p217, %p218
    %p220 = scmp.ne.s32.totalorder %s208, %s209
    %p221 = scmp.eq.s32.totalorder %s26, 1
    %p222 = por %p220, %p221
    %p224 = scmp.ne.s32.totalorder %s209, %s223
    %p225 = scmp.eq.s32.totalorder %s26, 0
    %p226 = por %p224, %p225
    %s228 = sadd.s32 %s227, 1
    %p231 = scmp.eq.s32.totalorder %s20, 1
    %p232 = scmp.ne.s32.totalorder %s227, %s229
    %p233 = scmp.eq.s32.totalorder %s20, 0
    %p234 = por %p232, %p233
    %p235 = scmp.ne.s32.totalorder %s227, %s229
    %p236 = scmp.eq.s32.totalorder %s25, 1
    %p237 = por %p235, %p236
    %p238 = scmp.ne.s32.totalorder %s229, %s230
    %p239 = scmp.eq.s32.totalorder %s25, 0
    %p240 = por %p238, %p239
    %p241 = scmp.ne.s32.totalorder %s229, %s230
    %p242 = scmp.eq.s32.totalorder %s26, 1
    %p243 = por %p241, %p242
    %p245 = scmp.ne.s32.totalorder %s230, %s244
    %p246 = scmp.eq.s32.totalorder %s26, 0
    %p247 = por %p245, %p246
    %s249 = sadd.s32 %s248, 1
    %p252 = scmp.eq.s32.totalorder %s20, 1
    %p253 = scmp.ne.s32.totalorder %s248, %s250
    %p254 = scmp.eq.s32.totalorder %s20, 0
    %p255 = por %p253, %p254
    %p256 = scmp.ne.s32.totalorder %s248, %s250
    %p257 = scmp.eq.s32.totalorder %s25, 1
    %p258 = por %p256, %p257
    %p259 = scmp.ne.s32.totalorder %s250, %s251
    %p260 = scmp.eq.s32.totalorder %s25, 0
    %p261 = por %p259, %p260
    %p262 = scmp.ne.s32.totalorder %s250, %s251
    %p263 = scmp.eq.s32.totalorder %s26, 1
    %p264 = por %p262, %p263
    %p266 = scmp.ne.s32.totalorder %s251, %s265
    %p267 = scmp.eq.s32.totalorder %s26, 0
    %p268 = por %p266, %p267
    %s270 = sadd.s32 %s269, 1
    %p273 = scmp.eq.s32.totalorder %s20, 1
    %p274 = scmp.ne.s32.totalorder %s269, %s271
    %p275 = scmp.eq.s32.totalorder %s20, 0
    %p276 = por %p274, %p275
    %p277 = scmp.ne.s32.totalorder %s269, %s271
    %p278 = scmp.eq.s32.totalorder %s25, 1
    %p279 = por %p277, %p278
    %p280 = scmp.ne.s32.totalorder %s271, %s272
    %p281 = scmp.eq.s32.totalorder %s25, 0
    %p282 = por %p280, %p281
    %p283 = scmp.ne.s32.totalorder %s271, %s272
    %p284 = scmp.eq.s32.totalorder %s26, 1
    %p285 = por %p283, %p284
    %p287 = scmp.ne.s32.totalorder %s272, %s286
    %p288 = scmp.eq.s32.totalorder %s26, 0
    %p289 = por %p287, %p288
    %s291 = sadd.s32 %s290, 1
    %p294 = scmp.eq.s32.totalorder %s20, 1
    %p295 = scmp.ne.s32.totalorder %s290, %s292
    %p296 = scmp.eq.s32.totalorder %s20, 0
    %p297 = por %p295, %p296
    %p298 = scmp.ne.s32.totalorder %s290, %s292
    %p299 = scmp.eq.s32.totalorder %s25, 1
    %p300 = por %p298, %p299
    %p301 = scmp.ne.s32.totalorder %s292, %s293
    %p302 = scmp.eq.s32.totalorder %s25, 0
    %p303 = por %p301, %p302
    %p304 = scmp.ne.s32.totalorder %s292, %s293
    %p305 = scmp.eq.s32.totalorder %s26, 1
    %p306 = por %p304, %p305
    %p308 = scmp.ne.s32.totalorder %s293, %s307
    %p309 = scmp.eq.s32.totalorder %s26, 0
    %p310 = por %p308, %p309
    %s312 = sadd.s32 %s311, 1
    %p315 = scmp.eq.s32.totalorder %s20, 1
    %p316 = scmp.ne.s32.totalorder %s311, %s313
    %p317 = scmp.eq.s32.totalorder %s20, 0
    %p318 = por %p316, %p317
    %p319 = scmp.ne.s32.totalorder %s311, %s313
    %p320 = scmp.eq.s32.totalorder %s25, 1
    %p321 = por %p319, %p320
    %p322 = scmp.ne.s32.totalorder %s313, %s314
    %p323 = scmp.eq.s32.totalorder %s25, 0
    %p324 = por %p322, %p323
    %p325 = scmp.ne.s32.totalorder %s313, %s314
    %p326 = scmp.eq.s32.totalorder %s26, 1
    %p327 = por %p325, %p326
    %p329 = scmp.ne.s32.totalorder %s314, %s328
    %p330 = scmp.eq.s32.totalorder %s26, 0
    %p331 = por %p329, %p330
    %s332 = ssub.s32 %s20, %s27
    %p333 = scmp.eq.s32.totalorder %s332, 0
    %s335 = sadd.s32 %s334, 1
    %s336 = scalar_select %p333, %s334, %s335
    %p339 = pneg %p333
    %p340 = scmp.eq.s32.totalorder %s20, 1
    %p341 = por %p339, %p340
    %p342 = scmp.ne.s32.totalorder %s334, %s337
    %p343 = scmp.eq.s32.totalorder %s20, 0
    %p344 = por %p342, %p343
    %p345 = scmp.ne.s32.totalorder %s334, %s337
    %p346 = scmp.eq.s32.totalorder %s25, 1
    %p347 = por %p345, %p346
    %p348 = scmp.ne.s32.totalorder %s337, %s338
    %p349 = scmp.eq.s32.totalorder %s25, 0
    %p350 = por %p348, %p349
    %p351 = scmp.ne.s32.totalorder %s337, %s338
    %p352 = scmp.eq.s32.totalorder %s26, 1
    %p353 = por %p351, %p352
    %p355 = scmp.ne.s32.totalorder %s338, %s354
    %p356 = scmp.eq.s32.totalorder %s26, 0
    %p357 = por %p355, %p356
    %p358 = scmp.le.s32.totalorder 1, %s20
    %p359 = scmp.lt.s32.totalorder %s20, 3
    %p360 = pnand %p358, %p359
    %p361 = pneg %p360
    // Predicated region
    $region9: #{sasrec_forward.3} parent=5 // pred_check
      _
    $region10: #{sasrec_forward.3} parent=5 // pred_check_branch
      %363 = sbr.rel (%p360) target = $region12
    $region11: #{sasrec_forward.3} parent=5 // pred_region
      %s364 = ssub.s32 %s20, 1
      // Predicated region
      $region13: #{sasrec_forward.3} parent=11 // pred_check
        %p365 = pneg %p93
      $region14: #{sasrec_forward.3} parent=11 // pred_check_branch
        %367 = sbr.rel (%p365) target = $region16
      $region15: #{sasrec_forward.3} parent=11 // pred_region
        _
      $region16: #{sasrec_forward.3} parent=11 // pred_fallthru
        _
      // Predicated region
      $region17: #{sasrec_forward.3} parent=11 // pred_check
        %p368 = pneg %p114
      $region18: #{sasrec_forward.3} parent=11 // pred_check_branch
        %370 = sbr.rel (%p368) target = $region20
      $region19: #{sasrec_forward.3} parent=11 // pred_region
        _
      $region20: #{sasrec_forward.3} parent=11 // pred_fallthru
        _
      // Predicated region
      $region21: #{sasrec_forward.3} parent=11 // pred_check
        %p371 = pneg %p135
      $region22: #{sasrec_forward.3} parent=11 // pred_check_branch
        %373 = sbr.rel (%p371) target = $region24
      $region23: #{sasrec_forward.3} parent=11 // pred_region
        _
      $region24: #{sasrec_forward.3} parent=11 // pred_fallthru
        _
      // Predicated region
      $region25: #{sasrec_forward.3} parent=11 // pred_check
        %p374 = pneg %p156
      $region26: #{sasrec_forward.3} parent=11 // pred_check_branch
        %376 = sbr.rel (%p374) target = $region28
      $region27: #{sasrec_forward.3} parent=11 // pred_region
        _
      $region28: #{sasrec_forward.3} parent=11 // pred_fallthru
        _
      // Predicated region
      $region29: #{sasrec_forward.3} parent=11 // pred_check
        %p377 = pneg %p177
      $region30: #{sasrec_forward.3} parent=11 // pred_check_branch
        %379 = sbr.rel (%p377) target = $region32
      $region31: #{sasrec_forward.3} parent=11 // pred_region
        _
      $region32: #{sasrec_forward.3} parent=11 // pred_fallthru
        _
      // Predicated region
      $region33: #{sasrec_forward.3} parent=11 // pred_check
        %p380 = pneg %p198
      $region34: #{sasrec_forward.3} parent=11 // pred_check_branch
        %382 = sbr.rel (%p380) target = $region36
      $region35: #{sasrec_forward.3} parent=11 // pred_region
        _
      $region36: #{sasrec_forward.3} parent=11 // pred_fallthru
        _
      // Predicated region
      $region37: #{sasrec_forward.3} parent=11 // pred_check
        %p383 = pneg %p219
      $region38: #{sasrec_forward.3} parent=11 // pred_check_branch
        %385 = sbr.rel (%p383) target = $region40
      $region39: #{sasrec_forward.3} parent=11 // pred_region
        _
      $region40: #{sasrec_forward.3} parent=11 // pred_fallthru
        _
      // Predicated region
      $region41: #{sasrec_forward.3} parent=11 // pred_check
        %p386 = pneg %p240
      $region42: #{sasrec_forward.3} parent=11 // pred_check_branch
        %388 = sbr.rel (%p386) target = $region44
      $region43: #{sasrec_forward.3} parent=11 // pred_region
        _
      $region44: #{sasrec_forward.3} parent=11 // pred_fallthru
        _
      // Predicated region
      $region45: #{sasrec_forward.3} parent=11 // pred_check
        %p389 = pneg %p261
      $region46: #{sasrec_forward.3} parent=11 // pred_check_branch
        %391 = sbr.rel (%p389) target = $region48
      $region47: #{sasrec_forward.3} parent=11 // pred_region
        _
      $region48: #{sasrec_forward.3} parent=11 // pred_fallthru
        _
      // Predicated region
      $region49: #{sasrec_forward.3} parent=11 // pred_check
        %p392 = pneg %p282
      $region50: #{sasrec_forward.3} parent=11 // pred_check_branch
        %394 = sbr.rel (%p392) target = $region52
      $region51: #{sasrec_forward.3} parent=11 // pred_region
        _
      $region52: #{sasrec_forward.3} parent=11 // pred_fallthru
        _
      // Predicated region
      $region53: #{sasrec_forward.3} parent=11 // pred_check
        %p395 = pneg %p303
      $region54: #{sasrec_forward.3} parent=11 // pred_check_branch
        %397 = sbr.rel (%p395) target = $region56
      $region55: #{sasrec_forward.3} parent=11 // pred_region
        _
      $region56: #{sasrec_forward.3} parent=11 // pred_fallthru
        _
      // Predicated region
      $region57: #{sasrec_forward.3} parent=11 // pred_check
        %p398 = pneg %p324
      $region58: #{sasrec_forward.3} parent=11 // pred_check_branch
        %400 = sbr.rel (%p398) target = $region60
      $region59: #{sasrec_forward.3} parent=11 // pred_region
        _
      $region60: #{sasrec_forward.3} parent=11 // pred_fallthru
        _
    $region12: #{sasrec_forward.3} parent=5 // pred_fallthru
      _
    %p401 = scmp.lt.s32.totalorder %s20, 2
    // Predicated region
    $region61: #{sasrec_forward.3} parent=5 // pred_check
      %p402 = pneg %p401
    $region62: #{sasrec_forward.3} parent=5 // pred_check_branch
      %404 = sbr.rel (%p402) target = $region64
    $region63: #{sasrec_forward.3} parent=5 // pred_region
      // Predicated region
      $region65: #{sasrec_forward.3} parent=63 // pred_check
        %p405 = pneg %p40
      $region66: #{sasrec_forward.3} parent=63 // pred_check_branch
        %407 = sbr.rel (%p405) target = $region68
      $region67: #{sasrec_forward.3} parent=63 // pred_region
        %s408 = smul.u32 8, %s20
        %p409 = scmp.lt.s32.totalorder %s408, 15
        %s410 = scalar_select %p409, %s408, 15
        %s411 = smul.addr %s410, 8
        %s412 = scalar_lea.vmem %s0, %s411
        %s413 = smul.u32 8, %s20
      $region68: #{sasrec_forward.3} parent=63 // pred_fallthru
        _
      // Predicated region
      $region69: #{sasrec_forward.3} parent=63 // pred_check
        %p414 = pneg %p66
      $region70: #{sasrec_forward.3} parent=63 // pred_check_branch
        %416 = sbr.rel (%p414) target = $region72
      $region71: #{sasrec_forward.3} parent=63 // pred_region
        %s417 = smul.u32 8, %s20
        %p418 = scmp.lt.s32.totalorder %s417, 15
        %s419 = scalar_select %p418, %s417, 15
        %s420 = scalar_lea.vmem %s1, %s419
        %s421 = smul.u32 8, %s20
      $region72: #{sasrec_forward.3} parent=63 // pred_fallthru
        _
    $region64: #{sasrec_forward.3} parent=5 // pred_fallthru
      _
    %p422 = scmp.le.s32.totalorder 1, %s20
    %p423 = scmp.lt.s32.totalorder %s20, 3
    %p424 = pnand %p422, %p423
    %p425 = pneg %p424
    // Predicated region
    $region73: #{sasrec_forward.3} parent=5 // pred_check
      _
    $region74: #{sasrec_forward.3} parent=5 // pred_check_branch
      %427 = sbr.rel (%p424) target = $region76
    $region75: #{sasrec_forward.3} parent=5 // pred_region
      %s428 = ssub.s32 %s20, 1
      %s429 = smul.u32 8, %s25
      %p430 = scmp.lt.s32.totalorder %s429, 15
      %s431 = scalar_select %p430, %s429, 15
      %s432 = smul.addr %s431, 8
      %s433 = scalar_lea.vmem %s0, %s432
      %p434 = pneg %p46
      %p435 = pneg %p43
      %s436 = smul.u32 8, %s25
      %p437 = scmp.lt.s32.totalorder %s436, 15
      %s438 = scalar_select %p437, %s436, 15
      %s439 = scalar_lea.vmem %s1, %s438
      %p440 = pneg %p72
      %p441 = pneg %p69
      %p442 = pneg %p93
      %p443 = pneg %p90
      %p444 = pneg %p114
      %p445 = pneg %p111
      %p446 = pneg %p135
      %p447 = pneg %p132
      %p448 = pneg %p156
      %p449 = pneg %p153
      %p450 = pneg %p177
      %p451 = pneg %p174
      %p452 = pneg %p198
      %p453 = pneg %p195
      %p454 = pneg %p219
      %p455 = pneg %p216
      %p456 = pneg %p240
      %p457 = pneg %p237
      %p458 = pneg %p261
      %p459 = pneg %p258
      %p460 = pneg %p282
      %p461 = pneg %p279
      %p462 = pneg %p303
      %p463 = pneg %p300
      %p464 = pneg %p324
      %p465 = pneg %p321
      %p466 = pneg %p350
      %p467 = pneg %p347
      %s468 = smul.u32 8, %s25
      %p469 = scmp.lt.s32.totalorder %s468, 15
      %s470 = scalar_select %p469, %s468, 15
      %s471 = smul.addr %s470, 8
      %s472 = scalar_lea.vmem %s14, %s471
      %s473 = smul.u32 8, %s25
      %p474 = scmp.lt.s32.totalorder %s473, 15
      %s475 = scalar_select %p474, %s473, 15
      %s476 = smul.addr %s475, 8
      %s477 = scalar_lea.vmem %s0, %s476
      %s478 = smul.u32 8, %s25
      %s479 = smul.u32 8, %s25
      %p480 = scmp.lt.s32.totalorder %s479, 15
      %s481 = scalar_select %p480, %s479, 15
      %s482 = scalar_lea.vmem %s1, %s481
      %s483 = smul.u32 8, %s25
      %s484 = smul.u32 8, %s25
      %p485 = scmp.lt.s32.totalorder %s484, 15
      %s486 = scalar_select %p485, %s484, 15
      %s487 = smul.addr %s486, 8
      %s488 = scalar_lea.vmem %s14, %s487
      %s489 = smul.u32 8, %s25
      %v491 = vld [vmem:[%s477] sm:$0xff]
      %v492 = vld [vmem:[%s477 + $0x8] sm:$0xff]
      %v493 = vld [vmem:[%s477 + $0x10] sm:$0xff]
      %v494 = vld [vmem:[%s477 + $0x18] sm:$0xff]
      %v495 = vld [vmem:[%s477 + $0x20] sm:$0xff]
      %v496 = vld [vmem:[%s477 + $0x28] sm:$0xff]
      %v497 = vld [vmem:[%s477 + $0x30] sm:$0xff]
      %v498 = vld [vmem:[%s477 + $0x38] sm:$0xff]
      %v499 = vld [vmem:[%s482] sm:$0x1]
      %v500 = vld [vmem:[%s482 + $0x1] sm:$0x1]
      %v501 = vld [vmem:[%s482 + $0x2] sm:$0x1]
      %v502 = vld [vmem:[%s482 + $0x3] sm:$0x1]
      %v503 = vld [vmem:[%s482 + $0x4] sm:$0x1]
      %v504 = vld [vmem:[%s482 + $0x5] sm:$0x1]
      %v505 = vld [vmem:[%s482 + $0x6] sm:$0x1]
      %v506 = vld [vmem:[%s482 + $0x7] sm:$0x1]
      %v507 = vpack.c.bf16 %v492, %v491
      %v508 = vpack.c.bf16 %v494, %v493
      %v509 = vpack.c.bf16 %v496, %v495
      %v510 = vpack.c.bf16 %v498, %v497
      %v511 = vld [vmem:[%s2] sm:$0xf]
      %v512 = vld [vmem:[%s2 + $0x4] sm:$0xf]
      %v513 = vld [vmem:[%s2 + $0x8] sm:$0xf]
      %v514 = vld [vmem:[%s2 + $0xc] sm:$0xf]
      %v515 = vld [vmem:[%s3] sm:$0x1]
      %v517 = vlaneseq
      %v518 = vshrl.u32 %v517, 7
      %v519 = vsub.s32 0, %v518
      %v520 = vrot.slane %v515, %v519
      %v526 = vunpack.c.l.b16 %v511
      %v527 = vunpack.c.l.b16 %v512
      %v528 = vunpack.c.l.b16 %v513
      %v529 = vunpack.c.l.b16 %v514
      %v530 = vpack.c.b16 %v527, %v526
      %v531 = vpack.c.b16 %v529, %v528
      %vm534 = vcmask 261120
      %v536 = vsel %vm534, %v507, 0
      %v539 = vsel %vm534, %v508, 0
      %v542 = vsel %vm534, %v509, 0
      %v545 = vsel %vm534, %v510, 0
      %547 = vmatprep.subr.bf16.mxu0 0
      %548 = vmatpush1.bf16.msra.mxu0 %v530
      %549 = vmatprep.subr.bf16.mxu0 0
      %550 = vmatpush1.bf16.msra.mxu0 %v531
      %551 = vmatprep.subr.bf16.mxu0 0
      %552 = vmatpush1.bf16.msra.mxu0 0
      %553 = vmatprep.subr.bf16.mxu0 0
      %554 = vmatpush1.bf16.msra.mxu0 0
      %555 = vmatprep.subr.bf16.mxu0 0
      %556 = vmatpush1.bf16.msra.mxu0 0
      %557 = vmatprep.subr.bf16.mxu0 0
      %558 = vmatpush1.bf16.msra.mxu0 0
      %559 = vmatprep.subr.bf16.mxu0 0
      %560 = vmatpush1.bf16.msra.mxu0 0
      %561 = vmatprep.subr.bf16.mxu0 0
      %562 = vmatpush1.bf16.msra.mxu0 0
      %563 = vmatprep.subr.bf16.mxu0 0
      %564 = vmatpush1.bf16.msra.mxu0 0
      %565 = vmatprep.subr.bf16.mxu0 0
      %566 = vmatpush1.bf16.msra.mxu0 0
      %567 = vmatprep.subr.bf16.mxu0 0
      %568 = vmatpush1.bf16.msra.mxu0 0
      %569 = vmatprep.subr.bf16.mxu0 0
      %570 = vmatpush1.bf16.msra.mxu0 0
      %571 = vmatprep.subr.bf16.mxu0 0
      %572 = vmatpush1.bf16.msra.mxu0 0
      %573 = vmatprep.subr.bf16.mxu0 0
      %574 = vmatpush1.bf16.msra.mxu0 0
      %575 = vmatprep.subr.bf16.mxu0 0
      %576 = vmatpush1.bf16.msra.mxu0 0
      %577 = vmatprep.subr.bf16.mxu0 0
      %578 = vmatpush1.bf16.msra.mxu0 0
      %579 = vmatprep.mubr.bf16.mxu0 0
      %580 = vmatmul.mubr.bf16.gmra.mrb[0].mxu0 %v536
      %v581 = vpop.f32.mrb[0].mxu0
      %v582 = vadd.f32 %v520, %v581
      %v583 = vpop.f32.mrb[0].mxu0
      %v584 = vpop.f32.mrb[0].mxu0
      %v585 = vadd.f32 %v520, %v584
      %v586 = vpop.f32.mrb[0].mxu0
      %587 = vmatprep.mubr.bf16.mxu0 0
      %588 = vmatmul.mubr.bf16.gmra.mrb[0].mxu0 %v539
      %v589 = vpop.f32.mrb[0].mxu0
      %v590 = vadd.f32 %v520, %v589
      %v591 = vpop.f32.mrb[0].mxu0
      %v592 = vpop.f32.mrb[0].mxu0
      %v593 = vadd.f32 %v520, %v592
      %v594 = vpop.f32.mrb[0].mxu0
      %595 = vmatprep.mubr.bf16.mxu0 0
      %596 = vmatmul.mubr.bf16.gmra.mrb[0].mxu0 %v542
      %v597 = vpop.f32.mrb[0].mxu0
      %v598 = vadd.f32 %v520, %v597
      %v599 = vpop.f32.mrb[0].mxu0
      %v600 = vpop.f32.mrb[0].mxu0
      %v601 = vadd.f32 %v520, %v600
      %v602 = vpop.f32.mrb[0].mxu0
      %603 = vmatprep.mubr.bf16.mxu0 0
      %604 = vmatmul.mubr.bf16.gmra.mrb[0].mxu0 %v545
      %v605 = vpop.f32.mrb[0].mxu0
      %v606 = vadd.f32 %v520, %v605
      %v607 = vpop.f32.mrb[0].mxu0
      %v608 = vpop.f32.mrb[0].mxu0
      %v609 = vadd.f32 %v520, %v608
      %v610 = vpop.f32.mrb[0].mxu0
      %611 = vdwg.mxu0
      %v612 = vmul.f32 %v582, 0.25
      %v613 = vmul.f32 %v585, 0.25
      %v614 = vmul.f32 %v590, 0.25
      %v615 = vmul.f32 %v593, 0.25
      %v616 = vmul.f32 %v598, 0.25
      %v617 = vmul.f32 %v601, 0.25
      %v618 = vmul.f32 %v606, 0.25
      %v619 = vmul.f32 %v609, 0.25
      %v620 = vpack.c.bf16 %v612, %v612
      %v621 = vpack.c.bf16 %v613, %v613
      %v622 = vpack.c.bf16 %v614, %v614
      %v623 = vpack.c.bf16 %v615, %v615
      %v624 = vpack.c.bf16 %v616, %v616
      %v625 = vpack.c.bf16 %v617, %v617
      %v626 = vpack.c.bf16 %v618, %v618
      %v627 = vpack.c.bf16 %v619, %v619
      %v628 = vpack.c.bf16 %v582, %v582
      %v629 = vpack.c.bf16 %v585, %v585
      %v630 = vpack.c.bf16 %v590, %v590
      %v631 = vpack.c.bf16 %v593, %v593
      %v632 = vpack.c.bf16 %v598, %v598
      %v633 = vpack.c.bf16 %v601, %v601
      %v634 = vpack.c.bf16 %v606, %v606
      %v635 = vpack.c.bf16 %v609, %v609
      %v644 = vlaneseq
      %v645 = vshrl.u32 %v644, 7
      %v646 = vsub.s32 0, %v645
      %v647 = vrot.slane %v499, %v646
      %v648 = vlaneseq
      %v649 = vshrl.u32 %v648, 7
      %v650 = vsub.s32 0, %v649
      %v651 = vrot.slane %v500, %v650
      %v652 = vlaneseq
      %v653 = vshrl.u32 %v652, 7
      %v654 = vsub.s32 0, %v653
      %v655 = vrot.slane %v501, %v654
      %v656 = vlaneseq
      %v657 = vshrl.u32 %v656, 7
      %v658 = vsub.s32 0, %v657
      %v659 = vrot.slane %v502, %v658
      %v660 = vlaneseq
      %v661 = vshrl.u32 %v660, 7
      %v662 = vsub.s32 0, %v661
      %v663 = vrot.slane %v503, %v662
      %v664 = vlaneseq
      %v665 = vshrl.u32 %v664, 7
      %v666 = vsub.s32 0, %v665
      %v667 = vrot.slane %v504, %v666
      %v668 = vlaneseq
      %v669 = vshrl.u32 %v668, 7
      %v670 = vsub.s32 0, %v669
      %v671 = vrot.slane %v505, %v670
      %v672 = vlaneseq
      %v673 = vshrl.u32 %v672, 7
      %v674 = vsub.s32 0, %v673
      %v675 = vrot.slane %v506, %v674
      %685 = vrot.lane.b32.xlu0 %v628, 96
      %v686 = vpop.permute.xlu0 %685
      %vm687 = vcmask 130048
      %v689 = vsel %vm687, %v620, 0
      %v692 = vsel %vm687, %v686, 0
      %694 = vmatprep.subr.bf16.mxu0 0
      %695 = vmatpush1.bf16.xpose.msra.mxu0 %v692
      %696 = vmatprep.subr.bf16.mxu0 0
      %697 = vmatpush1.bf16.xpose.msra.mxu0 0
      %698 = vmatprep.subr.bf16.mxu0 0
      %699 = vmatpush1.bf16.xpose.msra.mxu0 0
      %700 = vmatprep.subr.bf16.mxu0 0
      %701 = vmatpush1.bf16.xpose.msra.mxu0 0
      %702 = vmatprep.subr.bf16.mxu0 0
      %703 = vmatpush1.bf16.xpose.msra.mxu0 0
      %704 = vmatprep.subr.bf16.mxu0 0
      %705 = vmatpush1.bf16.xpose.msra.mxu0 0
      %706 = vmatprep.subr.bf16.mxu0 0
      %707 = vmatpush1.bf16.xpose.msra.mxu0 0
      %708 = vmatprep.subr.bf16.mxu0 0
      %709 = vmatpush1.bf16.xpose.msra.mxu0 0
      %710 = vmatprep.subr.bf16.mxu0 0
      %711 = vmatpush1.bf16.xpose.msra.mxu0 0
      %712 = vmatprep.subr.bf16.mxu0 0
      %713 = vmatpush1.bf16.xpose.msra.mxu0 0
      %714 = vmatprep.subr.bf16.mxu0 0
      %715 = vmatpush1.bf16.xpose.msra.mxu0 0
      %716 = vmatprep.subr.bf16.mxu0 0
      %717 = vmatpush1.bf16.xpose.msra.mxu0 0
      %718 = vmatprep.subr.bf16.mxu0 0
      %719 = vmatpush1.bf16.xpose.msra.mxu0 0
      %720 = vmatprep.subr.bf16.mxu0 0
      %721 = vmatpush1.bf16.xpose.msra.mxu0 0
      %722 = vmatprep.subr.bf16.mxu0 0
      %723 = vmatpush1.bf16.xpose.msra.mxu0 0
      %724 = vmatprep.subr.bf16.mxu0 0
      %725 = vmatpush1.bf16.xpose.msra.mxu0 0
      %726 = vmatprep.mubr.bf16.mxu0 0
      %727 = vmatmul.mubr.bf16.gmra.mrb[0].mxu0 %v689
      %v728 = vpop.f32.mrb[0].mxu0
      %v729 = vadd.f32 %v647, %v728
      %v730 = vpop.f32.mrb[0].mxu0
      %v731 = vpop.f32.mrb[0].mxu0
      %v732 = vpop.f32.mrb[0].mxu0
      %733 = vdwg.mxu0
      %735 = vrot.lane.b32.xlu0 %v629, 96
      %v736 = vpop.permute.xlu0 %735
      %v738 = vsel %vm687, %v621, 0
      %v741 = vsel %vm687, %v736, 0
      %743 = vmatprep.subr.bf16.mxu0 0
      %744 = vmatpush1.bf16.xpose.msra.mxu0 %v741
      %745 = vmatprep.subr.bf16.mxu0 0
      %746 = vmatpush1.bf16.xpose.msra.mxu0 0
      %747 = vmatprep.subr.bf16.mxu0 0
      %748 = vmatpush1.bf16.xpose.msra.mxu0 0
      %749 = vmatprep.subr.bf16.mxu0 0
      %750 = vmatpush1.bf16.xpose.msra.mxu0 0
      %751 = vmatprep.subr.bf16.mxu0 0
      %752 = vmatpush1.bf16.xpose.msra.mxu0 0
      %753 = vmatprep.subr.bf16.mxu0 0
      %754 = vmatpush1.bf16.xpose.msra.mxu0 0
      %755 = vmatprep.subr.bf16.mxu0 0
      %756 = vmatpush1.bf16.xpose.msra.mxu0 0
      %757 = vmatprep.subr.bf16.mxu0 0
      %758 = vmatpush1.bf16.xpose.msra.mxu0 0
      %759 = vmatprep.subr.bf16.mxu0 0
      %760 = vmatpush1.bf16.xpose.msra.mxu0 0
      %761 = vmatprep.subr.bf16.mxu0 0
      %762 = vmatpush1.bf16.xpose.msra.mxu0 0
      %763 = vmatprep.subr.bf16.mxu0 0
      %764 = vmatpush1.bf16.xpose.msra.mxu0 0
      %765 = vmatprep.subr.bf16.mxu0 0
      %766 = vmatpush1.bf16.xpose.msra.mxu0 0
      %767 = vmatprep.subr.bf16.mxu0 0
      %768 = vmatpush1.bf16.xpose.msra.mxu0 0
      %769 = vmatprep.subr.bf16.mxu0 0
      %770 = vmatpush1.bf16.xpose.msra.mxu0 0
      %771 = vmatprep.subr.bf16.mxu0 0
      %772 = vmatpush1.bf16.xpose.msra.mxu0 0
      %773 = vmatprep.subr.bf16.mxu0 0
      %774 = vmatpush1.bf16.xpose.msra.mxu0 0
      %775 = vmatprep.mubr.bf16.mxu0 0
      %776 = vmatmul.mubr.bf16.gmra.mrb[0].mxu0 %v738
      %v777 = vpop.f32.mrb[0].mxu0
      %v778 = vadd.f32 %v651, %v777
      %v779 = vpop.f32.mrb[0].mxu0
      %v780 = vpop.f32.mrb[0].mxu0
      %v781 = vpop.f32.mrb[0].mxu0
      %782 = vdwg.mxu0
      %784 = vrot.lane.b32.xlu0 %v630, 96
      %v785 = vpop.permute.xlu0 %784
      %v787 = vsel %vm687, %v622, 0
      %v790 = vsel %vm687, %v785, 0
      %792 = vmatprep.subr.bf16.mxu0 0
      %793 = vmatpush1.bf16.xpose.msra.mxu0 %v790
      %794 = vmatprep.subr.bf16.mxu0 0
      %795 = vmatpush1.bf16.xpose.msra.mxu0 0
      %796 = vmatprep.subr.bf16.mxu0 0
      %797 = vmatpush1.bf16.xpose.msra.mxu0 0
      %798 = vmatprep.subr.bf16.mxu0 0
      %799 = vmatpush1.bf16.xpose.msra.mxu0 0
      %800 = vmatprep.subr.bf16.mxu0 0
      %801 = vmatpush1.bf16.xpose.msra.mxu0 0
      %802 = vmatprep.subr.bf16.mxu0 0
      %803 = vmatpush1.bf16.xpose.msra.mxu0 0
      %804 = vmatprep.subr.bf16.mxu0 0
      %805 = vmatpush1.bf16.xpose.msra.mxu0 0
      %806 = vmatprep.subr.bf16.mxu0 0
      %807 = vmatpush1.bf16.xpose.msra.mxu0 0
      %808 = vmatprep.subr.bf16.mxu0 0
      %809 = vmatpush1.bf16.xpose.msra.mxu0 0
      %810 = vmatprep.subr.bf16.mxu0 0
      %811 = vmatpush1.bf16.xpose.msra.mxu0 0
      %812 = vmatprep.subr.bf16.mxu0 0
      %813 = vmatpush1.bf16.xpose.msra.mxu0 0
      %814 = vmatprep.subr.bf16.mxu0 0
      %815 = vmatpush1.bf16.xpose.msra.mxu0 0
      %816 = vmatprep.subr.bf16.mxu0 0
      %817 = vmatpush1.bf16.xpose.msra.mxu0 0
      %818 = vmatprep.subr.bf16.mxu0 0
      %819 = vmatpush1.bf16.xpose.msra.mxu0 0
      %820 = vmatprep.subr.bf16.mxu0 0
      %821 = vmatpush1.bf16.xpose.msra.mxu0 0
      %822 = vmatprep.subr.bf16.mxu0 0
      %823 = vmatpush1.bf16.xpose.msra.mxu0 0
      %824 = vmatprep.mubr.bf16.mxu0 0
      %825 = vmatmul.mubr.bf16.gmra.mrb[0].mxu0 %v787
      %v826 = vpop.f32.mrb[0].mxu0
      %v827 = vadd.f32 %v655, %v826
      %v828 = vpop.f32.mrb[0].mxu0
      %v829 = vpop.f32.mrb[0].mxu0
      %v830 = vpop.f32.mrb[0].mxu0
      %831 = vdwg.mxu0
      %833 = vrot.lane.b32.xlu0 %v631, 96
      %v834 = vpop.permute.xlu0 %833
      %v836 = vsel %vm687, %v623, 0
      %v839 = vsel %vm687, %v834, 0
      %841 = vmatprep.subr.bf16.mxu0 0
      %842 = vmatpush1.bf16.xpose.msra.mxu0 %v839
      %843 = vmatprep.subr.bf16.mxu0 0
      %844 = vmatpush1.bf16.xpose.msra.mxu0 0
      %845 = vmatprep.subr.bf16.mxu0 0
      %846 = vmatpush1.bf16.xpose.msra.mxu0 0
      %847 = vmatprep.subr.bf16.mxu0 0
      %848 = vmatpush1.bf16.xpose.msra.mxu0 0
      %849 = vmatprep.subr.bf16.mxu0 0
      %850 = vmatpush1.bf16.xpose.msra.mxu0 0
      %851 = vmatprep.subr.bf16.mxu0 0
      %852 = vmatpush1.bf16.xpose.msra.mxu0 0
      %853 = vmatprep.subr.bf16.mxu0 0
      %854 = vmatpush1.bf16.xpose.msra.mxu0 0
      %855 = vmatprep.subr.bf16.mxu0 0
      %856 = vmatpush1.bf16.xpose.msra.mxu0 0
      %857 = vmatprep.subr.bf16.mxu0 0
      %858 = vmatpush1.bf16.xpose.msra.mxu0 0
      %859 = vmatprep.subr.bf16.mxu0 0
      %860 = vmatpush1.bf16.xpose.msra.mxu0 0
      %861 = vmatprep.subr.bf16.mxu0 0
      %862 = vmatpush1.bf16.xpose.msra.mxu0 0
      %863 = vmatprep.subr.bf16.mxu0 0
      %864 = vmatpush1.bf16.xpose.msra.mxu0 0
      %865 = vmatprep.subr.bf16.mxu0 0
      %866 = vmatpush1.bf16.xpose.msra.mxu0 0
      %867 = vmatprep.subr.bf16.mxu0 0
      %868 = vmatpush1.bf16.xpose.msra.mxu0 0
      %869 = vmatprep.subr.bf16.mxu0 0
      %870 = vmatpush1.bf16.xpose.msra.mxu0 0
      %871 = vmatprep.subr.bf16.mxu0 0
      %872 = vmatpush1.bf16.xpose.msra.mxu0 0
      %873 = vmatprep.mubr.bf16.mxu0 0
      %874 = vmatmul.mubr.bf16.gmra.mrb[0].mxu0 %v836
      %v875 = vpop.f32.mrb[0].mxu0
      %v876 = vadd.f32 %v659, %v875
      %v877 = vpop.f32.mrb[0].mxu0
      %v878 = vpop.f32.mrb[0].mxu0
      %v879 = vpop.f32.mrb[0].mxu0
      %880 = vdwg.mxu0
      %882 = vrot.lane.b32.xlu0 %v632, 96
      %v883 = vpop.permute.xlu0 %882
      %v885 = vsel %vm687, %v624, 0
      %v888 = vsel %vm687, %v883, 0
      %890 = vmatprep.subr.bf16.mxu0 0
      %891 = vmatpush1.bf16.xpose.msra.mxu0 %v888
      %892 = vmatprep.subr.bf16.mxu0 0
      %893 = vmatpush1.bf16.xpose.msra.mxu0 0
      %894 = vmatprep.subr.bf16.mxu0 0
      %895 = vmatpush1.bf16.xpose.msra.mxu0 0
      %896 = vmatprep.subr.bf16.mxu0 0
      %897 = vmatpush1.bf16.xpose.msra.mxu0 0
      %898 = vmatprep.subr.bf16.mxu0 0
      %899 = vmatpush1.bf16.xpose.msra.mxu0 0
      %900 = vmatprep.subr.bf16.mxu0 0
      %901 = vmatpush1.bf16.xpose.msra.mxu0 0
      %902 = vmatprep.subr.bf16.mxu0 0
      %903 = vmatpush1.bf16.xpose.msra.mxu0 0
      %904 = vmatprep.subr.bf16.mxu0 0
      %905 = vmatpush1.bf16.xpose.msra.mxu0 0
      %906 = vmatprep.subr.bf16.mxu0 0
      %907 = vmatpush1.bf16.xpose.msra.mxu0 0
      %908 = vmatprep.subr.bf16.mxu0 0
      %909 = vmatpush1.bf16.xpose.msra.mxu0 0
      %910 = vmatprep.subr.bf16.mxu0 0
      %911 = vmatpush1.bf16.xpose.msra.mxu0 0
      %912 = vmatprep.subr.bf16.mxu0 0
      %913 = vmatpush1.bf16.xpose.msra.mxu0 0
      %914 = vmatprep.subr.bf16.mxu0 0
      %915 = vmatpush1.bf16.xpose.msra.mxu0 0
      %916 = vmatprep.subr.bf16.mxu0 0
      %917 = vmatpush1.bf16.xpose.msra.mxu0 0
      %918 = vmatprep.subr.bf16.mxu0 0
      %919 = vmatpush1.bf16.xpose.msra.mxu0 0
      %920 = vmatprep.subr.bf16.mxu0 0
      %921 = vmatpush1.bf16.xpose.msra.mxu0 0
      %922 = vmatprep.mubr.bf16.mxu0 0
      %923 = vmatmul.mubr.bf16.gmra.mrb[0].mxu0 %v885
      %v924 = vpop.f32.mrb[0].mxu0
      %v925 = vadd.f32 %v663, %v924
      %v926 = vpop.f32.mrb[0].mxu0
      %v927 = vpop.f32.mrb[0].mxu0
      %v928 = vpop.f32.mrb[0].mxu0
      %929 = vdwg.mxu0
      %931 = vrot.lane.b32.xlu0 %v633, 96
      %v932 = vpop.permute.xlu0 %931
      %v934 = vsel %vm687, %v625, 0
      %v937 = vsel %vm687, %v932, 0
      %939 = vmatprep.subr.bf16.mxu0 0
      %940 = vmatpush1.bf16.xpose.msra.mxu0 %v937
      %941 = vmatprep.subr.bf16.mxu0 0
      %942 = vmatpush1.bf16.xpose.msra.mxu0 0
      %943 = vmatprep.subr.bf16.mxu0 0
      %944 = vmatpush1.bf16.xpose.msra.mxu0 0
      %945 = vmatprep.subr.bf16.mxu0 0
      %946 = vmatpush1.bf16.xpose.msra.mxu0 0
      %947 = vmatprep.subr.bf16.mxu0 0
      %948 = vmatpush1.bf16.xpose.msra.mxu0 0
      %949 = vmatprep.subr.bf16.mxu0 0
      %950 = vmatpush1.bf16.xpose.msra.mxu0 0
      %951 = vmatprep.subr.bf16.mxu0 0
      %952 = vmatpush1.bf16.xpose.msra.mxu0 0
      %953 = vmatprep.subr.bf16.mxu0 0
      %954 = vmatpush1.bf16.xpose.msra.mxu0 0
      %955 = vmatprep.subr.bf16.mxu0 0
      %956 = vmatpush1.bf16.xpose.msra.mxu0 0
      %957 = vmatprep.subr.bf16.mxu0 0
      %958 = vmatpush1.bf16.xpose.msra.mxu0 0
      %959 = vmatprep.subr.bf16.mxu0 0
      %960 = vmatpush1.bf16.xpose.msra.mxu0 0
      %961 = vmatprep.subr.bf16.mxu0 0
      %962 = vmatpush1.bf16.xpose.msra.mxu0 0
      %963 = vmatprep.subr.bf16.mxu0 0
      %964 = vmatpush1.bf16.xpose.msra.mxu0 0
      %965 = vmatprep.subr.bf16.mxu0 0
      %966 = vmatpush1.bf16.xpose.msra.mxu0 0
      %967 = vmatprep.subr.bf16.mxu0 0
      %968 = vmatpush1.bf16.xpose.msra.mxu0 0
      %969 = vmatprep.subr.bf16.mxu0 0
      %970 = vmatpush1.bf16.xpose.msra.mxu0 0
      %971 = vmatprep.mubr.bf16.mxu0 0
      %972 = vmatmul.mubr.bf16.gmra.mrb[0].mxu0 %v934
      %v973 = vpop.f32.mrb[0].mxu0
      %v974 = vadd.f32 %v667, %v973
      %v975 = vpop.f32.mrb[0].mxu0
      %v976 = vpop.f32.mrb[0].mxu0
      %v977 = vpop.f32.mrb[0].mxu0
      %978 = vdwg.mxu0
      %980 = vrot.lane.b32.xlu0 %v634, 96
      %v981 = vpop.permute.xlu0 %980
      %v983 = vsel %vm687, %v626, 0
      %v986 = vsel %vm687, %v981, 0
      %988 = vmatprep.subr.bf16.mxu0 0
      %989 = vmatpush1.bf16.xpose.msra.mxu0 %v986
      %990 = vmatprep.subr.bf16.mxu0 0
      %991 = vmatpush1.bf16.xpose.msra.mxu0 0
      %992 = vmatprep.subr.bf16.mxu0 0
      %993 = vmatpush1.bf16.xpose.msra.mxu0 0
      %994 = vmatprep.subr.bf16.mxu0 0
      %995 = vmatpush1.bf16.xpose.msra.mxu0 0
      %996 = vmatprep.subr.bf16.mxu0 0
      %997 = vmatpush1.bf16.xpose.msra.mxu0 0
      %998 = vmatprep.subr.bf16.mxu0 0
      %999 = vmatpush1.bf16.xpose.msra.mxu0 0
      %1000 = vmatprep.subr.bf16.mxu0 0
      %1001 = vmatpush1.bf16.xpose.msra.mxu0 0
      %1002 = vmatprep.subr.bf16.mxu0 0
      %1003 = vmatpush1.bf16.xpose.msra.mxu0 0
      %1004 = vmatprep.subr.bf16.mxu0 0
      %1005 = vmatpush1.bf16.xpose.msra.mxu0 0
      %1006 = vmatprep.subr.bf16.mxu0 0
      %1007 = vmatpush1.bf16.xpose.msra.mxu0 0
      %1008 = vmatprep.subr.bf16.mxu0 0
      %1009 = vmatpush1.bf16.xpose.msra.mxu0 0
      %1010 = vmatprep.subr.bf16.mxu0 0
      %1011 = vmatpush1.bf16.xpose.msra.mxu0 0
      %1012 = vmatprep.subr.bf16.mxu0 0
      %1013 = vmatpush1.bf16.xpose.msra.mxu0 0
      %1014 = vmatprep.subr.bf16.mxu0 0
      %1015 = vmatpush1.bf16.xpose.msra.mxu0 0
      %1016 = vmatprep.subr.bf16.mxu0 0
      %1017 = vmatpush1.bf16.xpose.msra.mxu0 0
      %1018 = vmatprep.subr.bf16.mxu0 0
      %1019 = vmatpush1.bf16.xpose.msra.mxu0 0
      %1020 = vmatprep.mubr.bf16.mxu0 0
      %1021 = vmatmul.mubr.bf16.gmra.mrb[0].mxu0 %v983
      %v1022 = vpop.f32.mrb[0].mxu0
      %v1023 = vadd.f32 %v671, %v1022
      %v1024 = vpop.f32.mrb[0].mxu0
      %v1025 = vpop.f32.mrb[0].mxu0
      %v1026 = vpop.f32.mrb[0].mxu0
      %1027 = vdwg.mxu0
      %1029 = vrot.lane.b32.xlu0 %v635, 96
      %v1030 = vpop.permute.xlu0 %1029
      %v1032 = vsel %vm687, %v627, 0
      %v1035 = vsel %vm687, %v1030, 0
      %1037 = vmatprep.subr.bf16.mxu0 0
      %1038 = vmatpush1.bf16.xpose.msra.mxu0 %v1035
      %1039 = vmatprep.subr.bf16.mxu0 0
      %1040 = vmatpush1.bf16.xpose.msra.mxu0 0
      %1041 = vmatprep.subr.bf16.mxu0 0
      %1042 = vmatpush1.bf16.xpose.msra.mxu0 0
      %1043 = vmatprep.subr.bf16.mxu0 0
      %1044 = vmatpush1.bf16.xpose.msra.mxu0 0
      %1045 = vmatprep.subr.bf16.mxu0 0
      %1046 = vmatpush1.bf16.xpose.msra.mxu0 0
      %1047 = vmatprep.subr.bf16.mxu0 0
      %1048 = vmatpush1.bf16.xpose.msra.mxu0 0
      %1049 = vmatprep.subr.bf16.mxu0 0
      %1050 = vmatpush1.bf16.xpose.msra.mxu0 0
      %1051 = vmatprep.subr.bf16.mxu0 0
      %1052 = vmatpush1.bf16.xpose.msra.mxu0 0
      %1053 = vmatprep.subr.bf16.mxu0 0
      %1054 = vmatpush1.bf16.xpose.msra.mxu0 0
      %1055 = vmatprep.subr.bf16.mxu0 0
      %1056 = vmatpush1.bf16.xpose.msra.mxu0 0
      %1057 = vmatprep.subr.bf16.mxu0 0
      %1058 = vmatpush1.bf16.xpose.msra.mxu0 0
      %1059 = vmatprep.subr.bf16.mxu0 0
      %1060 = vmatpush1.bf16.xpose.msra.mxu0 0
      %1061 = vmatprep.subr.bf16.mxu0 0
      %1062 = vmatpush1.bf16.xpose.msra.mxu0 0
      %1063 = vmatprep.subr.bf16.mxu0 0
      %1064 = vmatpush1.bf16.xpose.msra.mxu0 0
      %1065 = vmatprep.subr.bf16.mxu0 0
      %1066 = vmatpush1.bf16.xpose.msra.mxu0 0
      %1067 = vmatprep.subr.bf16.mxu0 0
      %1068 = vmatpush1.bf16.xpose.msra.mxu0 0
      %1069 = vmatprep.mubr.bf16.mxu0 0
      %1070 = vmatmul.mubr.bf16.gmra.mrb[0].mxu0 %v1032
      %v1071 = vpop.f32.mrb[0].mxu0
      %v1072 = vadd.f32 %v675, %v1071
      %v1073 = vpop.f32.mrb[0].mxu0
      %v1074 = vpop.f32.mrb[0].mxu0
      %v1075 = vpop.f32.mrb[0].mxu0
      %1076 = vdwg.mxu0
      %vm1077 = vcmask 64512
      %v1078 = vsel %vm1077, %v729, -inf
      %1079 = vmax.xlane.f32.xlu0 %v1078
      %v1080 = vpop.xlane.xlu0 %1079
      %v1081 = vsel %vm1077, %v778, -inf
      %1082 = vmax.xlane.f32.xlu0 %v1081
      %v1083 = vpop.xlane.xlu0 %1082
      %v1084 = vsel %vm1077, %v827, -inf
      %1085 = vmax.xlane.f32.xlu0 %v1084
      %v1086 = vpop.xlane.xlu0 %1085
      %v1087 = vsel %vm1077, %v876, -inf
      %1088 = vmax.xlane.f32.xlu0 %v1087
      %v1089 = vpop.xlane.xlu0 %1088
      %v1090 = vsel %vm1077, %v925, -inf
      %1091 = vmax.xlane.f32.xlu0 %v1090
      %v1092 = vpop.xlane.xlu0 %1091
      %v1093 = vsel %vm1077, %v974, -inf
      %1094 = vmax.xlane.f32.xlu0 %v1093
      %v1095 = vpop.xlane.xlu0 %1094
      %v1096 = vsel %vm1077, %v1023, -inf
      %1097 = vmax.xlane.f32.xlu0 %v1096
      %v1098 = vpop.xlane.xlu0 %1097
      %v1099 = vsel %vm1077, %v1072, -inf
      %1100 = vmax.xlane.f32.xlu0 %v1099
      %v1101 = vpop.xlane.xlu0 %1100
      %v1102 = vsub.f32 %v729, %v1080
      %v1103 = vsub.f32 %v778, %v1083
      %v1104 = vsub.f32 %v827, %v1086
      %v1105 = vsub.f32 %v876, %v1089
      %v1106 = vsub.f32 %v925, %v1092
      %v1107 = vsub.f32 %v974, %v1095
      %v1108 = vsub.f32 %v1023, %v1098
      %v1109 = vsub.f32 %v1072, %v1101
      %v1110 = vmul.f32 %v1102, 1.442695
      %v1111 = vpow.pop %v1110
      %v1112 = vmul.f32 %v1103, 1.442695
      %v1113 = vpow.pop %v1112
      %v1114 = vmul.f32 %v1104, 1.442695
      %v1115 = vpow.pop %v1114
      %v1116 = vmul.f32 %v1105, 1.442695
      %v1117 = vpow.pop %v1116
      %v1118 = vmul.f32 %v1106, 1.442695
      %v1119 = vpow.pop %v1118
      %v1120 = vmul.f32 %v1107, 1.442695
      %v1121 = vpow.pop %v1120
      %v1122 = vmul.f32 %v1108, 1.442695
      %v1123 = vpow.pop %v1122
      %v1124 = vmul.f32 %v1109, 1.442695
      %v1125 = vpow.pop %v1124
      %v1126 = vsel %vm1077, %v1111, 0.0
      %1127 = vadd.xlane.f32.xlu0 %v1126
      %v1128 = vpop.xlane.xlu0 %1127
      %v1129 = vsel %vm1077, %v1113, 0.0
      %1130 = vadd.xlane.f32.xlu0 %v1129
      %v1131 = vpop.xlane.xlu0 %1130
      %v1132 = vsel %vm1077, %v1115, 0.0
      %1133 = vadd.xlane.f32.xlu0 %v1132
      %v1134 = vpop.xlane.xlu0 %1133
      %v1135 = vsel %vm1077, %v1117, 0.0
      %1136 = vadd.xlane.f32.xlu0 %v1135
      %v1137 = vpop.xlane.xlu0 %1136
      %v1138 = vsel %vm1077, %v1119, 0.0
      %1139 = vadd.xlane.f32.xlu0 %v1138
      %v1140 = vpop.xlane.xlu0 %1139
      %v1141 = vsel %vm1077, %v1121, 0.0
      %1142 = vadd.xlane.f32.xlu0 %v1141
      %v1143 = vpop.xlane.xlu0 %1142
      %v1144 = vsel %vm1077, %v1123, 0.0
      %1145 = vadd.xlane.f32.xlu0 %v1144
      %v1146 = vpop.xlane.xlu0 %1145
      %v1147 = vsel %vm1077, %v1125, 0.0
      %1148 = vadd.xlane.f32.xlu0 %v1147
      %v1149 = vpop.xlane.xlu0 %1148
      %v1150 = vrcp.pop %v1128
      %v1151 = vrcp.pop %v1131
      %v1152 = vrcp.pop %v1134
      %v1153 = vrcp.pop %v1137
      %v1154 = vrcp.pop %v1140
      %v1155 = vrcp.pop %v1143
      %v1156 = vrcp.pop %v1146
      %v1157 = vrcp.pop %v1149
      %v1158 = vmul.f32 %v1111, %v1150
      %v1159 = vmul.f32 %v1113, %v1151
      %v1160 = vmul.f32 %v1115, %v1152
      %v1161 = vmul.f32 %v1117, %v1153
      %v1162 = vmul.f32 %v1119, %v1154
      %v1163 = vmul.f32 %v1121, %v1155
      %v1164 = vmul.f32 %v1123, %v1156
      %v1165 = vmul.f32 %v1125, %v1157
      %v1166 = vpack.c.bf16 %v1158, %v1158
      %v1167 = vpack.c.bf16 %v1159, %v1159
      %v1168 = vpack.c.bf16 %v1160, %v1160
      %v1169 = vpack.c.bf16 %v1161, %v1161
      %v1170 = vpack.c.bf16 %v1162, %v1162
      %v1171 = vpack.c.bf16 %v1163, %v1163
      %v1172 = vpack.c.bf16 %v1164, %v1164
      %v1173 = vpack.c.bf16 %v1165, %v1165
      %1174 = vrot.lane.b32.xlu0 %v628, 64
      %v1175 = vpop.permute.xlu0 %1174
      %v1177 = vsel %vm1077, %v1166, 0
      %vm1179 = vcmask 1043456
      %v1181 = vsel %vm1179, %v1175, 0
      %1183 = vmatprep.subr.bf16.mxu0 0
      %1184 = vmatpush1.bf16.msra.mxu0 %v1181
      %1185 = vmatprep.subr.bf16.mxu0 0
      %1186 = vmatpush1.bf16.msra.mxu0 0
      %1187 = vmatprep.subr.bf16.mxu0 0
      %1188 = vmatpush1.bf16.msra.mxu0 0
      %1189 = vmatprep.subr.bf16.mxu0 0
      %1190 = vmatpush1.bf16.msra.mxu0 0
      %1191 = vmatprep.subr.bf16.mxu0 0
      %1192 = vmatpush1.bf16.msra.mxu0 0
      %1193 = vmatprep.subr.bf16.mxu0 0
      %1194 = vmatpush1.bf16.msra.mxu0 0
      %1195 = vmatprep.subr.bf16.mxu0 0
      %1196 = vmatpush1.bf16.msra.mxu0 0
      %1197 = vmatprep.subr.bf16.mxu0 0
      %1198 = vmatpush1.bf16.msra.mxu0 0
      %1199 = vmatprep.subr.bf16.mxu0 0
      %1200 = vmatpush1.bf16.msra.mxu0 0
      %1201 = vmatprep.subr.bf16.mxu0 0
      %1202 = vmatpush1.bf16.msra.mxu0 0
      %1203 = vmatprep.subr.bf16.mxu0 0
      %1204 = vmatpush1.bf16.msra.mxu0 0
      %1205 = vmatprep.subr.bf16.mxu0 0
      %1206 = vmatpush1.bf16.msra.mxu0 0
      %1207 = vmatprep.subr.bf16.mxu0 0
      %1208 = vmatpush1.bf16.msra.mxu0 0
      %1209 = vmatprep.subr.bf16.mxu0 0
      %1210 = vmatpush1.bf16.msra.mxu0 0
      %1211 = vmatprep.subr.bf16.mxu0 0
      %1212 = vmatpush1.bf16.msra.mxu0 0
      %1213 = vmatprep.subr.bf16.mxu0 0
      %1214 = vmatpush1.bf16.msra.mxu0 0
      %1215 = vmatprep.mubr.bf16.mxu0 0
      %1216 = vmatmul.mubr.bf16.gmra.mrb[0].mxu0 %v1177
      %v1217 = vpop.f32.mrb[0].mxu0
      %v1218 = vadd.f32 0.0, %v1217
      %v1219 = vpop.f32.mrb[0].mxu0
      %v1220 = vpop.f32.mrb[0].mxu0
      %v1221 = vpop.f32.mrb[0].mxu0
      %1222 = vdwg.mxu0
      %1223 = vrot.lane.b32.xlu0 %v629, 64
      %v1224 = vpop.permute.xlu0 %1223
      %v1226 = vsel %vm1077, %v1167, 0
      %v1229 = vsel %vm1179, %v1224, 0
      %1231 = vmatprep.subr.bf16.mxu0 0
      %1232 = vmatpush1.bf16.msra.mxu0 %v1229
      %1233 = vmatprep.subr.bf16.mxu0 0
      %1234 = vmatpush1.bf16.msra.mxu0 0
      %1235 = vmatprep.subr.bf16.mxu0 0
      %1236 = vmatpush1.bf16.msra.mxu0 0
      %1237 = vmatprep.subr.bf16.mxu0 0
      %1238 = vmatpush1.bf16.msra.mxu0 0
      %1239 = vmatprep.subr.bf16.mxu0 0
      %1240 = vmatpush1.bf16.msra.mxu0 0
      %1241 = vmatprep.subr.bf16.mxu0 0
      %1242 = vmatpush1.bf16.msra.mxu0 0
      %1243 = vmatprep.subr.bf16.mxu0 0
      %1244 = vmatpush1.bf16.msra.mxu0 0
      %1245 = vmatprep.subr.bf16.mxu0 0
      %1246 = vmatpush1.bf16.msra.mxu0 0
      %1247 = vmatprep.subr.bf16.mxu0 0
      %1248 = vmatpush1.bf16.msra.mxu0 0
      %1249 = vmatprep.subr.bf16.mxu0 0
      %1250 = vmatpush1.bf16.msra.mxu0 0
      %1251 = vmatprep.subr.bf16.mxu0 0
      %1252 = vmatpush1.bf16.msra.mxu0 0
      %1253 = vmatprep.subr.bf16.mxu0 0
      %1254 = vmatpush1.bf16.msra.mxu0 0
      %1255 = vmatprep.subr.bf16.mxu0 0
      %1256 = vmatpush1.bf16.msra.mxu0 0
      %1257 = vmatprep.subr.bf16.mxu0 0
      %1258 = vmatpush1.bf16.msra.mxu0 0
      %1259 = vmatprep.subr.bf16.mxu0 0
      %1260 = vmatpush1.bf16.msra.mxu0 0
      %1261 = vmatprep.subr.bf16.mxu0 0
      %1262 = vmatpush1.bf16.msra.mxu0 0
      %1263 = vmatprep.mubr.bf16.mxu0 0
      %1264 = vmatmul.mubr.bf16.gmra.mrb[0].mxu0 %v1226
      %v1265 = vpop.f32.mrb[0].mxu0
      %v1266 = vadd.f32 0.0, %v1265
      %v1267 = vpop.f32.mrb[0].mxu0
      %v1268 = vpop.f32.mrb[0].mxu0
      %v1269 = vpop.f32.mrb[0].mxu0
      %1270 = vdwg.mxu0
      %1271 = vrot.lane.b32.xlu0 %v630, 64
      %v1272 = vpop.permute.xlu0 %1271
      %v1274 = vsel %vm1077, %v1168, 0
      %v1277 = vsel %vm1179, %v1272, 0
      %1279 = vmatprep.subr.bf16.mxu0 0
      %1280 = vmatpush1.bf16.msra.mxu0 %v1277
      %1281 = vmatprep.subr.bf16.mxu0 0
      %1282 = vmatpush1.bf16.msra.mxu0 0
      %1283 = vmatprep.subr.bf16.mxu0 0
      %1284 = vmatpush1.bf16.msra.mxu0 0
      %1285 = vmatprep.subr.bf16.mxu0 0
      %1286 = vmatpush1.bf16.msra.mxu0 0
      %1287 = vmatprep.subr.bf16.mxu0 0
      %1288 = vmatpush1.bf16.msra.mxu0 0
      %1289 = vmatprep.subr.bf16.mxu0 0
      %1290 = vmatpush1.bf16.msra.mxu0 0
      %1291 = vmatprep.subr.bf16.mxu0 0
      %1292 = vmatpush1.bf16.msra.mxu0 0
      %1293 = vmatprep.subr.bf16.mxu0 0
      %1294 = vmatpush1.bf16.msra.mxu0 0
      %1295 = vmatprep.subr.bf16.mxu0 0
      %1296 = vmatpush1.bf16.msra.mxu0 0
      %1297 = vmatprep.subr.bf16.mxu0 0
      %1298 = vmatpush1.bf16.msra.mxu0 0
      %1299 = vmatprep.subr.bf16.mxu0 0
      %1300 = vmatpush1.bf16.msra.mxu0 0
      %1301 = vmatprep.subr.bf16.mxu0 0
      %1302 = vmatpush1.bf16.msra.mxu0 0
      %1303 = vmatprep.subr.bf16.mxu0 0
      %1304 = vmatpush1.bf16.msra.mxu0 0
      %1305 = vmatprep.subr.bf16.mxu0 0
      %1306 = vmatpush1.bf16.msra.mxu0 0
      %1307 = vmatprep.subr.bf16.mxu0 0
      %1308 = vmatpush1.bf16.msra.mxu0 0
      %1309 = vmatprep.subr.bf16.mxu0 0
      %1310 = vmatpush1.bf16.msra.mxu0 0
      %1311 = vmatprep.mubr.bf16.mxu0 0
      %1312 = vmatmul.mubr.bf16.gmra.mrb[0].mxu0 %v1274
      %v1313 = vpop.f32.mrb[0].mxu0
      %v1314 = vadd.f32 0.0, %v1313
      %v1315 = vpop.f32.mrb[0].mxu0
      %v1316 = vpop.f32.mrb[0].mxu0
      %v1317 = vpop.f32.mrb[0].mxu0
      %1318 = vdwg.mxu0
      %1319 = vrot.lane.b32.xlu0 %v631, 64
      %v1320 = vpop.permute.xlu0 %1319
      %v1322 = vsel %vm1077, %v1169, 0
      %v1325 = vsel %vm1179, %v1320, 0
      %1327 = vmatprep.subr.bf16.mxu0 0
      %1328 = vmatpush1.bf16.msra.mxu0 %v1325
      %1329 = vmatprep.subr.bf16.mxu0 0
      %1330 = vmatpush1.bf16.msra.mxu0 0
      %1331 = vmatprep.subr.bf16.mxu0 0
      %1332 = vmatpush1.bf16.msra.mxu0 0
      %1333 = vmatprep.subr.bf16.mxu0 0
      %1334 = vmatpush1.bf16.msra.mxu0 0
      %1335 = vmatprep.subr.bf16.mxu0 0
      %1336 = vmatpush1.bf16.msra.mxu0 0
      %1337 = vmatprep.subr.bf16.mxu0 0
      %1338 = vmatpush1.bf16.msra.mxu0 0
      %1339 = vmatprep.subr.bf16.mxu0 0
      %1340 = vmatpush1.bf16.msra.mxu0 0
      %1341 = vmatprep.subr.bf16.mxu0 0
      %1342 = vmatpush1.bf16.msra.mxu0 0
      %1343 = vmatprep.subr.bf16.mxu0 0
      %1344 = vmatpush1.bf16.msra.mxu0 0
      %1345 = vmatprep.subr.bf16.mxu0 0
      %1346 = vmatpush1.bf16.msra.mxu0 0
      %1347 = vmatprep.subr.bf16.mxu0 0
      %1348 = vmatpush1.bf16.msra.mxu0 0
      %1349 = vmatprep.subr.bf16.mxu0 0
      %1350 = vmatpush1.bf16.msra.mxu0 0
      %1351 = vmatprep.subr.bf16.mxu0 0
      %1352 = vmatpush1.bf16.msra.mxu0 0
      %1353 = vmatprep.subr.bf16.mxu0 0
      %1354 = vmatpush1.bf16.msra.mxu0 0
      %1355 = vmatprep.subr.bf16.mxu0 0
      %1356 = vmatpush1.bf16.msra.mxu0 0
      %1357 = vmatprep.subr.bf16.mxu0 0
      %1358 = vmatpush1.bf16.msra.mxu0 0
      %1359 = vmatprep.mubr.bf16.mxu0 0
      %1360 = vmatmul.mubr.bf16.gmra.mrb[0].mxu0 %v1322
      %v1361 = vpop.f32.mrb[0].mxu0
      %v1362 = vadd.f32 0.0, %v1361
      %v1363 = vpop.f32.mrb[0].mxu0
      %v1364 = vpop.f32.mrb[0].mxu0
      %v1365 = vpop.f32.mrb[0].mxu0
      %1366 = vdwg.mxu0
      %1367 = vrot.lane.b32.xlu0 %v632, 64
      %v1368 = vpop.permute.xlu0 %1367
      %v1370 = vsel %vm1077, %v1170, 0
      %v1373 = vsel %vm1179, %v1368, 0
      %1375 = vmatprep.subr.bf16.mxu0 0
      %1376 = vmatpush1.bf16.msra.mxu0 %v1373
      %1377 = vmatprep.subr.bf16.mxu0 0
      %1378 = vmatpush1.bf16.msra.mxu0 0
      %1379 = vmatprep.subr.bf16.mxu0 0
      %1380 = vmatpush1.bf16.msra.mxu0 0
      %1381 = vmatprep.subr.bf16.mxu0 0
      %1382 = vmatpush1.bf16.msra.mxu0 0
      %1383 = vmatprep.subr.bf16.mxu0 0
      %1384 = vmatpush1.bf16.msra.mxu0 0
      %1385 = vmatprep.subr.bf16.mxu0 0
      %1386 = vmatpush1.bf16.msra.mxu0 0
      %1387 = vmatprep.subr.bf16.mxu0 0
      %1388 = vmatpush1.bf16.msra.mxu0 0
      %1389 = vmatprep.subr.bf16.mxu0 0
      %1390 = vmatpush1.bf16.msra.mxu0 0
      %1391 = vmatprep.subr.bf16.mxu0 0
      %1392 = vmatpush1.bf16.msra.mxu0 0
      %1393 = vmatprep.subr.bf16.mxu0 0
      %1394 = vmatpush1.bf16.msra.mxu0 0
      %1395 = vmatprep.subr.bf16.mxu0 0
      %1396 = vmatpush1.bf16.msra.mxu0 0
      %1397 = vmatprep.subr.bf16.mxu0 0
      %1398 = vmatpush1.bf16.msra.mxu0 0
      %1399 = vmatprep.subr.bf16.mxu0 0
      %1400 = vmatpush1.bf16.msra.mxu0 0
      %1401 = vmatprep.subr.bf16.mxu0 0
      %1402 = vmatpush1.bf16.msra.mxu0 0
      %1403 = vmatprep.subr.bf16.mxu0 0
      %1404 = vmatpush1.bf16.msra.mxu0 0
      %1405 = vmatprep.subr.bf16.mxu0 0
      %1406 = vmatpush1.bf16.msra.mxu0 0
      %1407 = vmatprep.mubr.bf16.mxu0 0
      %1408 = vmatmul.mubr.bf16.gmra.mrb[0].mxu0 %v1370
      %v1409 = vpop.f32.mrb[0].mxu0
      %v1410 = vadd.f32 0.0, %v1409
      %v1411 = vpop.f32.mrb[0].mxu0
      %v1412 = vpop.f32.mrb[0].mxu0
      %v1413 = vpop.f32.mrb[0].mxu0
      %1414 = vdwg.mxu0
      %1415 = vrot.lane.b32.xlu0 %v633, 64
      %v1416 = vpop.permute.xlu0 %1415
      %v1418 = vsel %vm1077, %v1171, 0
      %v1421 = vsel %vm1179, %v1416, 0
      %1423 = vmatprep.subr.bf16.mxu0 0
      %1424 = vmatpush1.bf16.msra.mxu0 %v1421
      %1425 = vmatprep.subr.bf16.mxu0 0
      %1426 = vmatpush1.bf16.msra.mxu0 0
      %1427 = vmatprep.subr.bf16.mxu0 0
      %1428 = vmatpush1.bf16.msra.mxu0 0
      %1429 = vmatprep.subr.bf16.mxu0 0
      %1430 = vmatpush1.bf16.msra.mxu0 0
      %1431 = vmatprep.subr.bf16.mxu0 0
      %1432 = vmatpush1.bf16.msra.mxu0 0
      %1433 = vmatprep.subr.bf16.mxu0 0
      %1434 = vmatpush1.bf16.msra.mxu0 0
      %1435 = vmatprep.subr.bf16.mxu0 0
      %1436 = vmatpush1.bf16.msra.mxu0 0
      %1437 = vmatprep.subr.bf16.mxu0 0
      %1438 = vmatpush1.bf16.msra.mxu0 0
      %1439 = vmatprep.subr.bf16.mxu0 0
      %1440 = vmatpush1.bf16.msra.mxu0 0
      %1441 = vmatprep.subr.bf16.mxu0 0
      %1442 = vmatpush1.bf16.msra.mxu0 0
      %1443 = vmatprep.subr.bf16.mxu0 0
      %1444 = vmatpush1.bf16.msra.mxu0 0
      %1445 = vmatprep.subr.bf16.mxu0 0
      %1446 = vmatpush1.bf16.msra.mxu0 0
      %1447 = vmatprep.subr.bf16.mxu0 0
      %1448 = vmatpush1.bf16.msra.mxu0 0
      %1449 = vmatprep.subr.bf16.mxu0 0
      %1450 = vmatpush1.bf16.msra.mxu0 0
      %1451 = vmatprep.subr.bf16.mxu0 0
      %1452 = vmatpush1.bf16.msra.mxu0 0
      %1453 = vmatprep.subr.bf16.mxu0 0
      %1454 = vmatpush1.bf16.msra.mxu0 0
      %1455 = vmatprep.mubr.bf16.mxu0 0
      %1456 = vmatmul.mubr.bf16.gmra.mrb[0].mxu0 %v1418
      %v1457 = vpop.f32.mrb[0].mxu0
      %v1458 = vadd.f32 0.0, %v1457
      %v1459 = vpop.f32.mrb[0].mxu0
      %v1460 = vpop.f32.mrb[0].mxu0
      %v1461 = vpop.f32.mrb[0].mxu0
      %1462 = vdwg.mxu0
      %1463 = vrot.lane.b32.xlu0 %v634, 64
      %v1464 = vpop.permute.xlu0 %1463
      %v1466 = vsel %vm1077, %v1172, 0
      %v1469 = vsel %vm1179, %v1464, 0
      %1471 = vmatprep.subr.bf16.mxu0 0
      %1472 = vmatpush1.bf16.msra.mxu0 %v1469
      %1473 = vmatprep.subr.bf16.mxu0 0
      %1474 = vmatpush1.bf16.msra.mxu0 0
      %1475 = vmatprep.subr.bf16.mxu0 0
      %1476 = vmatpush1.bf16.msra.mxu0 0
      %1477 = vmatprep.subr.bf16.mxu0 0
      %1478 = vmatpush1.bf16.msra.mxu0 0
      %1479 = vmatprep.subr.bf16.mxu0 0
      %1480 = vmatpush1.bf16.msra.mxu0 0
      %1481 = vmatprep.subr.bf16.mxu0 0
      %1482 = vmatpush1.bf16.msra.mxu0 0
      %1483 = vmatprep.subr.bf16.mxu0 0
      %1484 = vmatpush1.bf16.msra.mxu0 0
      %1485 = vmatprep.subr.bf16.mxu0 0
      %1486 = vmatpush1.bf16.msra.mxu0 0
      %1487 = vmatprep.subr.bf16.mxu0 0
      %1488 = vmatpush1.bf16.msra.mxu0 0
      %1489 = vmatprep.subr.bf16.mxu0 0
      %1490 = vmatpush1.bf16.msra.mxu0 0
      %1491 = vmatprep.subr.bf16.mxu0 0
      %1492 = vmatpush1.bf16.msra.mxu0 0
      %1493 = vmatprep.subr.bf16.mxu0 0
      %1494 = vmatpush1.bf16.msra.mxu0 0
      %1495 = vmatprep.subr.bf16.mxu0 0
      %1496 = vmatpush1.bf16.msra.mxu0 0
      %1497 = vmatprep.subr.bf16.mxu0 0
      %1498 = vmatpush1.bf16.msra.mxu0 0
      %1499 = vmatprep.subr.bf16.mxu0 0
      %1500 = vmatpush1.bf16.msra.mxu0 0
      %1501 = vmatprep.subr.bf16.mxu0 0
      %1502 = vmatpush1.bf16.msra.mxu0 0
      %1503 = vmatprep.mubr.bf16.mxu0 0
      %1504 = vmatmul.mubr.bf16.gmra.mrb[0].mxu0 %v1466
      %v1505 = vpop.f32.mrb[0].mxu0
      %v1506 = vadd.f32 0.0, %v1505
      %v1507 = vpop.f32.mrb[0].mxu0
      %v1508 = vpop.f32.mrb[0].mxu0
      %v1509 = vpop.f32.mrb[0].mxu0
      %1510 = vdwg.mxu0
      %1511 = vrot.lane.b32.xlu0 %v635, 64
      %v1512 = vpop.permute.xlu0 %1511
      %v1514 = vsel %vm1077, %v1173, 0
      %v1517 = vsel %vm1179, %v1512, 0
      %1519 = vmatprep.subr.bf16.mxu0 0
      %1520 = vmatpush1.bf16.msra.mxu0 %v1517
      %1521 = vmatprep.subr.bf16.mxu0 0
      %1522 = vmatpush1.bf16.msra.mxu0 0
      %1523 = vmatprep.subr.bf16.mxu0 0
      %1524 = vmatpush1.bf16.msra.mxu0 0
      %1525 = vmatprep.subr.bf16.mxu0 0
      %1526 = vmatpush1.bf16.msra.mxu0 0
      %1527 = vmatprep.subr.bf16.mxu0 0
      %1528 = vmatpush1.bf16.msra.mxu0 0
      %1529 = vmatprep.subr.bf16.mxu0 0
      %1530 = vmatpush1.bf16.msra.mxu0 0
      %1531 = vmatprep.subr.bf16.mxu0 0
      %1532 = vmatpush1.bf16.msra.mxu0 0
      %1533 = vmatprep.subr.bf16.mxu0 0
      %1534 = vmatpush1.bf16.msra.mxu0 0
      %1535 = vmatprep.subr.bf16.mxu0 0
      %1536 = vmatpush1.bf16.msra.mxu0 0
      %1537 = vmatprep.subr.bf16.mxu0 0
      %1538 = vmatpush1.bf16.msra.mxu0 0
      %1539 = vmatprep.subr.bf16.mxu0 0
      %1540 = vmatpush1.bf16.msra.mxu0 0
      %1541 = vmatprep.subr.bf16.mxu0 0
      %1542 = vmatpush1.bf16.msra.mxu0 0
      %1543 = vmatprep.subr.bf16.mxu0 0
      %1544 = vmatpush1.bf16.msra.mxu0 0
      %1545 = vmatprep.subr.bf16.mxu0 0
      %1546 = vmatpush1.bf16.msra.mxu0 0
      %1547 = vmatprep.subr.bf16.mxu0 0
      %1548 = vmatpush1.bf16.msra.mxu0 0
      %1549 = vmatprep.subr.bf16.mxu0 0
      %1550 = vmatpush1.bf16.msra.mxu0 0
      %1551 = vmatprep.mubr.bf16.mxu0 0
      %1552 = vmatmul.mubr.bf16.gmra.mrb[0].mxu0 %v1514
      %v1553 = vpop.f32.mrb[0].mxu0
      %v1554 = vadd.f32 0.0, %v1553
      %v1555 = vpop.f32.mrb[0].mxu0
      %v1556 = vpop.f32.mrb[0].mxu0
      %v1557 = vpop.f32.mrb[0].mxu0
      %1558 = vdwg.mxu0
      %1560 = vrot.lane.b32.xlu0 %v620, 112
      %v1561 = vpop.permute.xlu0 %1560
      %1562 = vrot.lane.b32.xlu0 %v628, 80
      %v1563 = vpop.permute.xlu0 %1562
      %v1565 = vsel %vm687, %v1561, 0
      %v1568 = vsel %vm687, %v1563, 0
      %1570 = vmatprep.subr.bf16.mxu0 0
      %1571 = vmatpush1.bf16.xpose.msra.mxu0 %v1568
      %1572 = vmatprep.subr.bf16.mxu0 0
      %1573 = vmatpush1.bf16.xpose.msra.mxu0 0
      %1574 = vmatprep.subr.bf16.mxu0 0
      %1575 = vmatpush1.bf16.xpose.msra.mxu0 0
      %1576 = vmatprep.subr.bf16.mxu0 0
      %1577 = vmatpush1.bf16.xpose.msra.mxu0 0
      %1578 = vmatprep.subr.bf16.mxu0 0
      %1579 = vmatpush1.bf16.xpose.msra.mxu0 0
      %1580 = vmatprep.subr.bf16.mxu0 0
      %1581 = vmatpush1.bf16.xpose.msra.mxu0 0
      %1582 = vmatprep.subr.bf16.mxu0 0
      %1583 = vmatpush1.bf16.xpose.msra.mxu0 0
      %1584 = vmatprep.subr.bf16.mxu0 0
      %1585 = vmatpush1.bf16.xpose.msra.mxu0 0
      %1586 = vmatprep.subr.bf16.mxu0 0
      %1587 = vmatpush1.bf16.xpose.msra.mxu0 0
      %1588 = vmatprep.subr.bf16.mxu0 0
      %1589 = vmatpush1.bf16.xpose.msra.mxu0 0
      %1590 = vmatprep.subr.bf16.mxu0 0
      %1591 = vmatpush1.bf16.xpose.msra.mxu0 0
      %1592 = vmatprep.subr.bf16.mxu0 0
      %1593 = vmatpush1.bf16.xpose.msra.mxu0 0
      %1594 = vmatprep.subr.bf16.mxu0 0
      %1595 = vmatpush1.bf16.xpose.msra.mxu0 0
      %1596 = vmatprep.subr.bf16.mxu0 0
      %1597 = vmatpush1.bf16.xpose.msra.mxu0 0
      %1598 = vmatprep.subr.bf16.mxu0 0
      %1599 = vmatpush1.bf16.xpose.msra.mxu0 0
      %1600 = vmatprep.subr.bf16.mxu0 0
      %1601 = vmatpush1.bf16.xpose.msra.mxu0 0
      %1602 = vmatprep.mubr.bf16.mxu0 0
      %1603 = vmatmul.mubr.bf16.gmra.mrb[0].mxu0 %v1565
      %v1604 = vpop.f32.mrb[0].mxu0
      %v1605 = vadd.f32 %v647, %v1604
      %v1606 = vpop.f32.mrb[0].mxu0
      %v1607 = vpop.f32.mrb[0].mxu0
      %v1608 = vpop.f32.mrb[0].mxu0
      %1609 = vdwg.mxu0
      %1611 = vrot.lane.b32.xlu0 %v621, 112
      %v1612 = vpop.permute.xlu0 %1611
      %1613 = vrot.lane.b32.xlu0 %v629, 80
      %v1614 = vpop.permute.xlu0 %1613
      %v1616 = vsel %vm687, %v1612, 0
      %v1619 = vsel %vm687, %v1614, 0
      %1621 = vmatprep.subr.bf16.mxu0 0
      %1622 = vmatpush1.bf16.xpose.msra.mxu0 %v1619
      %1623 = vmatprep.subr.bf16.mxu0 0
      %1624 = vmatpush1.bf16.xpose.msra.mxu0 0
      %1625 = vmatprep.subr.bf16.mxu0 0
      %1626 = vmatpush1.bf16.xpose.msra.mxu0 0
      %1627 = vmatprep.subr.bf16.mxu0 0
      %1628 = vmatpush1.bf16.xpose.msra.mxu0 0
      %1629 = vmatprep.subr.bf16.mxu0 0
      %1630 = vmatpush1.bf16.xpose.msra.mxu0 0
      %1631 = vmatprep.subr.bf16.mxu0 0
      %1632 = vmatpush1.bf16.xpose.msra.mxu0 0
      %1633 = vmatprep.subr.bf16.mxu0 0
      %1634 = vmatpush1.bf16.xpose.msra.mxu0 0
      %1635 = vmatprep.subr.bf16.mxu0 0
      %1636 = vmatpush1.bf16.xpose.msra.mxu0 0
      %1637 = vmatprep.subr.bf16.mxu0 0
      %1638 = vmatpush1.bf16.xpose.msra.mxu0 0
      %1639 = vmatprep.subr.bf16.mxu0 0
      %1640 = vmatpush1.bf16.xpose.msra.mxu0 0
      %1641 = vmatprep.subr.bf16.mxu0 0
      %1642 = vmatpush1.bf16.xpose.msra.mxu0 0
      %1643 = vmatprep.subr.bf16.mxu0 0
      %1644 = vmatpush1.bf16.xpose.msra.mxu0 0
      %1645 = vmatprep.subr.bf16.mxu0 0
      %1646 = vmatpush1.bf16.xpose.msra.mxu0 0
      %1647 = vmatprep.subr.bf16.mxu0 0
      %1648 = vmatpush1.bf16.xpose.msra.mxu0 0
      %1649 = vmatprep.subr.bf16.mxu0 0
      %1650 = vmatpush1.bf16.xpose.msra.mxu0 0
      %1651 = vmatprep.subr.bf16.mxu0 0
      %1652 = vmatpush1.bf16.xpose.msra.mxu0 0
      %1653 = vmatprep.mubr.bf16.mxu0 0
      %1654 = vmatmul.mubr.bf16.gmra.mrb[0].mxu0 %v1616
      %v1655 = vpop.f32.mrb[0].mxu0
      %v1656 = vadd.f32 %v651, %v1655
      %v1657 = vpop.f32.mrb[0].mxu0
      %v1658 = vpop.f32.mrb[0].mxu0
      %v1659 = vpop.f32.mrb[0].mxu0
      %1660 = vdwg.mxu0
      %1662 = vrot.lane.b32.xlu0 %v622, 112
      %v1663 = vpop.permute.xlu0 %1662
      %1664 = vrot.lane.b32.xlu0 %v630, 80
      %v1665 = vpop.permute.xlu0 %1664
      %v1667 = vsel %vm687, %v1663, 0
      %v1670 = vsel %vm687, %v1665, 0
      %1672 = vmatprep.subr.bf16.mxu0 0
      %1673 = vmatpush1.bf16.xpose.msra.mxu0 %v1670
      %1674 = vmatprep.subr.bf16.mxu0 0
      %1675 = vmatpush1.bf16.xpose.msra.mxu0 0
      %1676 = vmatprep.subr.bf16.mxu0 0
      %1677 = vmatpush1.bf16.xpose.msra.mxu0 0
      %1678 = vmatprep.subr.bf16.mxu0 0
      %1679 = vmatpush1.bf16.xpose.msra.mxu0 0
      %1680 = vmatprep.subr.bf16.mxu0 0
      %1681 = vmatpush1.bf16.xpose.msra.mxu0 0
      %1682 = vmatprep.subr.bf16.mxu0 0
      %1683 = vmatpush1.bf16.xpose.msra.mxu0 0
      %1684 = vmatprep.subr.bf16.mxu0 0
      %1685 = vmatpush1.bf16.xpose.msra.mxu0 0
      %1686 = vmatprep.subr.bf16.mxu0 0
      %1687 = vmatpush1.bf16.xpose.msra.mxu0 0
      %1688 = vmatprep.subr.bf16.mxu0 0
      %1689 = vmatpush1.bf16.xpose.msra.mxu0 0
      %1690 = vmatprep.subr.bf16.mxu0 0
      %1691 = vmatpush1.bf16.xpose.msra.mxu0 0
      %1692 = vmatprep.subr.bf16.mxu0 0
      %1693 = vmatpush1.bf16.xpose.msra.mxu0 0
      %1694 = vmatprep.subr.bf16.mxu0 0
      %1695 = vmatpush1.bf16.xpose.msra.mxu0 0
      %1696 = vmatprep.subr.bf16.mxu0 0
      %1697 = vmatpush1.bf16.xpose.msra.mxu0 0
      %1698 = vmatprep.subr.bf16.mxu0 0
      %1699 = vmatpush1.bf16.xpose.msra.mxu0 0
      %1700 = vmatprep.subr.bf16.mxu0 0
      %1701 = vmatpush1.bf16.xpose.msra.mxu0 0
      %1702 = vmatprep.subr.bf16.mxu0 0
      %1703 = vmatpush1.bf16.xpose.msra.mxu0 0
      %1704 = vmatprep.mubr.bf16.mxu0 0
      %1705 = vmatmul.mubr.bf16.gmra.mrb[0].mxu0 %v1667
      %v1706 = vpop.f32.mrb[0].mxu0
      %v1707 = vadd.f32 %v655, %v1706
      %v1708 = vpop.f32.mrb[0].mxu0
      %v1709 = vpop.f32.mrb[0].mxu0
      %v1710 = vpop.f32.mrb[0].mxu0
      %1711 = vdwg.mxu0
      %1713 = vrot.lane.b32.xlu0 %v623, 112
      %v1714 = vpop.permute.xlu0 %1713
      %1715 = vrot.lane.b32.xlu0 %v631, 80
      %v1716 = vpop.permute.xlu0 %1715
      %v1718 = vsel %vm687, %v1714, 0
      %v1721 = vsel %vm687, %v1716, 0
      %1723 = vmatprep.subr.bf16.mxu0 0
      %1724 = vmatpush1.bf16.xpose.msra.mxu0 %v1721
      %1725 = vmatprep.subr.bf16.mxu0 0
      %1726 = vmatpush1.bf16.xpose.msra.mxu0 0
      %1727 = vmatprep.subr.bf16.mxu0 0
      %1728 = vmatpush1.bf16.xpose.msra.mxu0 0
      %1729 = vmatprep.subr.bf16.mxu0 0
      %1730 = vmatpush1.bf16.xpose.msra.mxu0 0
      %1731 = vmatprep.subr.bf16.mxu0 0
      %1732 = vmatpush1.bf16.xpose.msra.mxu0 0
      %1733 = vmatprep.subr.bf16.mxu0 0
      %1734 = vmatpush1.bf16.xpose.msra.mxu0 0
      %1735 = vmatprep.subr.bf16.mxu0 0
      %1736 = vmatpush1.bf16.xpose.msra.mxu0 0
      %1737 = vmatprep.subr.bf16.mxu0 0
      %1738 = vmatpush1.bf16.xpose.msra.mxu0 0
      %1739 = vmatprep.subr.bf16.mxu0 0
      %1740 = vmatpush1.bf16.xpose.msra.mxu0 0
      %1741 = vmatprep.subr.bf16.mxu0 0
      %1742 = vmatpush1.bf16.xpose.msra.mxu0 0
      %1743 = vmatprep.subr.bf16.mxu0 0
      %1744 = vmatpush1.bf16.xpose.msra.mxu0 0
      %1745 = vmatprep.subr.bf16.mxu0 0
      %1746 = vmatpush1.bf16.xpose.msra.mxu0 0
      %1747 = vmatprep.subr.bf16.mxu0 0
      %1748 = vmatpush1.bf16.xpose.msra.mxu0 0
      %1749 = vmatprep.subr.bf16.mxu0 0
      %1750 = vmatpush1.bf16.xpose.msra.mxu0 0
      %1751 = vmatprep.subr.bf16.mxu0 0
      %1752 = vmatpush1.bf16.xpose.msra.mxu0 0
      %1753 = vmatprep.subr.bf16.mxu0 0
      %1754 = vmatpush1.bf16.xpose.msra.mxu0 0
      %1755 = vmatprep.mubr.bf16.mxu0 0
      %1756 = vmatmul.mubr.bf16.gmra.mrb[0].mxu0 %v1718
      %v1757 = vpop.f32.mrb[0].mxu0
      %v1758 = vadd.f32 %v659, %v1757
      %v1759 = vpop.f32.mrb[0].mxu0
      %v1760 = vpop.f32.mrb[0].mxu0
      %v1761 = vpop.f32.mrb[0].mxu0
      %1762 = vdwg.mxu0
      %1764 = vrot.lane.b32.xlu0 %v624, 112
      %v1765 = vpop.permute.xlu0 %1764
      %1766 = vrot.lane.b32.xlu0 %v632, 80
      %v1767 = vpop.permute.xlu0 %1766
      %v1769 = vsel %vm687, %v1765, 0
      %v1772 = vsel %vm687, %v1767, 0
      %1774 = vmatprep.subr.bf16.mxu0 0
      %1775 = vmatpush1.bf16.xpose.msra.mxu0 %v1772
      %1776 = vmatprep.subr.bf16.mxu0 0
      %1777 = vmatpush1.bf16.xpose.msra.mxu0 0
      %1778 = vmatprep.subr.bf16.mxu0 0
      %1779 = vmatpush1.bf16.xpose.msra.mxu0 0
      %1780 = vmatprep.subr.bf16.mxu0 0
      %1781 = vmatpush1.bf16.xpose.msra.mxu0 0
      %1782 = vmatprep.subr.bf16.mxu0 0
      %1783 = vmatpush1.bf16.xpose.msra.mxu0 0
      %1784 = vmatprep.subr.bf16.mxu0 0
      %1785 = vmatpush1.bf16.xpose.msra.mxu0 0
      %1786 = vmatprep.subr.bf16.mxu0 0
      %1787 = vmatpush1.bf16.xpose.msra.mxu0 0
      %1788 = vmatprep.subr.bf16.mxu0 0
      %1789 = vmatpush1.bf16.xpose.msra.mxu0 0
      %1790 = vmatprep.subr.bf16.mxu0 0
      %1791 = vmatpush1.bf16.xpose.msra.mxu0 0
      %1792 = vmatprep.subr.bf16.mxu0 0
      %1793 = vmatpush1.bf16.xpose.msra.mxu0 0
      %1794 = vmatprep.subr.bf16.mxu0 0
      %1795 = vmatpush1.bf16.xpose.msra.mxu0 0
      %1796 = vmatprep.subr.bf16.mxu0 0
      %1797 = vmatpush1.bf16.xpose.msra.mxu0 0
      %1798 = vmatprep.subr.bf16.mxu0 0
      %1799 = vmatpush1.bf16.xpose.msra.mxu0 0
      %1800 = vmatprep.subr.bf16.mxu0 0
      %1801 = vmatpush1.bf16.xpose.msra.mxu0 0
      %1802 = vmatprep.subr.bf16.mxu0 0
      %1803 = vmatpush1.bf16.xpose.msra.mxu0 0
      %1804 = vmatprep.subr.bf16.mxu0 0
      %1805 = vmatpush1.bf16.xpose.msra.mxu0 0
      %1806 = vmatprep.mubr.bf16.mxu0 0
      %1807 = vmatmul.mubr.bf16.gmra.mrb[0].mxu0 %v1769
      %v1808 = vpop.f32.mrb[0].mxu0
      %v1809 = vadd.f32 %v663, %v1808
      %v1810 = vpop.f32.mrb[0].mxu0
      %v1811 = vpop.f32.mrb[0].mxu0
      %v1812 = vpop.f32.mrb[0].mxu0
      %1813 = vdwg.mxu0
      %1815 = vrot.lane.b32.xlu0 %v625, 112
      %v1816 = vpop.permute.xlu0 %1815
      %1817 = vrot.lane.b32.xlu0 %v633, 80
      %v1818 = vpop.permute.xlu0 %1817
      %v1820 = vsel %vm687, %v1816, 0
      %v1823 = vsel %vm687, %v1818, 0
      %1825 = vmatprep.subr.bf16.mxu0 0
      %1826 = vmatpush1.bf16.xpose.msra.mxu0 %v1823
      %1827 = vmatprep.subr.bf16.mxu0 0
      %1828 = vmatpush1.bf16.xpose.msra.mxu0 0
      %1829 = vmatprep.subr.bf16.mxu0 0
      %1830 = vmatpush1.bf16.xpose.msra.mxu0 0
      %1831 = vmatprep.subr.bf16.mxu0 0
      %1832 = vmatpush1.bf16.xpose.msra.mxu0 0
      %1833 = vmatprep.subr.bf16.mxu0 0
      %1834 = vmatpush1.bf16.xpose.msra.mxu0 0
      %1835 = vmatprep.subr.bf16.mxu0 0
      %1836 = vmatpush1.bf16.xpose.msra.mxu0 0
      %1837 = vmatprep.subr.bf16.mxu0 0
      %1838 = vmatpush1.bf16.xpose.msra.mxu0 0
      %1839 = vmatprep.subr.bf16.mxu0 0
      %1840 = vmatpush1.bf16.xpose.msra.mxu0 0
      %1841 = vmatprep.subr.bf16.mxu0 0
      %1842 = vmatpush1.bf16.xpose.msra.mxu0 0
      %1843 = vmatprep.subr.bf16.mxu0 0
      %1844 = vmatpush1.bf16.xpose.msra.mxu0 0
      %1845 = vmatprep.subr.bf16.mxu0 0
      %1846 = vmatpush1.bf16.xpose.msra.mxu0 0
      %1847 = vmatprep.subr.bf16.mxu0 0
      %1848 = vmatpush1.bf16.xpose.msra.mxu0 0
      %1849 = vmatprep.subr.bf16.mxu0 0
      %1850 = vmatpush1.bf16.xpose.msra.mxu0 0
      %1851 = vmatprep.subr.bf16.mxu0 0
      %1852 = vmatpush1.bf16.xpose.msra.mxu0 0
      %1853 = vmatprep.subr.bf16.mxu0 0
      %1854 = vmatpush1.bf16.xpose.msra.mxu0 0
      %1855 = vmatprep.subr.bf16.mxu0 0
      %1856 = vmatpush1.bf16.xpose.msra.mxu0 0
      %1857 = vmatprep.mubr.bf16.mxu0 0
      %1858 = vmatmul.mubr.bf16.gmra.mrb[0].mxu0 %v1820
      %v1859 = vpop.f32.mrb[0].mxu0
      %v1860 = vadd.f32 %v667, %v1859
      %v1861 = vpop.f32.mrb[0].mxu0
      %v1862 = vpop.f32.mrb[0].mxu0
      %v1863 = vpop.f32.mrb[0].mxu0
      %1864 = vdwg.mxu0
      %1866 = vrot.lane.b32.xlu0 %v626, 112
      %v1867 = vpop.permute.xlu0 %1866
      %1868 = vrot.lane.b32.xlu0 %v634, 80
      %v1869 = vpop.permute.xlu0 %1868
      %v1871 = vsel %vm687, %v1867, 0
      %v1874 = vsel %vm687, %v1869, 0
      %1876 = vmatprep.subr.bf16.mxu0 0
      %1877 = vmatpush1.bf16.xpose.msra.mxu0 %v1874
      %1878 = vmatprep.subr.bf16.mxu0 0
      %1879 = vmatpush1.bf16.xpose.msra.mxu0 0
      %1880 = vmatprep.subr.bf16.mxu0 0
      %1881 = vmatpush1.bf16.xpose.msra.mxu0 0
      %1882 = vmatprep.subr.bf16.mxu0 0
      %1883 = vmatpush1.bf16.xpose.msra.mxu0 0
      %1884 = vmatprep.subr.bf16.mxu0 0
      %1885 = vmatpush1.bf16.xpose.msra.mxu0 0
      %1886 = vmatprep.subr.bf16.mxu0 0
      %1887 = vmatpush1.bf16.xpose.msra.mxu0 0
      %1888 = vmatprep.subr.bf16.mxu0 0
      %1889 = vmatpush1.bf16.xpose.msra.mxu0 0
      %1890 = vmatprep.subr.bf16.mxu0 0
      %1891 = vmatpush1.bf16.xpose.msra.mxu0 0
      %1892 = vmatprep.subr.bf16.mxu0 0
      %1893 = vmatpush1.bf16.xpose.msra.mxu0 0
      %1894 = vmatprep.subr.bf16.mxu0 0
      %1895 = vmatpush1.bf16.xpose.msra.mxu0 0
      %1896 = vmatprep.subr.bf16.mxu0 0
      %1897 = vmatpush1.bf16.xpose.msra.mxu0 0
      %1898 = vmatprep.subr.bf16.mxu0 0
      %1899 = vmatpush1.bf16.xpose.msra.mxu0 0
      %1900 = vmatprep.subr.bf16.mxu0 0
      %1901 = vmatpush1.bf16.xpose.msra.mxu0 0
      %1902 = vmatprep.subr.bf16.mxu0 0
      %1903 = vmatpush1.bf16.xpose.msra.mxu0 0
      %1904 = vmatprep.subr.bf16.mxu0 0
      %1905 = vmatpush1.bf16.xpose.msra.mxu0 0
      %1906 = vmatprep.subr.bf16.mxu0 0
      %1907 = vmatpush1.bf16.xpose.msra.mxu0 0
      %1908 = vmatprep.mubr.bf16.mxu0 0
      %1909 = vmatmul.mubr.bf16.gmra.mrb[0].mxu0 %v1871
      %v1910 = vpop.f32.mrb[0].mxu0
      %v1911 = vadd.f32 %v671, %v1910
      %v1912 = vpop.f32.mrb[0].mxu0
      %v1913 = vpop.f32.mrb[0].mxu0
      %v1914 = vpop.f32.mrb[0].mxu0
      %1915 = vdwg.mxu0
      %1917 = vrot.lane.b32.xlu0 %v627, 112
      %v1918 = vpop.permute.xlu0 %1917
      %1919 = vrot.lane.b32.xlu0 %v635, 80
      %v1920 = vpop.permute.xlu0 %1919
      %v1922 = vsel %vm687, %v1918, 0
      %v1925 = vsel %vm687, %v1920, 0
      %1927 = vmatprep.subr.bf16.mxu0 0
      %1928 = vmatpush1.bf16.xpose.msra.mxu0 %v1925
      %1929 = vmatprep.subr.bf16.mxu0 0
      %1930 = vmatpush1.bf16.xpose.msra.mxu0 0
      %1931 = vmatprep.subr.bf16.mxu0 0
      %1932 = vmatpush1.bf16.xpose.msra.mxu0 0
      %1933 = vmatprep.subr.bf16.mxu0 0
      %1934 = vmatpush1.bf16.xpose.msra.mxu0 0
      %1935 = vmatprep.subr.bf16.mxu0 0
      %1936 = vmatpush1.bf16.xpose.msra.mxu0 0
      %1937 = vmatprep.subr.bf16.mxu0 0
      %1938 = vmatpush1.bf16.xpose.msra.mxu0 0
      %1939 = vmatprep.subr.bf16.mxu0 0
      %1940 = vmatpush1.bf16.xpose.msra.mxu0 0
      %1941 = vmatprep.subr.bf16.mxu0 0
      %1942 = vmatpush1.bf16.xpose.msra.mxu0 0
      %1943 = vmatprep.subr.bf16.mxu0 0
      %1944 = vmatpush1.bf16.xpose.msra.mxu0 0
      %1945 = vmatprep.subr.bf16.mxu0 0
      %1946 = vmatpush1.bf16.xpose.msra.mxu0 0
      %1947 = vmatprep.subr.bf16.mxu0 0
      %1948 = vmatpush1.bf16.xpose.msra.mxu0 0
      %1949 = vmatprep.subr.bf16.mxu0 0
      %1950 = vmatpush1.bf16.xpose.msra.mxu0 0
      %1951 = vmatprep.subr.bf16.mxu0 0
      %1952 = vmatpush1.bf16.xpose.msra.mxu0 0
      %1953 = vmatprep.subr.bf16.mxu0 0
      %1954 = vmatpush1.bf16.xpose.msra.mxu0 0
      %1955 = vmatprep.subr.bf16.mxu0 0
      %1956 = vmatpush1.bf16.xpose.msra.mxu0 0
      %1957 = vmatprep.subr.bf16.mxu0 0
      %1958 = vmatpush1.bf16.xpose.msra.mxu0 0
      %1959 = vmatprep.mubr.bf16.mxu0 0
      %1960 = vmatmul.mubr.bf16.gmra.mrb[0].mxu0 %v1922
      %v1961 = vpop.f32.mrb[0].mxu0
      %v1962 = vadd.f32 %v675, %v1961
      %v1963 = vpop.f32.mrb[0].mxu0
      %v1964 = vpop.f32.mrb[0].mxu0
      %v1965 = vpop.f32.mrb[0].mxu0
      %1966 = vdwg.mxu0
      %v1967 = vsel %vm1077, %v1605, -inf
      %1968 = vmax.xlane.f32.xlu0 %v1967
      %v1969 = vpop.xlane.xlu0 %1968
      %v1970 = vsel %vm1077, %v1656, -inf
      %1971 = vmax.xlane.f32.xlu0 %v1970
      %v1972 = vpop.xlane.xlu0 %1971
      %v1973 = vsel %vm1077, %v1707, -inf
      %1974 = vmax.xlane.f32.xlu0 %v1973
      %v1975 = vpop.xlane.xlu0 %1974
      %v1976 = vsel %vm1077, %v1758, -inf
      %1977 = vmax.xlane.f32.xlu0 %v1976
      %v1978 = vpop.xlane.xlu0 %1977
      %v1979 = vsel %vm1077, %v1809, -inf
      %1980 = vmax.xlane.f32.xlu0 %v1979
      %v1981 = vpop.xlane.xlu0 %1980
      %v1982 = vsel %vm1077, %v1860, -inf
      %1983 = vmax.xlane.f32.xlu0 %v1982
      %v1984 = vpop.xlane.xlu0 %1983
      %v1985 = vsel %vm1077, %v1911, -inf
      %1986 = vmax.xlane.f32.xlu0 %v1985
      %v1987 = vpop.xlane.xlu0 %1986
      %v1988 = vsel %vm1077, %v1962, -inf
      %1989 = vmax.xlane.f32.xlu0 %v1988
      %v1990 = vpop.xlane.xlu0 %1989
      %v1991 = vsub.f32 %v1605, %v1969
      %v1992 = vsub.f32 %v1656, %v1972
      %v1993 = vsub.f32 %v1707, %v1975
      %v1994 = vsub.f32 %v1758, %v1978
      %v1995 = vsub.f32 %v1809, %v1981
      %v1996 = vsub.f32 %v1860, %v1984
      %v1997 = vsub.f32 %v1911, %v1987
      %v1998 = vsub.f32 %v1962, %v1990
      %v1999 = vmul.f32 %v1991, 1.442695
      %v2000 = vpow.pop %v1999
      %v2001 = vmul.f32 %v1992, 1.442695
      %v2002 = vpow.pop %v2001
      %v2003 = vmul.f32 %v1993, 1.442695
      %v2004 = vpow.pop %v2003
      %v2005 = vmul.f32 %v1994, 1.442695
      %v2006 = vpow.pop %v2005
      %v2007 = vmul.f32 %v1995, 1.442695
      %v2008 = vpow.pop %v2007
      %v2009 = vmul.f32 %v1996, 1.442695
      %v2010 = vpow.pop %v2009
      %v2011 = vmul.f32 %v1997, 1.442695
      %v2012 = vpow.pop %v2011
      %v2013 = vmul.f32 %v1998, 1.442695
      %v2014 = vpow.pop %v2013
      %v2015 = vsel %vm1077, %v2000, 0.0
      %2016 = vadd.xlane.f32.xlu0 %v2015
      %v2017 = vpop.xlane.xlu0 %2016
      %v2018 = vsel %vm1077, %v2002, 0.0
      %2019 = vadd.xlane.f32.xlu0 %v2018
      %v2020 = vpop.xlane.xlu0 %2019
      %v2021 = vsel %vm1077, %v2004, 0.0
      %2022 = vadd.xlane.f32.xlu0 %v2021
      %v2023 = vpop.xlane.xlu0 %2022
      %v2024 = vsel %vm1077, %v2006, 0.0
      %2025 = vadd.xlane.f32.xlu0 %v2024
      %v2026 = vpop.xlane.xlu0 %2025
      %v2027 = vsel %vm1077, %v2008, 0.0
      %2028 = vadd.xlane.f32.xlu0 %v2027
      %v2029 = vpop.xlane.xlu0 %2028
      %v2030 = vsel %vm1077, %v2010, 0.0
      %2031 = vadd.xlane.f32.xlu0 %v2030
      %v2032 = vpop.xlane.xlu0 %2031
      %v2033 = vsel %vm1077, %v2012, 0.0
      %2034 = vadd.xlane.f32.xlu0 %v2033
      %v2035 = vpop.xlane.xlu0 %2034
      %v2036 = vsel %vm1077, %v2014, 0.0
      %2037 = vadd.xlane.f32.xlu0 %v2036
      %v2038 = vpop.xlane.xlu0 %2037
      %v2039 = vrcp.pop %v2017
      %v2040 = vrcp.pop %v2020
      %v2041 = vrcp.pop %v2023
      %v2042 = vrcp.pop %v2026
      %v2043 = vrcp.pop %v2029
      %v2044 = vrcp.pop %v2032
      %v2045 = vrcp.pop %v2035
      %v2046 = vrcp.pop %v2038
      %v2047 = vmul.f32 %v2000, %v2039
      %v2048 = vmul.f32 %v2002, %v2040
      %v2049 = vmul.f32 %v2004, %v2041
      %v2050 = vmul.f32 %v2006, %v2042
      %v2051 = vmul.f32 %v2008, %v2043
      %v2052 = vmul.f32 %v2010, %v2044
      %v2053 = vmul.f32 %v2012, %v2045
      %v2054 = vmul.f32 %v2014, %v2046
      %v2055 = vpack.c.bf16 %v2047, %v2047
      %v2056 = vpack.c.bf16 %v2048, %v2048
      %v2057 = vpack.c.bf16 %v2049, %v2049
      %v2058 = vpack.c.bf16 %v2050, %v2050
      %v2059 = vpack.c.bf16 %v2051, %v2051
      %v2060 = vpack.c.bf16 %v2052, %v2052
      %v2061 = vpack.c.bf16 %v2053, %v2053
      %v2062 = vpack.c.bf16 %v2054, %v2054
      %2063 = vrot.lane.b32.xlu0 %v628, 48
      %v2064 = vpop.permute.xlu0 %2063
      %v2066 = vsel %vm1077, %v2055, 0
      %v2069 = vsel %vm1179, %v2064, 0
      %2071 = vmatprep.subr.bf16.mxu0 0
      %2072 = vmatpush1.bf16.msra.mxu0 %v2069
      %2073 = vmatprep.subr.bf16.mxu0 0
      %2074 = vmatpush1.bf16.msra.mxu0 0
      %2075 = vmatprep.subr.bf16.mxu0 0
      %2076 = vmatpush1.bf16.msra.mxu0 0
      %2077 = vmatprep.subr.bf16.mxu0 0
      %2078 = vmatpush1.bf16.msra.mxu0 0
      %2079 = vmatprep.subr.bf16.mxu0 0
      %2080 = vmatpush1.bf16.msra.mxu0 0
      %2081 = vmatprep.subr.bf16.mxu0 0
      %2082 = vmatpush1.bf16.msra.mxu0 0
      %2083 = vmatprep.subr.bf16.mxu0 0
      %2084 = vmatpush1.bf16.msra.mxu0 0
      %2085 = vmatprep.subr.bf16.mxu0 0
      %2086 = vmatpush1.bf16.msra.mxu0 0
      %2087 = vmatprep.subr.bf16.mxu0 0
      %2088 = vmatpush1.bf16.msra.mxu0 0
      %2089 = vmatprep.subr.bf16.mxu0 0
      %2090 = vmatpush1.bf16.msra.mxu0 0
      %2091 = vmatprep.subr.bf16.mxu0 0
      %2092 = vmatpush1.bf16.msra.mxu0 0
      %2093 = vmatprep.subr.bf16.mxu0 0
      %2094 = vmatpush1.bf16.msra.mxu0 0
      %2095 = vmatprep.subr.bf16.mxu0 0
      %2096 = vmatpush1.bf16.msra.mxu0 0
      %2097 = vmatprep.subr.bf16.mxu0 0
      %2098 = vmatpush1.bf16.msra.mxu0 0
      %2099 = vmatprep.subr.bf16.mxu0 0
      %2100 = vmatpush1.bf16.msra.mxu0 0
      %2101 = vmatprep.subr.bf16.mxu0 0
      %2102 = vmatpush1.bf16.msra.mxu0 0
      %2103 = vmatprep.mubr.bf16.mxu0 0
      %2104 = vmatmul.mubr.bf16.gmra.mrb[0].mxu0 %v2066
      %v2105 = vpop.f32.mrb[0].mxu0
      %v2106 = vadd.f32 0.0, %v2105
      %v2107 = vpop.f32.mrb[0].mxu0
      %v2108 = vpop.f32.mrb[0].mxu0
      %v2109 = vpop.f32.mrb[0].mxu0
      %2110 = vdwg.mxu0
      %2111 = vrot.lane.b32.xlu0 %v629, 48
      %v2112 = vpop.permute.xlu0 %2111
      %v2114 = vsel %vm1077, %v2056, 0
      %v2117 = vsel %vm1179, %v2112, 0
      %2119 = vmatprep.subr.bf16.mxu0 0
      %2120 = vmatpush1.bf16.msra.mxu0 %v2117
      %2121 = vmatprep.subr.bf16.mxu0 0
      %2122 = vmatpush1.bf16.msra.mxu0 0
      %2123 = vmatprep.subr.bf16.mxu0 0
      %2124 = vmatpush1.bf16.msra.mxu0 0
      %2125 = vmatprep.subr.bf16.mxu0 0
      %2126 = vmatpush1.bf16.msra.mxu0 0
      %2127 = vmatprep.subr.bf16.mxu0 0
      %2128 = vmatpush1.bf16.msra.mxu0 0
      %2129 = vmatprep.subr.bf16.mxu0 0
      %2130 = vmatpush1.bf16.msra.mxu0 0
      %2131 = vmatprep.subr.bf16.mxu0 0
      %2132 = vmatpush1.bf16.msra.mxu0 0
      %2133 = vmatprep.subr.bf16.mxu0 0
      %2134 = vmatpush1.bf16.msra.mxu0 0
      %2135 = vmatprep.subr.bf16.mxu0 0
      %2136 = vmatpush1.bf16.msra.mxu0 0
      %2137 = vmatprep.subr.bf16.mxu0 0
      %2138 = vmatpush1.bf16.msra.mxu0 0
      %2139 = vmatprep.subr.bf16.mxu0 0
      %2140 = vmatpush1.bf16.msra.mxu0 0
      %2141 = vmatprep.subr.bf16.mxu0 0
      %2142 = vmatpush1.bf16.msra.mxu0 0
      %2143 = vmatprep.subr.bf16.mxu0 0
      %2144 = vmatpush1.bf16.msra.mxu0 0
      %2145 = vmatprep.subr.bf16.mxu0 0
      %2146 = vmatpush1.bf16.msra.mxu0 0
      %2147 = vmatprep.subr.bf16.mxu0 0
      %2148 = vmatpush1.bf16.msra.mxu0 0
      %2149 = vmatprep.subr.bf16.mxu0 0
      %2150 = vmatpush1.bf16.msra.mxu0 0
      %2151 = vmatprep.mubr.bf16.mxu0 0
      %2152 = vmatmul.mubr.bf16.gmra.mrb[0].mxu0 %v2114
      %v2153 = vpop.f32.mrb[0].mxu0
      %v2154 = vadd.f32 0.0, %v2153
      %v2155 = vpop.f32.mrb[0].mxu0
      %v2156 = vpop.f32.mrb[0].mxu0
      %v2157 = vpop.f32.mrb[0].mxu0
      %2158 = vdwg.mxu0
      %2159 = vrot.lane.b32.xlu0 %v630, 48
      %v2160 = vpop.permute.xlu0 %2159
      %v2162 = vsel %vm1077, %v2057, 0
      %v2165 = vsel %vm1179, %v2160, 0
      %2167 = vmatprep.subr.bf16.mxu0 0
      %2168 = vmatpush1.bf16.msra.mxu0 %v2165
      %2169 = vmatprep.subr.bf16.mxu0 0
      %2170 = vmatpush1.bf16.msra.mxu0 0
      %2171 = vmatprep.subr.bf16.mxu0 0
      %2172 = vmatpush1.bf16.msra.mxu0 0
      %2173 = vmatprep.subr.bf16.mxu0 0
      %2174 = vmatpush1.bf16.msra.mxu0 0
      %2175 = vmatprep.subr.bf16.mxu0 0
      %2176 = vmatpush1.bf16.msra.mxu0 0
      %2177 = vmatprep.subr.bf16.mxu0 0
      %2178 = vmatpush1.bf16.msra.mxu0 0
      %2179 = vmatprep.subr.bf16.mxu0 0
      %2180 = vmatpush1.bf16.msra.mxu0 0
      %2181 = vmatprep.subr.bf16.mxu0 0
      %2182 = vmatpush1.bf16.msra.mxu0 0
      %2183 = vmatprep.subr.bf16.mxu0 0
      %2184 = vmatpush1.bf16.msra.mxu0 0
      %2185 = vmatprep.subr.bf16.mxu0 0
      %2186 = vmatpush1.bf16.msra.mxu0 0
      %2187 = vmatprep.subr.bf16.mxu0 0
      %2188 = vmatpush1.bf16.msra.mxu0 0
      %2189 = vmatprep.subr.bf16.mxu0 0
      %2190 = vmatpush1.bf16.msra.mxu0 0
      %2191 = vmatprep.subr.bf16.mxu0 0
      %2192 = vmatpush1.bf16.msra.mxu0 0
      %2193 = vmatprep.subr.bf16.mxu0 0
      %2194 = vmatpush1.bf16.msra.mxu0 0
      %2195 = vmatprep.subr.bf16.mxu0 0
      %2196 = vmatpush1.bf16.msra.mxu0 0
      %2197 = vmatprep.subr.bf16.mxu0 0
      %2198 = vmatpush1.bf16.msra.mxu0 0
      %2199 = vmatprep.mubr.bf16.mxu0 0
      %2200 = vmatmul.mubr.bf16.gmra.mrb[0].mxu0 %v2162
      %v2201 = vpop.f32.mrb[0].mxu0
      %v2202 = vadd.f32 0.0, %v2201
      %v2203 = vpop.f32.mrb[0].mxu0
      %v2204 = vpop.f32.mrb[0].mxu0
      %v2205 = vpop.f32.mrb[0].mxu0
      %2206 = vdwg.mxu0
      %2207 = vrot.lane.b32.xlu0 %v631, 48
      %v2208 = vpop.permute.xlu0 %2207
      %v2210 = vsel %vm1077, %v2058, 0
      %v2213 = vsel %vm1179, %v2208, 0
      %2215 = vmatprep.subr.bf16.mxu0 0
      %2216 = vmatpush1.bf16.msra.mxu0 %v2213
      %2217 = vmatprep.subr.bf16.mxu0 0
      %2218 = vmatpush1.bf16.msra.mxu0 0
      %2219 = vmatprep.subr.bf16.mxu0 0
      %2220 = vmatpush1.bf16.msra.mxu0 0
      %2221 = vmatprep.subr.bf16.mxu0 0
      %2222 = vmatpush1.bf16.msra.mxu0 0
      %2223 = vmatprep.subr.bf16.mxu0 0
      %2224 = vmatpush1.bf16.msra.mxu0 0
      %2225 = vmatprep.subr.bf16.mxu0 0
      %2226 = vmatpush1.bf16.msra.mxu0 0
      %2227 = vmatprep.subr.bf16.mxu0 0
      %2228 = vmatpush1.bf16.msra.mxu0 0
      %2229 = vmatprep.subr.bf16.mxu0 0
      %2230 = vmatpush1.bf16.msra.mxu0 0
      %2231 = vmatprep.subr.bf16.mxu0 0
      %2232 = vmatpush1.bf16.msra.mxu0 0
      %2233 = vmatprep.subr.bf16.mxu0 0
      %2234 = vmatpush1.bf16.msra.mxu0 0
      %2235 = vmatprep.subr.bf16.mxu0 0
      %2236 = vmatpush1.bf16.msra.mxu0 0
      %2237 = vmatprep.subr.bf16.mxu0 0
      %2238 = vmatpush1.bf16.msra.mxu0 0
      %2239 = vmatprep.subr.bf16.mxu0 0
      %2240 = vmatpush1.bf16.msra.mxu0 0
      %2241 = vmatprep.subr.bf16.mxu0 0
      %2242 = vmatpush1.bf16.msra.mxu0 0
      %2243 = vmatprep.subr.bf16.mxu0 0
      %2244 = vmatpush1.bf16.msra.mxu0 0
      %2245 = vmatprep.subr.bf16.mxu0 0
      %2246 = vmatpush1.bf16.msra.mxu0 0
      %2247 = vmatprep.mubr.bf16.mxu0 0
      %2248 = vmatmul.mubr.bf16.gmra.mrb[0].mxu0 %v2210
      %v2249 = vpop.f32.mrb[0].mxu0
      %v2250 = vadd.f32 0.0, %v2249
      %v2251 = vpop.f32.mrb[0].mxu0
      %v2252 = vpop.f32.mrb[0].mxu0
      %v2253 = vpop.f32.mrb[0].mxu0
      %2254 = vdwg.mxu0
      %2255 = vrot.lane.b32.xlu0 %v632, 48
      %v2256 = vpop.permute.xlu0 %2255
      %v2258 = vsel %vm1077, %v2059, 0
      %v2261 = vsel %vm1179, %v2256, 0
      %2263 = vmatprep.subr.bf16.mxu0 0
      %2264 = vmatpush1.bf16.msra.mxu0 %v2261
      %2265 = vmatprep.subr.bf16.mxu0 0
      %2266 = vmatpush1.bf16.msra.mxu0 0
      %2267 = vmatprep.subr.bf16.mxu0 0
      %2268 = vmatpush1.bf16.msra.mxu0 0
      %2269 = vmatprep.subr.bf16.mxu0 0
      %2270 = vmatpush1.bf16.msra.mxu0 0
      %2271 = vmatprep.subr.bf16.mxu0 0
      %2272 = vmatpush1.bf16.msra.mxu0 0
      %2273 = vmatprep.subr.bf16.mxu0 0
      %2274 = vmatpush1.bf16.msra.mxu0 0
      %2275 = vmatprep.subr.bf16.mxu0 0
      %2276 = vmatpush1.bf16.msra.mxu0 0
      %2277 = vmatprep.subr.bf16.mxu0 0
      %2278 = vmatpush1.bf16.msra.mxu0 0
      %2279 = vmatprep.subr.bf16.mxu0 0
      %2280 = vmatpush1.bf16.msra.mxu0 0
      %2281 = vmatprep.subr.bf16.mxu0 0
      %2282 = vmatpush1.bf16.msra.mxu0 0
      %2283 = vmatprep.subr.bf16.mxu0 0
      %2284 = vmatpush1.bf16.msra.mxu0 0
      %2285 = vmatprep.subr.bf16.mxu0 0
      %2286 = vmatpush1.bf16.msra.mxu0 0
      %2287 = vmatprep.subr.bf16.mxu0 0
      %2288 = vmatpush1.bf16.msra.mxu0 0
      %2289 = vmatprep.subr.bf16.mxu0 0
      %2290 = vmatpush1.bf16.msra.mxu0 0
      %2291 = vmatprep.subr.bf16.mxu0 0
      %2292 = vmatpush1.bf16.msra.mxu0 0
      %2293 = vmatprep.subr.bf16.mxu0 0
      %2294 = vmatpush1.bf16.msra.mxu0 0
      %2295 = vmatprep.mubr.bf16.mxu0 0
      %2296 = vmatmul.mubr.bf16.gmra.mrb[0].mxu0 %v2258
      %v2297 = vpop.f32.mrb[0].mxu0
      %v2298 = vadd.f32 0.0, %v2297
      %v2299 = vpop.f32.mrb[0].mxu0
      %v2300 = vpop.f32.mrb[0].mxu0
      %v2301 = vpop.f32.mrb[0].mxu0
      %2302 = vdwg.mxu0
      %2303 = vrot.lane.b32.xlu0 %v633, 48
      %v2304 = vpop.permute.xlu0 %2303
      %v2306 = vsel %vm1077, %v2060, 0
      %v2309 = vsel %vm1179, %v2304, 0
      %2311 = vmatprep.subr.bf16.mxu0 0
      %2312 = vmatpush1.bf16.msra.mxu0 %v2309
      %2313 = vmatprep.subr.bf16.mxu0 0
      %2314 = vmatpush1.bf16.msra.mxu0 0
      %2315 = vmatprep.subr.bf16.mxu0 0
      %2316 = vmatpush1.bf16.msra.mxu0 0
      %2317 = vmatprep.subr.bf16.mxu0 0
      %2318 = vmatpush1.bf16.msra.mxu0 0
      %2319 = vmatprep.subr.bf16.mxu0 0
      %2320 = vmatpush1.bf16.msra.mxu0 0
      %2321 = vmatprep.subr.bf16.mxu0 0
      %2322 = vmatpush1.bf16.msra.mxu0 0
      %2323 = vmatprep.subr.bf16.mxu0 0
      %2324 = vmatpush1.bf16.msra.mxu0 0
      %2325 = vmatprep.subr.bf16.mxu0 0
      %2326 = vmatpush1.bf16.msra.mxu0 0
      %2327 = vmatprep.subr.bf16.mxu0 0
      %2328 = vmatpush1.bf16.msra.mxu0 0
      %2329 = vmatprep.subr.bf16.mxu0 0
      %2330 = vmatpush1.bf16.msra.mxu0 0
      %2331 = vmatprep.subr.bf16.mxu0 0
      %2332 = vmatpush1.bf16.msra.mxu0 0
      %2333 = vmatprep.subr.bf16.mxu0 0
      %2334 = vmatpush1.bf16.msra.mxu0 0
      %2335 = vmatprep.subr.bf16.mxu0 0
      %2336 = vmatpush1.bf16.msra.mxu0 0
      %2337 = vmatprep.subr.bf16.mxu0 0
      %2338 = vmatpush1.bf16.msra.mxu0 0
      %2339 = vmatprep.subr.bf16.mxu0 0
      %2340 = vmatpush1.bf16.msra.mxu0 0
      %2341 = vmatprep.subr.bf16.mxu0 0
      %2342 = vmatpush1.bf16.msra.mxu0 0
      %2343 = vmatprep.mubr.bf16.mxu0 0
      %2344 = vmatmul.mubr.bf16.gmra.mrb[0].mxu0 %v2306
      %v2345 = vpop.f32.mrb[0].mxu0
      %v2346 = vadd.f32 0.0, %v2345
      %v2347 = vpop.f32.mrb[0].mxu0
      %v2348 = vpop.f32.mrb[0].mxu0
      %v2349 = vpop.f32.mrb[0].mxu0
      %2350 = vdwg.mxu0
      %2351 = vrot.lane.b32.xlu0 %v634, 48
      %v2352 = vpop.permute.xlu0 %2351
      %v2354 = vsel %vm1077, %v2061, 0
      %v2357 = vsel %vm1179, %v2352, 0
      %2359 = vmatprep.subr.bf16.mxu0 0
      %2360 = vmatpush1.bf16.msra.mxu0 %v2357
      %2361 = vmatprep.subr.bf16.mxu0 0
      %2362 = vmatpush1.bf16.msra.mxu0 0
      %2363 = vmatprep.subr.bf16.mxu0 0
      %2364 = vmatpush1.bf16.msra.mxu0 0
      %2365 = vmatprep.subr.bf16.mxu0 0
      %2366 = vmatpush1.bf16.msra.mxu0 0
      %2367 = vmatprep.subr.bf16.mxu0 0
      %2368 = vmatpush1.bf16.msra.mxu0 0
      %2369 = vmatprep.subr.bf16.mxu0 0
      %2370 = vmatpush1.bf16.msra.mxu0 0
      %2371 = vmatprep.subr.bf16.mxu0 0
      %2372 = vmatpush1.bf16.msra.mxu0 0
      %2373 = vmatprep.subr.bf16.mxu0 0
      %2374 = vmatpush1.bf16.msra.mxu0 0
      %2375 = vmatprep.subr.bf16.mxu0 0
      %2376 = vmatpush1.bf16.msra.mxu0 0
      %2377 = vmatprep.subr.bf16.mxu0 0
      %2378 = vmatpush1.bf16.msra.mxu0 0
      %2379 = vmatprep.subr.bf16.mxu0 0
      %2380 = vmatpush1.bf16.msra.mxu0 0
      %2381 = vmatprep.subr.bf16.mxu0 0
      %2382 = vmatpush1.bf16.msra.mxu0 0
      %2383 = vmatprep.subr.bf16.mxu0 0
      %2384 = vmatpush1.bf16.msra.mxu0 0
      %2385 = vmatprep.subr.bf16.mxu0 0
      %2386 = vmatpush1.bf16.msra.mxu0 0
      %2387 = vmatprep.subr.bf16.mxu0 0
      %2388 = vmatpush1.bf16.msra.mxu0 0
      %2389 = vmatprep.subr.bf16.mxu0 0
      %2390 = vmatpush1.bf16.msra.mxu0 0
      %2391 = vmatprep.mubr.bf16.mxu0 0
      %2392 = vmatmul.mubr.bf16.gmra.mrb[0].mxu0 %v2354
      %v2393 = vpop.f32.mrb[0].mxu0
      %v2394 = vadd.f32 0.0, %v2393
      %v2395 = vpop.f32.mrb[0].mxu0
      %v2396 = vpop.f32.mrb[0].mxu0
      %v2397 = vpop.f32.mrb[0].mxu0
      %2398 = vdwg.mxu0
      %2399 = vrot.lane.b32.xlu0 %v635, 48
      %v2400 = vpop.permute.xlu0 %2399
      %v2402 = vsel %vm1077, %v2062, 0
      %v2405 = vsel %vm1179, %v2400, 0
      %2407 = vmatprep.subr.bf16.mxu0 0
      %2408 = vmatpush1.bf16.msra.mxu0 %v2405
      %2409 = vmatprep.subr.bf16.mxu0 0
      %2410 = vmatpush1.bf16.msra.mxu0 0
      %2411 = vmatprep.subr.bf16.mxu0 0
      %2412 = vmatpush1.bf16.msra.mxu0 0
      %2413 = vmatprep.subr.bf16.mxu0 0
      %2414 = vmatpush1.bf16.msra.mxu0 0
      %2415 = vmatprep.subr.bf16.mxu0 0
      %2416 = vmatpush1.bf16.msra.mxu0 0
      %2417 = vmatprep.subr.bf16.mxu0 0
      %2418 = vmatpush1.bf16.msra.mxu0 0
      %2419 = vmatprep.subr.bf16.mxu0 0
      %2420 = vmatpush1.bf16.msra.mxu0 0
      %2421 = vmatprep.subr.bf16.mxu0 0
      %2422 = vmatpush1.bf16.msra.mxu0 0
      %2423 = vmatprep.subr.bf16.mxu0 0
      %2424 = vmatpush1.bf16.msra.mxu0 0
      %2425 = vmatprep.subr.bf16.mxu0 0
      %2426 = vmatpush1.bf16.msra.mxu0 0
      %2427 = vmatprep.subr.bf16.mxu0 0
      %2428 = vmatpush1.bf16.msra.mxu0 0
      %2429 = vmatprep.subr.bf16.mxu0 0
      %2430 = vmatpush1.bf16.msra.mxu0 0
      %2431 = vmatprep.subr.bf16.mxu0 0
      %2432 = vmatpush1.bf16.msra.mxu0 0
      %2433 = vmatprep.subr.bf16.mxu0 0
      %2434 = vmatpush1.bf16.msra.mxu0 0
      %2435 = vmatprep.subr.bf16.mxu0 0
      %2436 = vmatpush1.bf16.msra.mxu0 0
      %2437 = vmatprep.subr.bf16.mxu0 0
      %2438 = vmatpush1.bf16.msra.mxu0 0
      %2439 = vmatprep.mubr.bf16.mxu0 0
      %2440 = vmatmul.mubr.bf16.gmra.mrb[0].mxu0 %v2402
      %v2441 = vpop.f32.mrb[0].mxu0
      %v2442 = vadd.f32 0.0, %v2441
      %v2443 = vpop.f32.mrb[0].mxu0
      %v2444 = vpop.f32.mrb[0].mxu0
      %v2445 = vpop.f32.mrb[0].mxu0
      %2446 = vdwg.mxu0
      %2455 = vrot.lane.b32.xlu0 %v2106, 16
      %v2456 = vpop.permute.xlu0 %2455
      %2457 = vrot.lane.b32.xlu0 %v2154, 16
      %v2458 = vpop.permute.xlu0 %2457
      %2459 = vrot.lane.b32.xlu0 %v2202, 16
      %v2460 = vpop.permute.xlu0 %2459
      %2461 = vrot.lane.b32.xlu0 %v2250, 16
      %v2462 = vpop.permute.xlu0 %2461
      %2463 = vrot.lane.b32.xlu0 %v2298, 16
      %v2464 = vpop.permute.xlu0 %2463
      %2465 = vrot.lane.b32.xlu0 %v2346, 16
      %v2466 = vpop.permute.xlu0 %2465
      %2467 = vrot.lane.b32.xlu0 %v2394, 16
      %v2468 = vpop.permute.xlu0 %2467
      %2469 = vrot.lane.b32.xlu0 %v2442, 16
      %v2470 = vpop.permute.xlu0 %2469
      %v2479 = vsel %vm687, %v1218, %v2456
      %v2480 = vsel %vm687, %v1266, %v2458
      %v2481 = vsel %vm687, %v1314, %v2460
      %v2482 = vsel %vm687, %v1362, %v2462
      %v2483 = vsel %vm687, %v1410, %v2464
      %v2484 = vsel %vm687, %v1458, %v2466
      %v2485 = vsel %vm687, %v1506, %v2468
      %v2486 = vsel %vm687, %v1554, %v2470
      %v2487 = vpack.c.bf16 %v2480, %v2479
      %v2488 = vpack.c.bf16 %v2482, %v2481
      %v2489 = vpack.c.bf16 %v2484, %v2483
      %v2490 = vpack.c.bf16 %v2486, %v2485
      %v2491 = vld [vmem:[%s4] sm:$0xf]
      %v2492 = vld [vmem:[%s4 + $0x4] sm:$0xf]
      %v2493 = vld [vmem:[%s4 + $0x8] sm:$0xf]
      %v2494 = vld [vmem:[%s4 + $0xc] sm:$0xf]
      %v2495 = vld [vmem:[%s5] sm:$0x1]
      %v2497 = vlaneseq
      %v2498 = vshrl.u32 %v2497, 7
      %v2499 = vsub.s32 0, %v2498
      %v2500 = vrot.slane %v2495, %v2499
      %v2506 = vunpack.c.l.b16 %v2491
      %v2507 = vunpack.c.l.b16 %v2492
      %v2508 = vunpack.c.l.b16 %v2493
      %v2509 = vunpack.c.l.b16 %v2494
      %v2510 = vpack.c.b16 %v2507, %v2506
      %v2511 = vpack.c.b16 %v2509, %v2508
      %v2515 = vsel %vm534, %v2487, 0
      %v2518 = vsel %vm534, %v2488, 0
      %v2521 = vsel %vm534, %v2489, 0
      %v2524 = vsel %vm534, %v2490, 0
      %2526 = vmatprep.subr.bf16.mxu0 0
      %2527 = vmatpush1.bf16.msra.mxu0 %v2510
      %2528 = vmatprep.subr.bf16.mxu0 0
      %2529 = vmatpush1.bf16.msra.mxu0 %v2511
      %2530 = vmatprep.subr.bf16.mxu0 0
      %2531 = vmatpush1.bf16.msra.mxu0 0
      %2532 = vmatprep.subr.bf16.mxu0 0
      %2533 = vmatpush1.bf16.msra.mxu0 0
      %2534 = vmatprep.subr.bf16.mxu0 0
      %2535 = vmatpush1.bf16.msra.mxu0 0
      %2536 = vmatprep.subr.bf16.mxu0 0
      %2537 = vmatpush1.bf16.msra.mxu0 0
      %2538 = vmatprep.subr.bf16.mxu0 0
      %2539 = vmatpush1.bf16.msra.mxu0 0
      %2540 = vmatprep.subr.bf16.mxu0 0
      %2541 = vmatpush1.bf16.msra.mxu0 0
      %2542 = vmatprep.subr.bf16.mxu0 0
      %2543 = vmatpush1.bf16.msra.mxu0 0
      %2544 = vmatprep.subr.bf16.mxu0 0
      %2545 = vmatpush1.bf16.msra.mxu0 0
      %2546 = vmatprep.subr.bf16.mxu0 0
      %2547 = vmatpush1.bf16.msra.mxu0 0
      %2548 = vmatprep.subr.bf16.mxu0 0
      %2549 = vmatpush1.bf16.msra.mxu0 0
      %2550 = vmatprep.subr.bf16.mxu0 0
      %2551 = vmatpush1.bf16.msra.mxu0 0
      %2552 = vmatprep.subr.bf16.mxu0 0
      %2553 = vmatpush1.bf16.msra.mxu0 0
      %2554 = vmatprep.subr.bf16.mxu0 0
      %2555 = vmatpush1.bf16.msra.mxu0 0
      %2556 = vmatprep.subr.bf16.mxu0 0
      %2557 = vmatpush1.bf16.msra.mxu0 0
      %2558 = vmatprep.mubr.bf16.mxu0 0
      %2559 = vmatmul.mubr.bf16.gmra.mrb[0].mxu0 %v2515
      %v2560 = vpop.f32.mrb[0].mxu0
      %v2561 = vadd.f32 %v2500, %v2560
      %v2562 = vpop.f32.mrb[0].mxu0
      %v2563 = vpop.f32.mrb[0].mxu0
      %v2564 = vadd.f32 %v2500, %v2563
      %v2565 = vpop.f32.mrb[0].mxu0
      %2566 = vmatprep.mubr.bf16.mxu0 0
      %2567 = vmatmul.mubr.bf16.gmra.mrb[0].mxu0 %v2518
      %v2568 = vpop.f32.mrb[0].mxu0
      %v2569 = vadd.f32 %v2500, %v2568
      %v2570 = vpop.f32.mrb[0].mxu0
      %v2571 = vpop.f32.mrb[0].mxu0
      %v2572 = vadd.f32 %v2500, %v2571
      %v2573 = vpop.f32.mrb[0].mxu0
      %2574 = vmatprep.mubr.bf16.mxu0 0
      %2575 = vmatmul.mubr.bf16.gmra.mrb[0].mxu0 %v2521
      %v2576 = vpop.f32.mrb[0].mxu0
      %v2577 = vadd.f32 %v2500, %v2576
      %v2578 = vpop.f32.mrb[0].mxu0
      %v2579 = vpop.f32.mrb[0].mxu0
      %v2580 = vadd.f32 %v2500, %v2579
      %v2581 = vpop.f32.mrb[0].mxu0
      %2582 = vmatprep.mubr.bf16.mxu0 0
      %2583 = vmatmul.mubr.bf16.gmra.mrb[0].mxu0 %v2524
      %v2584 = vpop.f32.mrb[0].mxu0
      %v2585 = vadd.f32 %v2500, %v2584
      %v2586 = vpop.f32.mrb[0].mxu0
      %v2587 = vpop.f32.mrb[0].mxu0
      %v2588 = vadd.f32 %v2500, %v2587
      %v2589 = vpop.f32.mrb[0].mxu0
      %2590 = vdwg.mxu0
      %v2591 = vadd.f32 %v491, %v2561
      %v2592 = vadd.f32 %v492, %v2564
      %v2593 = vadd.f32 %v493, %v2569
      %v2594 = vadd.f32 %v494, %v2572
      %v2595 = vadd.f32 %v495, %v2577
      %v2596 = vadd.f32 %v496, %v2580
      %v2597 = vadd.f32 %v497, %v2585
      %v2598 = vadd.f32 %v498, %v2588
      %v2599 = vsel %vm534, %v2591, 0.0
      %2600 = vadd.xlane.f32.xlu0 %v2599
      %v2601 = vpop.xlane.xlu0 %2600
      %v2602 = vsel %vm534, %v2592, 0.0
      %2603 = vadd.xlane.f32.xlu0 %v2602
      %v2604 = vpop.xlane.xlu0 %2603
      %v2605 = vsel %vm534, %v2593, 0.0
      %2606 = vadd.xlane.f32.xlu0 %v2605
      %v2607 = vpop.xlane.xlu0 %2606
      %v2608 = vsel %vm534, %v2594, 0.0
      %2609 = vadd.xlane.f32.xlu0 %v2608
      %v2610 = vpop.xlane.xlu0 %2609
      %v2611 = vsel %vm534, %v2595, 0.0
      %2612 = vadd.xlane.f32.xlu0 %v2611
      %v2613 = vpop.xlane.xlu0 %2612
      %v2614 = vsel %vm534, %v2596, 0.0
      %2615 = vadd.xlane.f32.xlu0 %v2614
      %v2616 = vpop.xlane.xlu0 %2615
      %v2617 = vsel %vm534, %v2597, 0.0
      %2618 = vadd.xlane.f32.xlu0 %v2617
      %v2619 = vpop.xlane.xlu0 %2618
      %v2620 = vsel %vm534, %v2598, 0.0
      %2621 = vadd.xlane.f32.xlu0 %v2620
      %v2622 = vpop.xlane.xlu0 %2621
      %v2623 = vrcp.pop 32.0
      %v2624 = vmul.f32 %v2601, %v2623
      %v2625 = vmul.f32 %v2604, %v2623
      %v2626 = vmul.f32 %v2607, %v2623
      %v2627 = vmul.f32 %v2610, %v2623
      %v2628 = vmul.f32 %v2613, %v2623
      %v2629 = vmul.f32 %v2616, %v2623
      %v2630 = vmul.f32 %v2619, %v2623
      %v2631 = vmul.f32 %v2622, %v2623
      %v2632 = vsub.f32 %v2591, %v2624
      %v2633 = vsub.f32 %v2592, %v2625
      %v2634 = vsub.f32 %v2593, %v2626
      %v2635 = vsub.f32 %v2594, %v2627
      %v2636 = vsub.f32 %v2595, %v2628
      %v2637 = vsub.f32 %v2596, %v2629
      %v2638 = vsub.f32 %v2597, %v2630
      %v2639 = vsub.f32 %v2598, %v2631
      %v2640 = vmul.f32 %v2632, %v2632
      %v2641 = vmul.f32 %v2633, %v2633
      %v2642 = vmul.f32 %v2634, %v2634
      %v2643 = vmul.f32 %v2635, %v2635
      %v2644 = vmul.f32 %v2636, %v2636
      %v2645 = vmul.f32 %v2637, %v2637
      %v2646 = vmul.f32 %v2638, %v2638
      %v2647 = vmul.f32 %v2639, %v2639
      %v2648 = vsel %vm534, %v2640, 0.0
      %2649 = vadd.xlane.f32.xlu0 %v2648
      %v2650 = vpop.xlane.xlu0 %2649
      %v2651 = vsel %vm534, %v2641, 0.0
      %2652 = vadd.xlane.f32.xlu0 %v2651
      %v2653 = vpop.xlane.xlu0 %2652
      %v2654 = vsel %vm534, %v2642, 0.0
      %2655 = vadd.xlane.f32.xlu0 %v2654
      %v2656 = vpop.xlane.xlu0 %2655
      %v2657 = vsel %vm534, %v2643, 0.0
      %2658 = vadd.xlane.f32.xlu0 %v2657
      %v2659 = vpop.xlane.xlu0 %2658
      %v2660 = vsel %vm534, %v2644, 0.0
      %2661 = vadd.xlane.f32.xlu0 %v2660
      %v2662 = vpop.xlane.xlu0 %2661
      %v2663 = vsel %vm534, %v2645, 0.0
      %2664 = vadd.xlane.f32.xlu0 %v2663
      %v2665 = vpop.xlane.xlu0 %2664
      %v2666 = vsel %vm534, %v2646, 0.0
      %2667 = vadd.xlane.f32.xlu0 %v2666
      %v2668 = vpop.xlane.xlu0 %2667
      %v2669 = vsel %vm534, %v2647, 0.0
      %2670 = vadd.xlane.f32.xlu0 %v2669
      %v2671 = vpop.xlane.xlu0 %2670
      %v2672 = vmul.f32 %v2650, %v2623
      %v2673 = vmul.f32 %v2653, %v2623
      %v2674 = vmul.f32 %v2656, %v2623
      %v2675 = vmul.f32 %v2659, %v2623
      %v2676 = vmul.f32 %v2662, %v2623
      %v2677 = vmul.f32 %v2665, %v2623
      %v2678 = vmul.f32 %v2668, %v2623
      %v2679 = vmul.f32 %v2671, %v2623
      %v2680 = vadd.f32 %v2672, 1e-05
      %v2681 = vadd.f32 %v2673, 1e-05
      %v2682 = vadd.f32 %v2674, 1e-05
      %v2683 = vadd.f32 %v2675, 1e-05
      %v2684 = vadd.f32 %v2676, 1e-05
      %v2685 = vadd.f32 %v2677, 1e-05
      %v2686 = vadd.f32 %v2678, 1e-05
      %v2687 = vadd.f32 %v2679, 1e-05
      %v2688 = vrsqrt.pop %v2680
      %v2689 = vrsqrt.pop %v2681
      %v2690 = vrsqrt.pop %v2682
      %v2691 = vrsqrt.pop %v2683
      %v2692 = vrsqrt.pop %v2684
      %v2693 = vrsqrt.pop %v2685
      %v2694 = vrsqrt.pop %v2686
      %v2695 = vrsqrt.pop %v2687
      %v2696 = vmul.f32 %v2632, %v2688
      %v2697 = vmul.f32 %v2633, %v2689
      %v2698 = vmul.f32 %v2634, %v2690
      %v2699 = vmul.f32 %v2635, %v2691
      %v2700 = vmul.f32 %v2636, %v2692
      %v2701 = vmul.f32 %v2637, %v2693
      %v2702 = vmul.f32 %v2638, %v2694
      %v2703 = vmul.f32 %v2639, %v2695
      %v2704 = vld [vmem:[%s6] sm:$0x1]
      %v2706 = vlaneseq
      %v2707 = vshrl.u32 %v2706, 7
      %v2708 = vsub.s32 0, %v2707
      %v2709 = vrot.slane %v2704, %v2708
      %v2711 = vmul.f32 %v2696, %v2709
      %v2712 = vmul.f32 %v2697, %v2709
      %v2713 = vmul.f32 %v2698, %v2709
      %v2714 = vmul.f32 %v2699, %v2709
      %v2715 = vmul.f32 %v2700, %v2709
      %v2716 = vmul.f32 %v2701, %v2709
      %v2717 = vmul.f32 %v2702, %v2709
      %v2718 = vmul.f32 %v2703, %v2709
      %v2719 = vld [vmem:[%s7] sm:$0x1]
      %v2721 = vlaneseq
      %v2722 = vshrl.u32 %v2721, 7
      %v2723 = vsub.s32 0, %v2722
      %v2724 = vrot.slane %v2719, %v2723
      %v2726 = vadd.f32 %v2711, %v2724
      %v2727 = vadd.f32 %v2712, %v2724
      %v2728 = vadd.f32 %v2713, %v2724
      %v2729 = vadd.f32 %v2714, %v2724
      %v2730 = vadd.f32 %v2715, %v2724
      %v2731 = vadd.f32 %v2716, %v2724
      %v2732 = vadd.f32 %v2717, %v2724
      %v2733 = vadd.f32 %v2718, %v2724
      %v2734 = vpack.c.bf16 %v2727, %v2726
      %v2735 = vpack.c.bf16 %v2729, %v2728
      %v2736 = vpack.c.bf16 %v2731, %v2730
      %v2737 = vpack.c.bf16 %v2733, %v2732
      %v2738 = vld [vmem:[%s8] sm:$0xf]
      %v2739 = vld [vmem:[%s8 + $0x4] sm:$0xf]
      %v2740 = vld [vmem:[%s8 + $0x8] sm:$0xf]
      %v2741 = vld [vmem:[%s8 + $0xc] sm:$0xf]
      %v2742 = vld [vmem:[%s9] sm:$0x1]
      %v2744 = vlaneseq
      %v2745 = vshrl.u32 %v2744, 7
      %v2746 = vsub.s32 0, %v2745
      %v2747 = vrot.slane %v2742, %v2746
      %v2753 = vunpack.c.l.b16 %v2738
      %v2754 = vunpack.c.l.b16 %v2739
      %v2755 = vunpack.c.l.b16 %v2740
      %v2756 = vunpack.c.l.b16 %v2741
      %v2757 = vpack.c.b16 %v2754, %v2753
      %v2758 = vpack.c.b16 %v2756, %v2755
      %v2762 = vsel %vm534, %v2734, 0
      %v2765 = vsel %vm534, %v2735, 0
      %v2768 = vsel %vm534, %v2736, 0
      %v2771 = vsel %vm534, %v2737, 0
      %2773 = vmatprep.subr.bf16.mxu0 0
      %2774 = vmatpush1.bf16.msra.mxu0 %v2757
      %2775 = vmatprep.subr.bf16.mxu0 0
      %2776 = vmatpush1.bf16.msra.mxu0 %v2758
      %2777 = vmatprep.subr.bf16.mxu0 0
      %2778 = vmatpush1.bf16.msra.mxu0 0
      %2779 = vmatprep.subr.bf16.mxu0 0
      %2780 = vmatpush1.bf16.msra.mxu0 0
      %2781 = vmatprep.subr.bf16.mxu0 0
      %2782 = vmatpush1.bf16.msra.mxu0 0
      %2783 = vmatprep.subr.bf16.mxu0 0
      %2784 = vmatpush1.bf16.msra.mxu0 0
      %2785 = vmatprep.subr.bf16.mxu0 0
      %2786 = vmatpush1.bf16.msra.mxu0 0
      %2787 = vmatprep.subr.bf16.mxu0 0
      %2788 = vmatpush1.bf16.msra.mxu0 0
      %2789 = vmatprep.subr.bf16.mxu0 0
      %2790 = vmatpush1.bf16.msra.mxu0 0
      %2791 = vmatprep.subr.bf16.mxu0 0
      %2792 = vmatpush1.bf16.msra.mxu0 0
      %2793 = vmatprep.subr.bf16.mxu0 0
      %2794 = vmatpush1.bf16.msra.mxu0 0
      %2795 = vmatprep.subr.bf16.mxu0 0
      %2796 = vmatpush1.bf16.msra.mxu0 0
      %2797 = vmatprep.subr.bf16.mxu0 0
      %2798 = vmatpush1.bf16.msra.mxu0 0
      %2799 = vmatprep.subr.bf16.mxu0 0
      %2800 = vmatpush1.bf16.msra.mxu0 0
      %2801 = vmatprep.subr.bf16.mxu0 0
      %2802 = vmatpush1.bf16.msra.mxu0 0
      %2803 = vmatprep.subr.bf16.mxu0 0
      %2804 = vmatpush1.bf16.msra.mxu0 0
      %2805 = vmatprep.mubr.bf16.mxu0 0
      %2806 = vmatmul.mubr.bf16.gmra.mrb[0].mxu0 %v2762
      %v2807 = vpop.f32.mrb[0].mxu0
      %v2808 = vadd.f32 %v2747, %v2807
      %v2809 = vpop.f32.mrb[0].mxu0
      %v2810 = vpop.f32.mrb[0].mxu0
      %v2811 = vadd.f32 %v2747, %v2810
      %v2812 = vpop.f32.mrb[0].mxu0
      %2813 = vmatprep.mubr.bf16.mxu0 0
      %2814 = vmatmul.mubr.bf16.gmra.mrb[0].mxu0 %v2765
      %v2815 = vpop.f32.mrb[0].mxu0
      %v2816 = vadd.f32 %v2747, %v2815
      %v2817 = vpop.f32.mrb[0].mxu0
      %v2818 = vpop.f32.mrb[0].mxu0
      %v2819 = vadd.f32 %v2747, %v2818
      %v2820 = vpop.f32.mrb[0].mxu0
      %2821 = vmatprep.mubr.bf16.mxu0 0
      %2822 = vmatmul.mubr.bf16.gmra.mrb[0].mxu0 %v2768
      %v2823 = vpop.f32.mrb[0].mxu0
      %v2824 = vadd.f32 %v2747, %v2823
      %v2825 = vpop.f32.mrb[0].mxu0
      %v2826 = vpop.f32.mrb[0].mxu0
      %v2827 = vadd.f32 %v2747, %v2826
      %v2828 = vpop.f32.mrb[0].mxu0
      %2829 = vmatprep.mubr.bf16.mxu0 0
      %2830 = vmatmul.mubr.bf16.gmra.mrb[0].mxu0 %v2771
      %v2831 = vpop.f32.mrb[0].mxu0
      %v2832 = vadd.f32 %v2747, %v2831
      %v2833 = vpop.f32.mrb[0].mxu0
      %v2834 = vpop.f32.mrb[0].mxu0
      %v2835 = vadd.f32 %v2747, %v2834
      %v2836 = vpop.f32.mrb[0].mxu0
      %2837 = vdwg.mxu0
      %v2838 = vmul.f32 %v2808, %v2808
      %v2839 = vmul.f32 %v2811, %v2811
      %v2840 = vmul.f32 %v2816, %v2816
      %v2841 = vmul.f32 %v2819, %v2819
      %v2842 = vmul.f32 %v2824, %v2824
      %v2843 = vmul.f32 %v2827, %v2827
      %v2844 = vmul.f32 %v2832, %v2832
      %v2845 = vmul.f32 %v2835, %v2835
      %v2846 = vmul.f32 %v2808, %v2838
      %v2847 = vmul.f32 %v2811, %v2839
      %v2848 = vmul.f32 %v2816, %v2840
      %v2849 = vmul.f32 %v2819, %v2841
      %v2850 = vmul.f32 %v2824, %v2842
      %v2851 = vmul.f32 %v2827, %v2843
      %v2852 = vmul.f32 %v2832, %v2844
      %v2853 = vmul.f32 %v2835, %v2845
      %v2854 = vmul.f32 %v2846, 0.044715
      %v2855 = vmul.f32 %v2847, 0.044715
      %v2856 = vmul.f32 %v2848, 0.044715
      %v2857 = vmul.f32 %v2849, 0.044715
      %v2858 = vmul.f32 %v2850, 0.044715
      %v2859 = vmul.f32 %v2851, 0.044715
      %v2860 = vmul.f32 %v2852, 0.044715
      %v2861 = vmul.f32 %v2853, 0.044715
      %v2862 = vadd.f32 %v2808, %v2854
      %v2863 = vadd.f32 %v2811, %v2855
      %v2864 = vadd.f32 %v2816, %v2856
      %v2865 = vadd.f32 %v2819, %v2857
      %v2866 = vadd.f32 %v2824, %v2858
      %v2867 = vadd.f32 %v2827, %v2859
      %v2868 = vadd.f32 %v2832, %v2860
      %v2869 = vadd.f32 %v2835, %v2861
      %v2870 = vmul.f32 %v2862, 0.7978846
      %v2871 = vmul.f32 %v2863, 0.7978846
      %v2872 = vmul.f32 %v2864, 0.7978846
      %v2873 = vmul.f32 %v2865, 0.7978846
      %v2874 = vmul.f32 %v2866, 0.7978846
      %v2875 = vmul.f32 %v2867, 0.7978846
      %v2876 = vmul.f32 %v2868, 0.7978846
      %v2877 = vmul.f32 %v2869, 0.7978846
      %v2878 = vtanh.pop %v2870
      %v2879 = vtanh.pop %v2871
      %v2880 = vtanh.pop %v2872
      %v2881 = vtanh.pop %v2873
      %v2882 = vtanh.pop %v2874
      %v2883 = vtanh.pop %v2875
      %v2884 = vtanh.pop %v2876
      %v2885 = vtanh.pop %v2877
      %v2886 = vadd.f32 %v2878, 1.0
      %v2887 = vadd.f32 %v2879, 1.0
      %v2888 = vadd.f32 %v2880, 1.0
      %v2889 = vadd.f32 %v2881, 1.0
      %v2890 = vadd.f32 %v2882, 1.0
      %v2891 = vadd.f32 %v2883, 1.0
      %v2892 = vadd.f32 %v2884, 1.0
      %v2893 = vadd.f32 %v2885, 1.0
      %v2894 = vmul.f32 %v2886, 0.5
      %v2895 = vmul.f32 %v2887, 0.5
      %v2896 = vmul.f32 %v2888, 0.5
      %v2897 = vmul.f32 %v2889, 0.5
      %v2898 = vmul.f32 %v2890, 0.5
      %v2899 = vmul.f32 %v2891, 0.5
      %v2900 = vmul.f32 %v2892, 0.5
      %v2901 = vmul.f32 %v2893, 0.5
      %v2902 = vmul.f32 %v2808, %v2894
      %v2903 = vmul.f32 %v2811, %v2895
      %v2904 = vmul.f32 %v2816, %v2896
      %v2905 = vmul.f32 %v2819, %v2897
      %v2906 = vmul.f32 %v2824, %v2898
      %v2907 = vmul.f32 %v2827, %v2899
      %v2908 = vmul.f32 %v2832, %v2900
      %v2909 = vmul.f32 %v2835, %v2901
      %v2910 = vpack.c.bf16 %v2903, %v2902
      %v2911 = vpack.c.bf16 %v2905, %v2904
      %v2912 = vpack.c.bf16 %v2907, %v2906
      %v2913 = vpack.c.bf16 %v2909, %v2908
      %v2914 = vld [vmem:[%s10] sm:$0xf]
      %v2915 = vld [vmem:[%s10 + $0x4] sm:$0xf]
      %v2916 = vld [vmem:[%s10 + $0x8] sm:$0xf]
      %v2917 = vld [vmem:[%s10 + $0xc] sm:$0xf]
      %v2918 = vld [vmem:[%s10 + $0x10] sm:$0xf]
      %v2919 = vld [vmem:[%s10 + $0x14] sm:$0xf]
      %v2920 = vld [vmem:[%s10 + $0x18] sm:$0xf]
      %v2921 = vld [vmem:[%s10 + $0x1c] sm:$0xf]
      %v2922 = vld [vmem:[%s10 + $0x20] sm:$0xf]
      %v2923 = vld [vmem:[%s10 + $0x24] sm:$0xf]
      %v2924 = vld [vmem:[%s10 + $0x28] sm:$0xf]
      %v2925 = vld [vmem:[%s10 + $0x2c] sm:$0xf]
      %v2926 = vld [vmem:[%s10 + $0x30] sm:$0xf]
      %v2927 = vld [vmem:[%s10 + $0x34] sm:$0xf]
      %v2928 = vld [vmem:[%s10 + $0x38] sm:$0xf]
      %v2929 = vld [vmem:[%s10 + $0x3c] sm:$0xf]
      %v2930 = vld [vmem:[%s11] sm:$0x1]
      %v2932 = vlaneseq
      %v2933 = vshrl.u32 %v2932, 7
      %v2934 = vsub.s32 0, %v2933
      %v2935 = vrot.slane %v2930, %v2934
      %v2953 = vunpack.c.l.b16 %v2914
      %v2954 = vunpack.c.l.b16 %v2915
      %v2955 = vunpack.c.l.b16 %v2916
      %v2956 = vunpack.c.l.b16 %v2917
      %v2957 = vunpack.c.l.b16 %v2918
      %v2958 = vunpack.c.l.b16 %v2919
      %v2959 = vunpack.c.l.b16 %v2920
      %v2960 = vunpack.c.l.b16 %v2921
      %v2961 = vunpack.c.l.b16 %v2922
      %v2962 = vunpack.c.l.b16 %v2923
      %v2963 = vunpack.c.l.b16 %v2924
      %v2964 = vunpack.c.l.b16 %v2925
      %v2965 = vunpack.c.l.b16 %v2926
      %v2966 = vunpack.c.l.b16 %v2927
      %v2967 = vunpack.c.l.b16 %v2928
      %v2968 = vunpack.c.l.b16 %v2929
      %v2969 = vpack.c.b16 %v2954, %v2953
      %v2970 = vpack.c.b16 %v2956, %v2955
      %v2971 = vpack.c.b16 %v2958, %v2957
      %v2972 = vpack.c.b16 %v2960, %v2959
      %v2973 = vpack.c.b16 %v2962, %v2961
      %v2974 = vpack.c.b16 %v2964, %v2963
      %v2975 = vpack.c.b16 %v2966, %v2965
      %v2976 = vpack.c.b16 %v2968, %v2967
      %2985 = vmatprep.subr.bf16.mxu0 0
      %2986 = vmatpush1.bf16.msra.mxu0 %v2969
      %2987 = vmatprep.subr.bf16.mxu0 0
      %2988 = vmatpush1.bf16.msra.mxu0 %v2970
      %2989 = vmatprep.subr.bf16.mxu0 0
      %2990 = vmatpush1.bf16.msra.mxu0 %v2971
      %2991 = vmatprep.subr.bf16.mxu0 0
      %2992 = vmatpush1.bf16.msra.mxu0 %v2972
      %2993 = vmatprep.subr.bf16.mxu0 0
      %2994 = vmatpush1.bf16.msra.mxu0 %v2973
      %2995 = vmatprep.subr.bf16.mxu0 0
      %2996 = vmatpush1.bf16.msra.mxu0 %v2974
      %2997 = vmatprep.subr.bf16.mxu0 0
      %2998 = vmatpush1.bf16.msra.mxu0 %v2975
      %2999 = vmatprep.subr.bf16.mxu0 0
      %3000 = vmatpush1.bf16.msra.mxu0 %v2976
      %3001 = vmatprep.subr.bf16.mxu0 0
      %3002 = vmatpush1.bf16.msra.mxu0 0
      %3003 = vmatprep.subr.bf16.mxu0 0
      %3004 = vmatpush1.bf16.msra.mxu0 0
      %3005 = vmatprep.subr.bf16.mxu0 0
      %3006 = vmatpush1.bf16.msra.mxu0 0
      %3007 = vmatprep.subr.bf16.mxu0 0
      %3008 = vmatpush1.bf16.msra.mxu0 0
      %3009 = vmatprep.subr.bf16.mxu0 0
      %3010 = vmatpush1.bf16.msra.mxu0 0
      %3011 = vmatprep.subr.bf16.mxu0 0
      %3012 = vmatpush1.bf16.msra.mxu0 0
      %3013 = vmatprep.subr.bf16.mxu0 0
      %3014 = vmatpush1.bf16.msra.mxu0 0
      %3015 = vmatprep.subr.bf16.mxu0 0
      %3016 = vmatpush1.bf16.msra.mxu0 0
      %3017 = vmatprep.mubr.bf16.mxu0 0
      %3018 = vmatmul.mubr.bf16.gmra.mrb[0].mxu0 %v2910
      %v3019 = vpop.f32.mrb[0].mxu0
      %v3020 = vadd.f32 %v2935, %v3019
      %v3021 = vpop.f32.mrb[0].mxu0
      %v3022 = vpop.f32.mrb[0].mxu0
      %v3023 = vadd.f32 %v2935, %v3022
      %v3024 = vpop.f32.mrb[0].mxu0
      %3025 = vmatprep.mubr.bf16.mxu0 0
      %3026 = vmatmul.mubr.bf16.gmra.mrb[0].mxu0 %v2911
      %v3027 = vpop.f32.mrb[0].mxu0
      %v3028 = vadd.f32 %v2935, %v3027
      %v3029 = vpop.f32.mrb[0].mxu0
      %v3030 = vpop.f32.mrb[0].mxu0
      %v3031 = vadd.f32 %v2935, %v3030
      %v3032 = vpop.f32.mrb[0].mxu0
      %3033 = vmatprep.mubr.bf16.mxu0 0
      %3034 = vmatmul.mubr.bf16.gmra.mrb[0].mxu0 %v2912
      %v3035 = vpop.f32.mrb[0].mxu0
      %v3036 = vadd.f32 %v2935, %v3035
      %v3037 = vpop.f32.mrb[0].mxu0
      %v3038 = vpop.f32.mrb[0].mxu0
      %v3039 = vadd.f32 %v2935, %v3038
      %v3040 = vpop.f32.mrb[0].mxu0
      %3041 = vmatprep.mubr.bf16.mxu0 0
      %3042 = vmatmul.mubr.bf16.gmra.mrb[0].mxu0 %v2913
      %v3043 = vpop.f32.mrb[0].mxu0
      %v3044 = vadd.f32 %v2935, %v3043
      %v3045 = vpop.f32.mrb[0].mxu0
      %v3046 = vpop.f32.mrb[0].mxu0
      %v3047 = vadd.f32 %v2935, %v3046
      %v3048 = vpop.f32.mrb[0].mxu0
      %3049 = vdwg.mxu0
      %v3050 = vadd.f32 %v2726, %v3020
      %v3051 = vadd.f32 %v2727, %v3023
      %v3052 = vadd.f32 %v2728, %v3028
      %v3053 = vadd.f32 %v2729, %v3031
      %v3054 = vadd.f32 %v2730, %v3036
      %v3055 = vadd.f32 %v2731, %v3039
      %v3056 = vadd.f32 %v2732, %v3044
      %v3057 = vadd.f32 %v2733, %v3047
      %v3058 = vsel %vm534, %v3050, 0.0
      %3059 = vadd.xlane.f32.xlu0 %v3058
      %v3060 = vpop.xlane.xlu0 %3059
      %v3061 = vsel %vm534, %v3051, 0.0
      %3062 = vadd.xlane.f32.xlu0 %v3061
      %v3063 = vpop.xlane.xlu0 %3062
      %v3064 = vsel %vm534, %v3052, 0.0
      %3065 = vadd.xlane.f32.xlu0 %v3064
      %v3066 = vpop.xlane.xlu0 %3065
      %v3067 = vsel %vm534, %v3053, 0.0
      %3068 = vadd.xlane.f32.xlu0 %v3067
      %v3069 = vpop.xlane.xlu0 %3068
      %v3070 = vsel %vm534, %v3054, 0.0
      %3071 = vadd.xlane.f32.xlu0 %v3070
      %v3072 = vpop.xlane.xlu0 %3071
      %v3073 = vsel %vm534, %v3055, 0.0
      %3074 = vadd.xlane.f32.xlu0 %v3073
      %v3075 = vpop.xlane.xlu0 %3074
      %v3076 = vsel %vm534, %v3056, 0.0
      %3077 = vadd.xlane.f32.xlu0 %v3076
      %v3078 = vpop.xlane.xlu0 %3077
      %v3079 = vsel %vm534, %v3057, 0.0
      %3080 = vadd.xlane.f32.xlu0 %v3079
      %v3081 = vpop.xlane.xlu0 %3080
      %v3082 = vmul.f32 %v3060, %v2623
      %v3083 = vmul.f32 %v3063, %v2623
      %v3084 = vmul.f32 %v3066, %v2623
      %v3085 = vmul.f32 %v3069, %v2623
      %v3086 = vmul.f32 %v3072, %v2623
      %v3087 = vmul.f32 %v3075, %v2623
      %v3088 = vmul.f32 %v3078, %v2623
      %v3089 = vmul.f32 %v3081, %v2623
      %v3090 = vsub.f32 %v3050, %v3082
      %v3091 = vsub.f32 %v3051, %v3083
      %v3092 = vsub.f32 %v3052, %v3084
      %v3093 = vsub.f32 %v3053, %v3085
      %v3094 = vsub.f32 %v3054, %v3086
      %v3095 = vsub.f32 %v3055, %v3087
      %v3096 = vsub.f32 %v3056, %v3088
      %v3097 = vsub.f32 %v3057, %v3089
      %v3098 = vmul.f32 %v3090, %v3090
      %v3099 = vmul.f32 %v3091, %v3091
      %v3100 = vmul.f32 %v3092, %v3092
      %v3101 = vmul.f32 %v3093, %v3093
      %v3102 = vmul.f32 %v3094, %v3094
      %v3103 = vmul.f32 %v3095, %v3095
      %v3104 = vmul.f32 %v3096, %v3096
      %v3105 = vmul.f32 %v3097, %v3097
      %v3106 = vsel %vm534, %v3098, 0.0
      %3107 = vadd.xlane.f32.xlu0 %v3106
      %v3108 = vpop.xlane.xlu0 %3107
      %v3109 = vsel %vm534, %v3099, 0.0
      %3110 = vadd.xlane.f32.xlu0 %v3109
      %v3111 = vpop.xlane.xlu0 %3110
      %v3112 = vsel %vm534, %v3100, 0.0
      %3113 = vadd.xlane.f32.xlu0 %v3112
      %v3114 = vpop.xlane.xlu0 %3113
      %v3115 = vsel %vm534, %v3101, 0.0
      %3116 = vadd.xlane.f32.xlu0 %v3115
      %v3117 = vpop.xlane.xlu0 %3116
      %v3118 = vsel %vm534, %v3102, 0.0
      %3119 = vadd.xlane.f32.xlu0 %v3118
      %v3120 = vpop.xlane.xlu0 %3119
      %v3121 = vsel %vm534, %v3103, 0.0
      %3122 = vadd.xlane.f32.xlu0 %v3121
      %v3123 = vpop.xlane.xlu0 %3122
      %v3124 = vsel %vm534, %v3104, 0.0
      %3125 = vadd.xlane.f32.xlu0 %v3124
      %v3126 = vpop.xlane.xlu0 %3125
      %v3127 = vsel %vm534, %v3105, 0.0
      %3128 = vadd.xlane.f32.xlu0 %v3127
      %v3129 = vpop.xlane.xlu0 %3128
      %v3130 = vmul.f32 %v3108, %v2623
      %v3131 = vmul.f32 %v3111, %v2623
      %v3132 = vmul.f32 %v3114, %v2623
      %v3133 = vmul.f32 %v3117, %v2623
      %v3134 = vmul.f32 %v3120, %v2623
      %v3135 = vmul.f32 %v3123, %v2623
      %v3136 = vmul.f32 %v3126, %v2623
      %v3137 = vmul.f32 %v3129, %v2623
      %v3138 = vadd.f32 %v3130, 1e-05
      %v3139 = vadd.f32 %v3131, 1e-05
      %v3140 = vadd.f32 %v3132, 1e-05
      %v3141 = vadd.f32 %v3133, 1e-05
      %v3142 = vadd.f32 %v3134, 1e-05
      %v3143 = vadd.f32 %v3135, 1e-05
      %v3144 = vadd.f32 %v3136, 1e-05
      %v3145 = vadd.f32 %v3137, 1e-05
      %v3146 = vrsqrt.pop %v3138
      %v3147 = vrsqrt.pop %v3139
      %v3148 = vrsqrt.pop %v3140
      %v3149 = vrsqrt.pop %v3141
      %v3150 = vrsqrt.pop %v3142
      %v3151 = vrsqrt.pop %v3143
      %v3152 = vrsqrt.pop %v3144
      %v3153 = vrsqrt.pop %v3145
      %v3154 = vmul.f32 %v3090, %v3146
      %v3155 = vmul.f32 %v3091, %v3147
      %v3156 = vmul.f32 %v3092, %v3148
      %v3157 = vmul.f32 %v3093, %v3149
      %v3158 = vmul.f32 %v3094, %v3150
      %v3159 = vmul.f32 %v3095, %v3151
      %v3160 = vmul.f32 %v3096, %v3152
      %v3161 = vmul.f32 %v3097, %v3153
      %v3162 = vld [vmem:[%s12] sm:$0x1]
      %v3164 = vlaneseq
      %v3165 = vshrl.u32 %v3164, 7
      %v3166 = vsub.s32 0, %v3165
      %v3167 = vrot.slane %v3162, %v3166
      %v3169 = vmul.f32 %v3154, %v3167
      %v3170 = vmul.f32 %v3155, %v3167
      %v3171 = vmul.f32 %v3156, %v3167
      %v3172 = vmul.f32 %v3157, %v3167
      %v3173 = vmul.f32 %v3158, %v3167
      %v3174 = vmul.f32 %v3159, %v3167
      %v3175 = vmul.f32 %v3160, %v3167
      %v3176 = vmul.f32 %v3161, %v3167
      %v3177 = vld [vmem:[%s13] sm:$0x1]
      %v3179 = vlaneseq
      %v3180 = vshrl.u32 %v3179, 7
      %v3181 = vsub.s32 0, %v3180
      %v3182 = vrot.slane %v3177, %v3181
      %v3184 = vadd.f32 %v3169, %v3182
      %v3185 = vadd.f32 %v3170, %v3182
      %v3186 = vadd.f32 %v3171, %v3182
      %v3187 = vadd.f32 %v3172, %v3182
      %v3188 = vadd.f32 %v3173, %v3182
      %v3189 = vadd.f32 %v3174, %v3182
      %v3190 = vadd.f32 %v3175, %v3182
      %v3191 = vadd.f32 %v3176, %v3182
      %3192 = vst.msk [vmem:[%s488] sm:$0xff] %vm534, %v3184
      %3193 = vst.msk [vmem:[%s488 + $0x8] sm:$0xff] %vm534, %v3185
      %3194 = vst.msk [vmem:[%s488 + $0x10] sm:$0xff] %vm534, %v3186
      %3195 = vst.msk [vmem:[%s488 + $0x18] sm:$0xff] %vm534, %v3187
      %3196 = vst.msk [vmem:[%s488 + $0x20] sm:$0xff] %vm534, %v3188
      %3197 = vst.msk [vmem:[%s488 + $0x28] sm:$0xff] %vm534, %v3189
      %3198 = vst.msk [vmem:[%s488 + $0x30] sm:$0xff] %vm534, %v3190
      %3199 = vst.msk [vmem:[%s488 + $0x38] sm:$0xff] %vm534, %v3191
      %s3200 = smul.u32 8, %s25
      %p3201 = scmp.lt.s32.totalorder %s3200, 15
      %s3202 = scalar_select %p3201, %s3200, 15
      %s3203 = smul.addr %s3202, 8
      %s3204 = scalar_lea.vmem %s14, %s3203
      // Predicated region
      $region77: #{sasrec_forward.3} parent=75 // pred_check
        %p3205 = pneg %p347
      $region78: #{sasrec_forward.3} parent=75 // pred_check_branch
        %3207 = sbr.rel (%p3205) target = $region80
      $region79: #{sasrec_forward.3} parent=75 // pred_region
        %s3208 = smul.u32 8, %s25
      $region80: #{sasrec_forward.3} parent=75 // pred_fallthru
        _
    $region76: #{sasrec_forward.3} parent=5 // pred_fallthru
      _
    %p3209 = scmp.le.s32.totalorder 2, %s20
    // Predicated region
    $region81: #{sasrec_forward.3} parent=5 // pred_check
      %p3210 = pneg %p3209
    $region82: #{sasrec_forward.3} parent=5 // pred_check_branch
      %3212 = sbr.rel (%p3210) target = $region84
    $region83: #{sasrec_forward.3} parent=5 // pred_region
      %s3213 = ssub.s32 %s20, 2
      // Predicated region
      $region85: #{sasrec_forward.3} parent=83 // pred_check
        %p3214 = pneg %p353
      $region86: #{sasrec_forward.3} parent=83 // pred_check_branch
        %3216 = sbr.rel (%p3214) target = $region88
      $region87: #{sasrec_forward.3} parent=83 // pred_region
        %s3217 = smul.u32 8, %s26
        %p3218 = scmp.lt.s32.totalorder %s3217, 15
        %s3219 = scalar_select %p3218, %s3217, 15
        %s3220 = smul.addr %s3219, 8
        %s3221 = scalar_lea.vmem %s14, %s3220
      $region88: #{sasrec_forward.3} parent=83 // pred_fallthru
        _
    $region84: #{sasrec_forward.3} parent=5 // pred_fallthru
      _
  $region6: #{sasrec_forward.3} parent=0 // loop_footer
    %s24 = sadd.s32 1, %s20
  $region7: #{sasrec_forward.3} parent=0 // loop_footer_branch
    %19 = sbr.rel target = $region3
  $region8: #{sasrec_forward.3} parent=0 // loop_exit
    _

</llo_original>
